<compile_context>
chip_gen: v6e
topology: v6e:2x2x1
jax: 0.10.0
libtpu: 0.0.40
codegen_flags: <defaults>
</compile_context>

<pallas_src>
import math
import functools

import jax
import jax.numpy as jnp
from jax.experimental import pallas as pl
from jax.experimental.pallas import tpu as pltpu

SMALL_D = 64
DEC_H = 128          # decision hidden, zero-padded from 64 to a full lane width
LN_EPS = 1e-5
TM_MAX = 256         # row-tile size (128-256 sweet spot on v5e/v6e/v7x)


def _gelu(x):
    # TODO(synk): torch nn.GELU/F.gelu default is the exact erf GELU; the tanh
    # approximation is used here for robust Mosaic lowering (max dev ~1e-3).
    return jax.nn.gelu(x)  # approximate=True (tanh)


# ----------------------------------------------------------------------------
# Pallas kernels (bf16 MXU operands, f32 accumulation / statistics)
# ----------------------------------------------------------------------------
def _linear_ln_kernel(x_ref, w_ref, b_ref, g_ref, beta_ref, o_ref):
    # y = x @ W + b ; LayerNorm(y) * gamma + beta
    x = x_ref[...].astype(jnp.bfloat16)
    y = jnp.dot(x, w_ref[...], preferred_element_type=jnp.float32) + b_ref[...]
    mu = jnp.mean(y, axis=-1, keepdims=True)
    var = jnp.mean(jnp.square(y - mu), axis=-1, keepdims=True)
    o_ref[...] = (y - mu) * jax.lax.rsqrt(var + LN_EPS) * g_ref[...] + beta_ref[...]


def _decision_kernel(l_ref, r_ref, w1l_ref, w1r_ref, b1_ref, w2_ref, b2_ref, o_ref):
    # decision_module: Linear(2*64 -> 64), GELU, Linear(64 -> 1)
    # Weights are zero-padded to (D, 128) so the kernel works on full-lane vregs and
    # the wrapper never lane-slices [:, :64]; padded lanes contribute exactly 0.
    l = l_ref[...].astype(jnp.bfloat16)
    r = r_ref[...].astype(jnp.bfloat16)
    h = (jnp.dot(l, w1l_ref[...], preferred_element_type=jnp.float32)
         + jnp.dot(r, w1r_ref[...], preferred_element_type=jnp.float32)
         + b1_ref[...])
    h = _gelu(h)
    # second linear has out_features=1: lane reduction against the padded w2 row.
    o_ref[...] = jnp.sum(h * w2_ref[...], axis=-1, keepdims=True) + b2_ref[...]


def _grc_kernel(l_ref, r_ref, w1l_ref, w1r_ref, b1_ref, w2_ref, b2_ref,
                g_ref, beta_ref, o_ref):
    # GRC cell: intermediate = GELU([l; r] @ Wc1 + bc1)
    #           contents     = intermediate @ Wc2 + bc2        (shape (M, 4D))
    #           gates        = softmax over the 3 gate chunks (per-channel)
    #           parent       = g0 * LN(content) + g1 * left + g2 * right
    # TODO(synk): for D >= 512 the (4D,4D) weight should be K-tiled (extra
    # "arbitrary" grid axis + f32 VMEM accumulator) to fit v7x's 64 MiB VMEM.
    left = l_ref[...]
    right = r_ref[...]
    inter = (jnp.dot(left.astype(jnp.bfloat16), w1l_ref[...],
                     preferred_element_type=jnp.float32)
             + jnp.dot(right.astype(jnp.bfloat16), w1r_ref[...],
                       preferred_element_type=jnp.float32)
             + b1_ref[...])
    inter = _gelu(inter)
    cont = (jnp.dot(inter.astype(jnp.bfloat16), w2_ref[...],
                    preferred_element_type=jnp.float32)
            + b2_ref[...])
    D = left.shape[-1]
    g0 = cont[:, 0 * D:1 * D]
    g1 = cont[:, 1 * D:2 * D]
    g2 = cont[:, 2 * D:3 * D]
    c = cont[:, 3 * D:4 * D]
    m = jnp.maximum(jnp.maximum(g0, g1), g2)
    e0 = jnp.exp(g0 - m)
    e1 = jnp.exp(g1 - m)
    e2 = jnp.exp(g2 - m)
    inv_denom = pl.reciprocal(e0 + e1 + e2, approx=True)
    mu = jnp.mean(c, axis=-1, keepdims=True)
    var = jnp.mean(jnp.square(c - mu), axis=-1, keepdims=True)
    cn = (c - mu) * jax.lax.rsqrt(var + LN_EPS) * g_ref[...] + beta_ref[...]
    o_ref[...] = (e0 * cn + e1 * left + e2 * right) * inv_denom


# ----------------------------------------------------------------------------
# pallas_call wrappers: row-tiled ("parallel") grid, rows padded to sublanes
# ----------------------------------------------------------------------------
def _round_up(x, m):
    return ((x + m - 1) // m) * m


def _tiles(M):
    """Return (M_padded, tile_M): pad rows to a sublane multiple; tile at <=TM_MAX."""
    m8 = _round_up(max(M, 8), 8)
    if m8 <= TM_MAX:
        return m8, m8
    return _round_up(M, TM_MAX), TM_MAX


def _pad_rows(x, m_pad):
    M = x.shape[0]
    if m_pad == M:
        return x
    return jnp.concatenate([x, jnp.zeros((m_pad - M,) + x.shape[1:], x.dtype)], axis=0)


def _bcast_spec(shape):
    # full-array block, same for every grid point (weights / biases)
    return pl.BlockSpec(shape, lambda i: (0,) * len(shape))


_PARALLEL = pltpu.CompilerParams(dimension_semantics=("parallel",))


def initial_transform_layernorm(params, x2d):
    M, D = x2d.shape
    Mp, TM = _tiles(M)
    xp = _pad_rows(x2d, Mp)
    cost = pl.CostEstimate(flops=2 * Mp * D * D + 10 * Mp * D,
                           transcendentals=Mp,
                           bytes_accessed=4 * Mp * D * 2 + 2 * D * D + 12 * D)
    out = pl.pallas_call(
        _linear_ln_kernel,
        out_shape=jax.ShapeDtypeStruct((Mp, D), jnp.float32),
        grid=(Mp // TM,),
        in_specs=[pl.BlockSpec((TM, D), lambda i: (i, 0)),
                  _bcast_spec((D, D)),
                  _bcast_spec((1, D)),
                  _bcast_spec((1, D)),
                  _bcast_spec((1, D))],
        out_specs=pl.BlockSpec((TM, D), lambda i: (i, 0)),
        compiler_params=_PARALLEL,
        cost_estimate=cost,
    )(xp, params['it_W'], params['it_b'], params['nt_g'], params['nt_b'])
    return out[:M]


def decision_scores(params, l2d, r2d):
    M, D = l2d.shape
    Mp, TM = _tiles(M)
    lp = _pad_rows(l2d, Mp)
    rp = _pad_rows(r2d, Mp)
    cost = pl.CostEstimate(flops=4 * Mp * D * DEC_H + 8 * Mp * DEC_H,
                           transcendentals=Mp * DEC_H,
                           bytes_accessed=4 * Mp * D * 2 + 2 * 2 * D * DEC_H + 4 * Mp)
    out = pl.pallas_call(
        _decision_kernel,
        out_shape=jax.ShapeDtypeStruct((Mp, 1), jnp.float32),
        grid=(Mp // TM,),
        in_specs=[pl.BlockSpec((TM, D), lambda i: (i, 0)),
                  pl.BlockSpec((TM, D), lambda i: (i, 0)),
                  _bcast_spec((D, DEC_H)),
                  _bcast_spec((D, DEC_H)),
                  _bcast_spec((1, DEC_H)),
                  _bcast_spec((1, DEC_H)),
                  _bcast_spec((1, 1))],
        out_specs=pl.BlockSpec((TM, 1), lambda i: (i, 0)),
        compiler_params=_PARALLEL,
        cost_estimate=cost,
    )(lp, rp, params['dec_W1_l'], params['dec_W1_r'], params['dec_b1'],
      params['dec_w2'], params['dec_b2'])
    return out[:M, 0]


def grc_cell(params, l2d, r2d):
    M, D = l2d.shape
    Mp, TM = _tiles(M)
    lp = _pad_rows(l2d, Mp)
    rp = _pad_rows(r2d, Mp)
    cost = pl.CostEstimate(
        flops=4 * Mp * D * 4 * D + 2 * Mp * 4 * D * 4 * D + 30 * Mp * D,
        transcendentals=7 * Mp * D,
        bytes_accessed=4 * Mp * D * 3 + 2 * (2 * D * 4 * D + 16 * D * D) + 40 * D)
    out = pl.pallas_call(
        _grc_kernel,
        out_shape=jax.ShapeDtypeStruct((Mp, D), jnp.float32),
        grid=(Mp // TM,),
        in_specs=[pl.BlockSpec((TM, D), lambda i: (i, 0)),
                  pl.BlockSpec((TM, D), lambda i: (i, 0)),
                  _bcast_spec((D, 4 * D)),
                  _bcast_spec((D, 4 * D)),
                  _bcast_spec((1, 4 * D)),
                  _bcast_spec((4 * D, 4 * D)),
                  _bcast_spec((1, 4 * D)),
                  _bcast_spec((1, D)),
                  _bcast_spec((1, D))],
        out_specs=pl.BlockSpec((TM, D), lambda i: (i, 0)),
        compiler_params=_PARALLEL,
        cost_estimate=cost,
    )(lp, rp, params['grc_W1_l'], params['grc_W1_r'], params['grc_b1'],
      params['grc_W2'], params['grc_b2'], params['grc_ln_g'], params['grc_ln_b'])
    return out[:M]


# ----------------------------------------------------------------------------
# Beam-search glue (plain JAX, tiny shapes, runs inside the single jit program)
# ----------------------------------------------------------------------------
def stochastic_topk(logits, mask, select_k):
    # Eval-mode (deterministic) top-k.
    # TODO(synk): training-mode Gumbel perturbation of the original stochastic_topk
    # (source not provided) is omitted; eval path is deterministic top-k.
    masked_logits = logits + (1.0 - mask) * (-1e9)
    soft_scores = jax.nn.softmax(masked_logits, axis=-1)
    _, idx = jax.lax.top_k(masked_logits, select_k)
    select_mask = jax.nn.one_hot(idx, logits.shape[-1], dtype=logits.dtype)
    return select_mask, soft_scores, idx


def select_composition(params, old_cs, mask, accu_scores, beam_mask, beam_size):
    N, B, S1, D = old_cs.shape
    S = S1 - 1
    # Decision on every adjacent pair; full-D rows (decision weights are zero-padded
    # so only the first SMALL_D channels contribute) -> no lane-slicing here.
    l_all = old_cs[:, :, :-1, :].reshape(N * B * S, D)
    r_all = old_cs[:, :, 1:, :].reshape(N * B * S, D)
    comp_weights = decision_scores(params, l_all, r_all).reshape(N * B, S)

    topk = min(S, beam_size)
    mask_rep = jnp.broadcast_to(mask[:, None, :], (N, B, S)).reshape(N * B, S)
    select_mask, soft_scores, sel_idx = stochastic_topk(comp_weights, mask_rep, topk)
    new_scores = jnp.log(jnp.take_along_axis(soft_scores, sel_idx, axis=-1) + 1e-20)
    new_scores = new_scores.reshape(N, B, topk)
    select_mask = select_mask.reshape(N, B, topk, S)

    done_mask = 1.0 - jnp.broadcast_to(mask[:, 0][:, None, None], (N, B, 1))
    if topk == 1:
        done_topk = jnp.ones((N, B, topk), jnp.float32)
    else:
        done_topk = jnp.concatenate(
            [jnp.ones((N, B, 1), jnp.float32), jnp.zeros((N, B, topk - 1), jnp.float32)],
            axis=-1)
    not_done_topk = jnp.ones((N, B, topk), jnp.float32)
    new_beam_mask = done_mask * done_topk + (1.0 - done_mask) * not_done_topk
    beam_mask = (beam_mask[..., None] * new_beam_mask).reshape(N, B * topk)
    accu_scores = (accu_scores.reshape(N, B, 1) + new_scores).reshape(N, B * topk)

    select_mask = select_mask.reshape(N, B * topk, S)
    sel_idx = sel_idx.reshape(N, B * topk)

    if B * topk > beam_size:
        B2 = beam_size
        # Beam pruning as an index gather (one-hot matmul replaced by take_along_axis).
        _, _, beam_idx = stochastic_topk(accu_scores, beam_mask, B2)   # (N, B2)
        origin = beam_idx // topk                                      # original beam id
        old_cs_rep = jnp.take_along_axis(
            old_cs, jnp.broadcast_to(origin[:, :, None, None], (N, B2, S1, D)), axis=1)
        select_mask = jnp.take_along_axis(
            select_mask, jnp.broadcast_to(beam_idx[:, :, None], (N, B2, S)), axis=1)
        sel_idx = jnp.take_along_axis(sel_idx, beam_idx, axis=1)
        accu_scores = jnp.take_along_axis(accu_scores, beam_idx, axis=1)
        beam_mask = jnp.take_along_axis(beam_mask, beam_idx, axis=1)
    else:
        B2 = B * topk
        old_cs_rep = jnp.repeat(old_cs, topk, axis=1)                  # (N, B*topk, S1, D)

    l_full = old_cs_rep[:, :, :-1, :]
    r_full = old_cs_rep[:, :, 1:, :]
    gidx = jnp.broadcast_to(sel_idx[:, :, None, None], (N, B2, 1, D))
    l_sel = jnp.take_along_axis(l_full, gidx, axis=2).reshape(N * B2, D)
    r_sel = jnp.take_along_axis(r_full, gidx, axis=2).reshape(N * B2, D)
    new_cs = grc_cell(params, l_sel, r_sel).reshape(N, B2, 1, D)

    sel_exp = select_mask[..., None]
    cum = jnp.cumsum(select_mask, axis=-1)
    left_mask_exp = (1.0 - cum)[..., None]
    right_mask_exp = (cum - select_mask)[..., None]
    new_cs = sel_exp * new_cs + left_mask_exp * l_full + right_mask_exp * r_full
    return old_cs_rep, new_cs, accu_scores, beam_mask


def update_state(old_cs, new_cs, done_mask):
    N = old_cs.shape[0]
    dm = done_mask.reshape(N, 1, 1, 1)
    return dm * new_cs + (1.0 - dm) * old_cs[..., :-1, :]


def beam_search(params, content_state, length_mask, accu_scores, beam_mask, beam_size):
    N, B0, S, D = content_state.shape
    for i in range(S - 1):
        B = content_state.shape[1]
        if i < S - 2:
            old_cs, new_cs, accu_scores, beam_mask = select_composition(
                params, content_state, length_mask[:, i + 1:], accu_scores, beam_mask,
                beam_size)
        else:
            old_cs = content_state
            l = content_state[:, :, :-1, :].reshape(N * B, D)
            r = content_state[:, :, 1:, :].reshape(N * B, D)
            new_cs = grc_cell(params, l, r).reshape(N, B, 1, D)
        done_mask = length_mask[:, i + 1]
        content_state = update_state(old_cs, new_cs, done_mask)
    B = content_state.shape[1]
    content_state = content_state.reshape(N, B, D)
    return {'content_state': content_state, 'beam_mask': beam_mask,
            'accu_scores': accu_scores}


# ----------------------------------------------------------------------------
# Full forward (eval mode)
# ----------------------------------------------------------------------------
def hebt_grc_forward(params, x, input_mask, config, training=False):
    N, S, D = x.shape
    # TODO(synk): pre_SSM (S4DWrapper) branch not implemented (config['pre_SSM']=False).
    seq = initial_transform_layernorm(params, x.reshape(N * S, D)).reshape(N, S, D)
    osequence = seq
    oinput_mask = input_mask

    chunk_size_cfg = S if (not config['chunk_mode_inference'] and not training) \
        else config['model_chunk_size']
    beam_size = config['beam_size']

    B = 1
    sequence = seq[:, None, :, :]                       # (N, 1, S, D)
    accu_scores = jnp.zeros((N, B, S), jnp.float32)
    beam_mask = jnp.ones((N, B, S), jnp.float32)
    cur_mask = input_mask
    N0 = N

    while S > 1:
        N_, B, S, D = sequence.shape
        if S >= chunk_size_cfg + chunk_size_cfg // 2:
            if S % chunk_size_cfg != 0:
                e = (S // chunk_size_cfg) * chunk_size_cfg + chunk_size_cfg - S
                S = S + e
                sequence = jnp.concatenate(
                    [sequence, jnp.zeros((N_, B, e, D), jnp.float32)], axis=-2)
                cur_mask = jnp.concatenate(
                    [cur_mask, jnp.zeros((N_, e), jnp.float32)], axis=-1)
                accu_scores = jnp.concatenate(
                    [accu_scores, jnp.zeros((N_, B, e), jnp.float32)], axis=-1)
                beam_mask = jnp.concatenate(
                    [beam_mask, jnp.zeros((N_, B, e), jnp.float32)], axis=-1)
            S1 = S // chunk_size_cfg
            chunk_size = chunk_size_cfg
        else:
            S1 = 1
            chunk_size = S

        sequence = sequence.reshape(N_, B, S1, chunk_size, D).transpose(0, 2, 1, 3, 4)
        sequence = sequence.reshape(N_ * S1, B, chunk_size, D)
        cur_mask = cur_mask.reshape(N_ * S1, chunk_size)
        accu_scores = accu_scores.reshape(N_, B, S1, chunk_size).transpose(0, 2, 1, 3)
        accu_scores = jnp.sum(accu_scores, axis=-1).reshape(N_ * S1, B)
        beam_mask = beam_mask.reshape(N_, B, S1, chunk_size).transpose(0, 2, 1, 3)[..., 0]
        beam_mask = beam_mask.reshape(N_ * S1, B)
        N0 = N_

        out = beam_search(params, sequence, cur_mask, accu_scores, beam_mask, beam_size)
        sequence = out['content_state']
        beam_mask = out['beam_mask']
        accu_scores = out['accu_scores']
        B = sequence.shape[1]

        # TODO(synk): RBA / RBA_advanced beam re-allocation (Categorical sampling) is
        # disabled (config['RBA']=False) and not implemented.

        sequence = sequence.reshape(N0, S1, B, D).transpose(0, 2, 1, 3)
        beam_mask = beam_mask.reshape(N0, S1, B).transpose(0, 2, 1)
        accu_scores = accu_scores.reshape(N0, S1, B).transpose(0, 2, 1)
        cur_mask = cur_mask.reshape(N0, S1, chunk_size)[:, :, 0]
        S = S1

    sequence = sequence[:, :, 0, :]          # (N, B, D)
    accu_scores = accu_scores[..., 0]        # (N, B)
    beam_mask = beam_mask[..., 0]            # (N, B)

    h = sequence
    scores = beam_mask * accu_scores + (1.0 - beam_mask) * (-999999.0)
    normed_scores = jax.nn.softmax(scores, axis=-1)
    global_state = jnp.sum(normed_scores[..., None] * h, axis=1)

    return {'sequence': osequence,
            'global_state': global_state,
            'input_mask': oinput_mask[..., None],
            'aux_loss': None}


def make_hebt_grc_forward(config, training=False):
    """Jit the whole forward so the per-level Python loops unroll into one XLA program."""
    def fwd(params, x, input_mask):
        return hebt_grc_forward(params, x, input_mask, config, training=training)
    return jax.jit(fwd)


# ----------------------------------------------------------------------------
# Deterministic parameter init (synthetic; matches module shapes; bf16 MXU weights)
# ----------------------------------------------------------------------------
def init_params(key, D):
    ks = jax.random.split(key, 6)

    def lin(k, fin, fout):
        k1, k2 = jax.random.split(k)
        b = 1.0 / math.sqrt(fin)
        W = jax.random.uniform(k1, (fin, fout), jnp.float32, -b, b)
        bias = jax.random.uniform(k2, (1, fout), jnp.float32, -b, b)
        return W, bias

    p = {}
    # initial_transform + LayerNorm
    it_W, p['it_b'] = lin(ks[0], D, D)
    p['it_W'] = it_W.astype(jnp.bfloat16)
    p['nt_g'] = jnp.ones((1, D), jnp.float32)
    p['nt_b'] = jnp.zeros((1, D), jnp.float32)

    # decision_module: Linear(2*64 -> 64), GELU, Linear(64 -> 1)
    # zero-padded to (D, 128) so the kernel operates on lane-dense full-D inputs.
    W1, b1 = lin(ks[1], 2 * SMALL_D, SMALL_D)
    W1l = jnp.zeros((D, DEC_H), jnp.float32).at[:SMALL_D, :SMALL_D].set(W1[:SMALL_D])
    W1r = jnp.zeros((D, DEC_H), jnp.float32).at[:SMALL_D, :SMALL_D].set(W1[SMALL_D:])
    p['dec_W1_l'] = W1l.astype(jnp.bfloat16)
    p['dec_W1_r'] = W1r.astype(jnp.bfloat16)
    p['dec_b1'] = jnp.zeros((1, DEC_H), jnp.float32).at[:, :SMALL_D].set(b1)
    W2, b2 = lin(ks[2], SMALL_D, 1)
    p['dec_w2'] = jnp.zeros((1, DEC_H), jnp.float32).at[:, :SMALL_D].set(W2.T)
    p['dec_b2'] = b2                                             # (1, 1)

    # GRC cell
    Wc1, bc1 = lin(ks[3], 2 * D, 4 * D)
    p['grc_W1_l'] = Wc1[:D].astype(jnp.bfloat16)
    p['grc_W1_r'] = Wc1[D:].astype(jnp.bfloat16)
    p['grc_b1'] = bc1
    Wc2, bc2 = lin(ks[4], 4 * D, 4 * D)
    p['grc_W2'] = Wc2.astype(jnp.bfloat16)
    p['grc_b2'] = bc2
    p['grc_ln_g'] = jnp.ones((1, D), jnp.float32)
    p['grc_ln_b'] = jnp.zeros((1, D), jnp.float32)
    return p


if __name__ == "__main__":
    key = jax.random.PRNGKey(0)
    N, S, D = 2, 8, 128          # hidden_size must be >= small_d (=64)
    config = dict(hidden_size=D, beam_size=2, rba_temp=1.0, model_chunk_size=30,
                  pre_SSM=False, rvnn_norm='layer', dropout=0.0,
                  chunk_mode_inference=False, RBA=False, RBA_random=False,
                  RBA_advanced=False)

    params = init_params(key, D)
    kx, _ = jax.random.split(jax.random.fold_in(key, 1))
    x = jax.random.normal(kx, (N, S, D), jnp.float32)
    lengths = jnp.array([8, 6])
    input_mask = (jnp.arange(S)[None, :] < lengths[:, None]).astype(jnp.float32)

    forward = make_hebt_grc_forward(config, training=False)
    out = forward(params, x, input_mask)
    jax.block_until_ready(out['global_state'])
    assert out['global_state'].shape == (N, D)
    assert out['sequence'].shape == (N, S, D)
    assert out['input_mask'].shape == (N, S, 1)
    assert bool(jnp.all(jnp.isfinite(out['global_state'])))
    print("KERNEL_OK")
</pallas_src>

<mosaic_0001>
module attributes {stable_mosaic.version = 11 : i64} {
  func.func @_linear_ln_kernel(%arg0: i32, %arg1: memref<16x128xf32, #tpu.memory_space<vmem>>, %arg2: memref<128x128xbf16, #tpu.memory_space<vmem>>, %arg3: memref<1x128xf32, #tpu.memory_space<vmem>>, %arg4: memref<1x128xf32, #tpu.memory_space<vmem>>, %arg5: memref<1x128xf32, #tpu.memory_space<vmem>>, %arg6: memref<16x128xf32, #tpu.memory_space<vmem>>) attributes {dimension_semantics = [#tpu.dimension_semantics<parallel>], iteration_bounds = array<i64: 1>, scalar_prefetch = 0 : i64, scratch_operands = 0 : i64, tpu.core_type = #tpu.core_type<tc>, window_params = [{transform_indices = @transform_0, window_bounds = array<i64: 16, 128>}, {pipeline_mode = #tpu.pipeline_mode<synchronous>, transform_indices = @transform_1, window_bounds = array<i64: 128, 128>}, {pipeline_mode = #tpu.pipeline_mode<synchronous>, transform_indices = @transform_2, window_bounds = array<i64: 1, 128>}, {pipeline_mode = #tpu.pipeline_mode<synchronous>, transform_indices = @transform_3, window_bounds = array<i64: 1, 128>}, {pipeline_mode = #tpu.pipeline_mode<synchronous>, transform_indices = @transform_4, window_bounds = array<i64: 1, 128>}, {transform_indices = @transform_5, window_bounds = array<i64: 16, 128>}]} {
    %c0 = arith.constant 0 : index
    %c0_0 = arith.constant 0 : index
    %0 = vector.load %arg1[%c0, %c0_0] : memref<16x128xf32, #tpu.memory_space<vmem>>, vector<16x128xf32>
    %1 = arith.truncf %0 : vector<16x128xf32> to vector<16x128xbf16>
    %c0_1 = arith.constant 0 : index
    %c0_2 = arith.constant 0 : index
    %2 = vector.load %arg2[%c0_1, %c0_2] : memref<128x128xbf16, #tpu.memory_space<vmem>>, vector<128x128xbf16>
    %cst = arith.constant dense<0.000000e+00> : vector<16x128xf32>
    %3 = tpu.matmul %1, %2, %cst {dimension_numbers = #tpu.dot_dimension_numbers<[1], [0], [0], [1], [0, 0, 1, 1], [], []>} : vector<16x128xbf16>, vector<128x128xbf16>, vector<16x128xf32> -> vector<16x128xf32>
    %c0_3 = arith.constant 0 : index
    %c0_4 = arith.constant 0 : index
    %4 = vector.load %arg3[%c0_3, %c0_4] : memref<1x128xf32, #tpu.memory_space<vmem>>, vector<1x128xf32>
    %5 = vector.broadcast %4 : vector<1x128xf32> to vector<16x128xf32>
    %6 = arith.addf %3, %5 : vector<16x128xf32>
    %cst_5 = arith.constant dense<0.000000e+00> : vector<16xf32>
    %7 = vector.multi_reduction <add>, %6, %cst_5 [1] : vector<16x128xf32> to vector<16xf32>
    %8 = vector.shape_cast %7 : vector<16xf32> to vector<16x1xf32>
    %cst_6 = arith.constant 1.280000e+02 : f32
    %9 = vector.broadcast %cst_6 : f32 to vector<16x1xf32>
    %10 = arith.divf %8, %9 : vector<16x1xf32>
    %11 = vector.broadcast %10 : vector<16x1xf32> to vector<16x128xf32>
    %12 = arith.subf %6, %11 : vector<16x128xf32>
    %13 = arith.mulf %12, %12 : vector<16x128xf32>
    %cst_7 = arith.constant dense<0.000000e+00> : vector<16xf32>
    %14 = vector.multi_reduction <add>, %13, %cst_7 [1] : vector<16x128xf32> to vector<16xf32>
    %15 = vector.shape_cast %14 : vector<16xf32> to vector<16x1xf32>
    %cst_8 = arith.constant 1.280000e+02 : f32
    %16 = vector.broadcast %cst_8 : f32 to vector<16x1xf32>
    %17 = arith.divf %15, %16 : vector<16x1xf32>
    %18 = vector.broadcast %10 : vector<16x1xf32> to vector<16x128xf32>
    %19 = arith.subf %6, %18 : vector<16x128xf32>
    %cst_9 = arith.constant 9.99999974E-6 : f32
    %20 = vector.broadcast %cst_9 : f32 to vector<16x1xf32>
    %21 = arith.addf %17, %20 : vector<16x1xf32>
    %22 = math.rsqrt %21 : vector<16x1xf32>
    %23 = vector.broadcast %22 : vector<16x1xf32> to vector<16x128xf32>
    %24 = arith.mulf %19, %23 : vector<16x128xf32>
    %c0_10 = arith.constant 0 : index
    %c0_11 = arith.constant 0 : index
    %25 = vector.load %arg4[%c0_10, %c0_11] : memref<1x128xf32, #tpu.memory_space<vmem>>, vector<1x128xf32>
    %26 = vector.broadcast %25 : vector<1x128xf32> to vector<16x128xf32>
    %27 = arith.mulf %24, %26 : vector<16x128xf32>
    %c0_12 = arith.constant 0 : index
    %c0_13 = arith.constant 0 : index
    %28 = vector.load %arg5[%c0_12, %c0_13] : memref<1x128xf32, #tpu.memory_space<vmem>>, vector<1x128xf32>
    %29 = vector.broadcast %28 : vector<1x128xf32> to vector<16x128xf32>
    %30 = arith.addf %27, %29 : vector<16x128xf32>
    %c0_14 = arith.constant 0 : index
    %c0_15 = arith.constant 0 : index
    %31 = vector.load %arg6[%c0_14, %c0_15] : memref<16x128xf32, #tpu.memory_space<vmem>>, vector<16x128xf32>
    tpu.vector_store %arg6[%c0_14, %c0_15], %30 {strides = array<i32>} : memref<16x128xf32, #tpu.memory_space<vmem>>, vector<16x128xf32>,
    return
  }
  func.func @transform_0(%arg0: i32) -> (i32, i32) {
    %c0_i32 = arith.constant 0 : i32
    %c0_i32_0 = arith.constant 0 : i32
    return %arg0, %c0_i32 : i32, i32
  }
  func.func @transform_1(%arg0: i32) -> (i32, i32) {
    %c0_i32 = arith.constant 0 : i32
    %c0_i32_0 = arith.constant 0 : i32
    %c0_i32_1 = arith.constant 0 : i32
    return %c0_i32, %c0_i32_0 : i32, i32
  }
  func.func @transform_2(%arg0: i32) -> (i32, i32) {
    %c0_i32 = arith.constant 0 : i32
    %c0_i32_0 = arith.constant 0 : i32
    %c0_i32_1 = arith.constant 0 : i32
    return %c0_i32, %c0_i32_0 : i32, i32
  }
  func.func @transform_3(%arg0: i32) -> (i32, i32) {
    %c0_i32 = arith.constant 0 : i32
    %c0_i32_0 = arith.constant 0 : i32
    %c0_i32_1 = arith.constant 0 : i32
    return %c0_i32, %c0_i32_0 : i32, i32
  }
  func.func @transform_4(%arg0: i32) -> (i32, i32) {
    %c0_i32 = arith.constant 0 : i32
    %c0_i32_0 = arith.constant 0 : i32
    %c0_i32_1 = arith.constant 0 : i32
    return %c0_i32, %c0_i32_0 : i32, i32
  }
  func.func @transform_5(%arg0: i32) -> (i32, i32) {
    %c0_i32 = arith.constant 0 : i32
    %c0_i32_0 = arith.constant 0 : i32
    return %arg0, %c0_i32 : i32, i32
  }
}

module attributes {stable_mosaic.version = 11 : i64} {
  func.func @_decision_kernel(%arg0: i32, %arg1: memref<16x128xf32, #tpu.memory_space<vmem>>, %arg2: memref<16x128xf32, #tpu.memory_space<vmem>>, %arg3: memref<128x128xbf16, #tpu.memory_space<vmem>>, %arg4: memref<128x128xbf16, #tpu.memory_space<vmem>>, %arg5: memref<1x128xf32, #tpu.memory_space<vmem>>, %arg6: memref<1x128xf32, #tpu.memory_space<vmem>>, %arg7: memref<1x1xf32, #tpu.memory_space<vmem>>, %arg8: memref<16x1xf32, #tpu.memory_space<vmem>>) attributes {dimension_semantics = [#tpu.dimension_semantics<parallel>], iteration_bounds = array<i64: 1>, scalar_prefetch = 0 : i64, scratch_operands = 0 : i64, tpu.core_type = #tpu.core_type<tc>, window_params = [{transform_indices = @transform_0, window_bounds = array<i64: 16, 128>}, {transform_indices = @transform_1, window_bounds = array<i64: 16, 128>}, {pipeline_mode = #tpu.pipeline_mode<synchronous>, transform_indices = @transform_2, window_bounds = array<i64: 128, 128>}, {pipeline_mode = #tpu.pipeline_mode<synchronous>, transform_indices = @transform_3, window_bounds = array<i64: 128, 128>}, {pipeline_mode = #tpu.pipeline_mode<synchronous>, transform_indices = @transform_4, window_bounds = array<i64: 1, 128>}, {pipeline_mode = #tpu.pipeline_mode<synchronous>, transform_indices = @transform_5, window_bounds = array<i64: 1, 128>}, {pipeline_mode = #tpu.pipeline_mode<synchronous>, transform_indices = @transform_6, window_bounds = array<i64: 1, 1>}, {transform_indices = @transform_7, window_bounds = array<i64: 16, 1>}]} {
    %c0 = arith.constant 0 : index
    %c0_0 = arith.constant 0 : index
    %0 = vector.load %arg1[%c0, %c0_0] : memref<16x128xf32, #tpu.memory_space<vmem>>, vector<16x128xf32>
    %1 = arith.truncf %0 : vector<16x128xf32> to vector<16x128xbf16>
    %c0_1 = arith.constant 0 : index
    %c0_2 = arith.constant 0 : index
    %2 = vector.load %arg2[%c0_1, %c0_2] : memref<16x128xf32, #tpu.memory_space<vmem>>, vector<16x128xf32>
    %3 = arith.truncf %2 : vector<16x128xf32> to vector<16x128xbf16>
    %c0_3 = arith.constant 0 : index
    %c0_4 = arith.constant 0 : index
    %4 = vector.load %arg3[%c0_3, %c0_4] : memref<128x128xbf16, #tpu.memory_space<vmem>>, vector<128x128xbf16>
    %cst = arith.constant dense<0.000000e+00> : vector<16x128xf32>
    %5 = tpu.matmul %1, %4, %cst {dimension_numbers = #tpu.dot_dimension_numbers<[1], [0], [0], [1], [0, 0, 1, 1], [], []>} : vector<16x128xbf16>, vector<128x128xbf16>, vector<16x128xf32> -> vector<16x128xf32>
    %c0_5 = arith.constant 0 : index
    %c0_6 = arith.constant 0 : index
    %6 = vector.load %arg4[%c0_5, %c0_6] : memref<128x128xbf16, #tpu.memory_space<vmem>>, vector<128x128xbf16>
    %cst_7 = arith.constant dense<0.000000e+00> : vector<16x128xf32>
    %7 = tpu.matmul %3, %6, %cst_7 {dimension_numbers = #tpu.dot_dimension_numbers<[1], [0], [0], [1], [0, 0, 1, 1], [], []>} : vector<16x128xbf16>, vector<128x128xbf16>, vector<16x128xf32> -> vector<16x128xf32>
    %8 = arith.addf %5, %7 : vector<16x128xf32>
    %c0_8 = arith.constant 0 : index
    %c0_9 = arith.constant 0 : index
    %9 = vector.load %arg5[%c0_8, %c0_9] : memref<1x128xf32, #tpu.memory_space<vmem>>, vector<1x128xf32>
    %10 = vector.broadcast %9 : vector<1x128xf32> to vector<16x128xf32>
    %11 = arith.addf %8, %10 : vector<16x128xf32>
    %12 = arith.mulf %11, %11 : vector<16x128xf32>
    %13 = arith.mulf %11, %12 : vector<16x128xf32>
    %cst_10 = arith.constant 4.471500e-02 : f32
    %14 = vector.broadcast %cst_10 : f32 to vector<16x128xf32>
    %15 = arith.mulf %14, %13 : vector<16x128xf32>
    %16 = arith.addf %11, %15 : vector<16x128xf32>
    %cst_11 = arith.constant 0.797884583 : f32
    %17 = vector.broadcast %cst_11 : f32 to vector<16x128xf32>
    %18 = arith.mulf %17, %16 : vector<16x128xf32>
    %19 = math.tanh %18 : vector<16x128xf32>
    %cst_12 = arith.constant 1.000000e+00 : f32
    %20 = vector.broadcast %cst_12 : f32 to vector<16x128xf32>
    %21 = arith.addf %20, %19 : vector<16x128xf32>
    %cst_13 = arith.constant 5.000000e-01 : f32
    %22 = vector.broadcast %cst_13 : f32 to vector<16x128xf32>
    %23 = arith.mulf %22, %21 : vector<16x128xf32>
    %24 = arith.mulf %11, %23 : vector<16x128xf32>
    %c0_14 = arith.constant 0 : index
    %c0_15 = arith.constant 0 : index
    %25 = vector.load %arg6[%c0_14, %c0_15] : memref<1x128xf32, #tpu.memory_space<vmem>>, vector<1x128xf32>
    %26 = vector.broadcast %25 : vector<1x128xf32> to vector<16x128xf32>
    %27 = arith.mulf %24, %26 : vector<16x128xf32>
    %cst_16 = arith.constant dense<0.000000e+00> : vector<16xf32>
    %28 = vector.multi_reduction <add>, %27, %cst_16 [1] : vector<16x128xf32> to vector<16xf32>
    %29 = vector.shape_cast %28 : vector<16xf32> to vector<16x1xf32>
    %c0_17 = arith.constant 0 : index
    %c0_18 = arith.constant 0 : index
    %30 = vector.load %arg7[%c0_17, %c0_18] : memref<1x1xf32, #tpu.memory_space<vmem>>, vector<1x1xf32>
    %31 = vector.broadcast %30 : vector<1x1xf32> to vector<16x1xf32>
    %32 = arith.addf %29, %31 : vector<16x1xf32>
    %c0_19 = arith.constant 0 : index
    %c0_20 = arith.constant 0 : index
    %33 = vector.load %arg8[%c0_19, %c0_20] : memref<16x1xf32, #tpu.memory_space<vmem>>, vector<16x1xf32>
    tpu.vector_store %arg8[%c0_19, %c0_20], %32 {strides = array<i32>} : memref<16x1xf32, #tpu.memory_space<vmem>>, vector<16x1xf32>,
    return
  }
  func.func @transform_0(%arg0: i32) -> (i32, i32) {
    %c0_i32 = arith.constant 0 : i32
    %c0_i32_0 = arith.constant 0 : i32
    return %arg0, %c0_i32 : i32, i32
  }
  func.func @transform_1(%arg0: i32) -> (i32, i32) {
    %c0_i32 = arith.constant 0 : i32
    %c0_i32_0 = arith.constant 0 : i32
    return %arg0, %c0_i32 : i32, i32
  }
  func.func @transform_2(%arg0: i32) -> (i32, i32) {
    %c0_i32 = arith.constant 0 : i32
    %c0_i32_0 = arith.constant 0 : i32
    %c0_i32_1 = arith.constant 0 : i32
    return %c0_i32, %c0_i32_0 : i32, i32
  }
  func.func @transform_3(%arg0: i32) -> (i32, i32) {
    %c0_i32 = arith.constant 0 : i32
    %c0_i32_0 = arith.constant 0 : i32
    %c0_i32_1 = arith.constant 0 : i32
    return %c0_i32, %c0_i32_0 : i32, i32
  }
  func.func @transform_4(%arg0: i32) -> (i32, i32) {
    %c0_i32 = arith.constant 0 : i32
    %c0_i32_0 = arith.constant 0 : i32
    %c0_i32_1 = arith.constant 0 : i32
    return %c0_i32, %c0_i32_0 : i32, i32
  }
  func.func @transform_5(%arg0: i32) -> (i32, i32) {
    %c0_i32 = arith.constant 0 : i32
    %c0_i32_0 = arith.constant 0 : i32
    %c0_i32_1 = arith.constant 0 : i32
    return %c0_i32, %c0_i32_0 : i32, i32
  }
  func.func @transform_6(%arg0: i32) -> (i32, i32) {
    %c0_i32 = arith.constant 0 : i32
    %c0_i32_0 = arith.constant 0 : i32
    %c0_i32_1 = arith.constant 0 : i32
    return %c0_i32, %c0_i32_0 : i32, i32
  }
  func.func @transform_7(%arg0: i32) -> (i32, i32) {
    %c0_i32 = arith.constant 0 : i32
    %c0_i32_0 = arith.constant 0 : i32
    return %arg0, %c0_i32 : i32, i32
  }
}

module attributes {stable_mosaic.version = 11 : i64} {
  func.func @_grc_kernel(%arg0: i32, %arg1: memref<8x128xf32, #tpu.memory_space<vmem>>, %arg2: memref<8x128xf32, #tpu.memory_space<vmem>>, %arg3: memref<128x512xbf16, #tpu.memory_space<vmem>>, %arg4: memref<128x512xbf16, #tpu.memory_space<vmem>>, %arg5: memref<1x512xf32, #tpu.memory_space<vmem>>, %arg6: memref<512x512xbf16, #tpu.memory_space<vmem>>, %arg7: memref<1x512xf32, #tpu.memory_space<vmem>>, %arg8: memref<1x128xf32, #tpu.memory_space<vmem>>, %arg9: memref<1x128xf32, #tpu.memory_space<vmem>>, %arg10: memref<8x128xf32, #tpu.memory_space<vmem>>) attributes {dimension_semantics = [#tpu.dimension_semantics<parallel>], iteration_bounds = array<i64: 1>, scalar_prefetch = 0 : i64, scratch_operands = 0 : i64, tpu.core_type = #tpu.core_type<tc>, window_params = [{transform_indices = @transform_0, window_bounds = array<i64: 8, 128>}, {transform_indices = @transform_1, window_bounds = array<i64: 8, 128>}, {pipeline_mode = #tpu.pipeline_mode<synchronous>, transform_indices = @transform_2, window_bounds = array<i64: 128, 512>}, {pipeline_mode = #tpu.pipeline_mode<synchronous>, transform_indices = @transform_3, window_bounds = array<i64: 128, 512>}, {pipeline_mode = #tpu.pipeline_mode<synchronous>, transform_indices = @transform_4, window_bounds = array<i64: 1, 512>}, {pipeline_mode = #tpu.pipeline_mode<synchronous>, transform_indices = @transform_5, window_bounds = array<i64: 512, 512>}, {pipeline_mode = #tpu.pipeline_mode<synchronous>, transform_indices = @transform_6, window_bounds = array<i64: 1, 512>}, {pipeline_mode = #tpu.pipeline_mode<synchronous>, transform_indices = @transform_7, window_bounds = array<i64: 1, 128>}, {pipeline_mode = #tpu.pipeline_mode<synchronous>, transform_indices = @transform_8, window_bounds = array<i64: 1, 128>}, {transform_indices = @transform_9, window_bounds = array<i64: 8, 128>}]} {
    %c0 = arith.constant 0 : index
    %c0_0 = arith.constant 0 : index
    %0 = vector.load %arg1[%c0, %c0_0] : memref<8x128xf32, #tpu.memory_space<vmem>>, vector<8x128xf32>
    %c0_1 = arith.constant 0 : index
    %c0_2 = arith.constant 0 : index
    %1 = vector.load %arg2[%c0_1, %c0_2] : memref<8x128xf32, #tpu.memory_space<vmem>>, vector<8x128xf32>
    %2 = arith.truncf %0 : vector<8x128xf32> to vector<8x128xbf16>
    %c0_3 = arith.constant 0 : index
    %c0_4 = arith.constant 0 : index
    %3 = vector.load %arg3[%c0_3, %c0_4] : memref<128x512xbf16, #tpu.memory_space<vmem>>, vector<128x512xbf16>
    %cst = arith.constant dense<0.000000e+00> : vector<8x512xf32>
    %4 = tpu.matmul %2, %3, %cst {dimension_numbers = #tpu.dot_dimension_numbers<[1], [0], [0], [1], [0, 0, 1, 1], [], []>} : vector<8x128xbf16>, vector<128x512xbf16>, vector<8x512xf32> -> vector<8x512xf32>
    %5 = arith.truncf %1 : vector<8x128xf32> to vector<8x128xbf16>
    %c0_5 = arith.constant 0 : index
    %c0_6 = arith.constant 0 : index
    %6 = vector.load %arg4[%c0_5, %c0_6] : memref<128x512xbf16, #tpu.memory_space<vmem>>, vector<128x512xbf16>
    %cst_7 = arith.constant dense<0.000000e+00> : vector<8x512xf32>
    %7 = tpu.matmul %5, %6, %cst_7 {dimension_numbers = #tpu.dot_dimension_numbers<[1], [0], [0], [1], [0, 0, 1, 1], [], []>} : vector<8x128xbf16>, vector<128x512xbf16>, vector<8x512xf32> -> vector<8x512xf32>
    %8 = arith.addf %4, %7 : vector<8x512xf32>
    %c0_8 = arith.constant 0 : index
    %c0_9 = arith.constant 0 : index
    %9 = vector.load %arg5[%c0_8, %c0_9] : memref<1x512xf32, #tpu.memory_space<vmem>>, vector<1x512xf32>
    %10 = vector.broadcast %9 : vector<1x512xf32> to vector<8x512xf32>
    %11 = arith.addf %8, %10 : vector<8x512xf32>
    %12 = arith.mulf %11, %11 : vector<8x512xf32>
    %13 = arith.mulf %11, %12 : vector<8x512xf32>
    %cst_10 = arith.constant 4.471500e-02 : f32
    %14 = vector.broadcast %cst_10 : f32 to vector<8x512xf32>
    %15 = arith.mulf %14, %13 : vector<8x512xf32>
    %16 = arith.addf %11, %15 : vector<8x512xf32>
    %cst_11 = arith.constant 0.797884583 : f32
    %17 = vector.broadcast %cst_11 : f32 to vector<8x512xf32>
    %18 = arith.mulf %17, %16 : vector<8x512xf32>
    %19 = math.tanh %18 : vector<8x512xf32>
    %cst_12 = arith.constant 1.000000e+00 : f32
    %20 = vector.broadcast %cst_12 : f32 to vector<8x512xf32>
    %21 = arith.addf %20, %19 : vector<8x512xf32>
    %cst_13 = arith.constant 5.000000e-01 : f32
    %22 = vector.broadcast %cst_13 : f32 to vector<8x512xf32>
    %23 = arith.mulf %22, %21 : vector<8x512xf32>
    %24 = arith.mulf %11, %23 : vector<8x512xf32>
    %25 = arith.truncf %24 : vector<8x512xf32> to vector<8x512xbf16>
    %c0_14 = arith.constant 0 : index
    %c0_15 = arith.constant 0 : index
    %26 = vector.load %arg6[%c0_14, %c0_15] : memref<512x512xbf16, #tpu.memory_space<vmem>>, vector<512x512xbf16>
    %cst_16 = arith.constant dense<0.000000e+00> : vector<8x512xf32>
    %27 = tpu.matmul %25, %26, %cst_16 {dimension_numbers = #tpu.dot_dimension_numbers<[1], [0], [0], [1], [0, 0, 1, 1], [], []>} : vector<8x512xbf16>, vector<512x512xbf16>, vector<8x512xf32> -> vector<8x512xf32>
    %c0_17 = arith.constant 0 : index
    %c0_18 = arith.constant 0 : index
    %28 = vector.load %arg7[%c0_17, %c0_18] : memref<1x512xf32, #tpu.memory_space<vmem>>, vector<1x512xf32>
    %29 = vector.broadcast %28 : vector<1x512xf32> to vector<8x512xf32>
    %30 = arith.addf %27, %29 : vector<8x512xf32>
    %31 = vector.extract_strided_slice %30 {offsets = [0, 0], sizes = [8, 128], strides = [1, 1]} : vector<8x512xf32> to vector<8x128xf32>
    %32 = vector.extract_strided_slice %30 {offsets = [0, 128], sizes = [8, 128], strides = [1, 1]} : vector<8x512xf32> to vector<8x128xf32>
    %33 = vector.extract_strided_slice %30 {offsets = [0, 256], sizes = [8, 128], strides = [1, 1]} : vector<8x512xf32> to vector<8x128xf32>
    %34 = vector.extract_strided_slice %30 {offsets = [0, 384], sizes = [8, 128], strides = [1, 1]} : vector<8x512xf32> to vector<8x128xf32>
    %35 = arith.maximumf %31, %32 : vector<8x128xf32>
    %36 = arith.maximumf %35, %33 : vector<8x128xf32>
    %37 = arith.subf %31, %36 : vector<8x128xf32>
    %38 = math.exp %37 : vector<8x128xf32>
    %39 = arith.subf %32, %36 : vector<8x128xf32>
    %40 = math.exp %39 : vector<8x128xf32>
    %41 = arith.subf %33, %36 : vector<8x128xf32>
    %42 = math.exp %41 : vector<8x128xf32>
    %43 = arith.addf %38, %40 : vector<8x128xf32>
    %44 = arith.addf %43, %42 : vector<8x128xf32>
    %45 = tpu.reciprocal %44 {approx = true} : vector<8x128xf32> -> vector<8x128xf32>
    %cst_19 = arith.constant dense<0.000000e+00> : vector<8xf32>
    %46 = vector.multi_reduction <add>, %34, %cst_19 [1] : vector<8x128xf32> to vector<8xf32>
    %47 = vector.shape_cast %46 : vector<8xf32> to vector<8x1xf32>
    %cst_20 = arith.constant 1.280000e+02 : f32
    %48 = vector.broadcast %cst_20 : f32 to vector<8x1xf32>
    %49 = arith.divf %47, %48 : vector<8x1xf32>
    %50 = vector.broadcast %49 : vector<8x1xf32> to vector<8x128xf32>
    %51 = arith.subf %34, %50 : vector<8x128xf32>
    %52 = arith.mulf %51, %51 : vector<8x128xf32>
    %cst_21 = arith.constant dense<0.000000e+00> : vector<8xf32>
    %53 = vector.multi_reduction <add>, %52, %cst_21 [1] : vector<8x128xf32> to vector<8xf32>
    %54 = vector.shape_cast %53 : vector<8xf32> to vector<8x1xf32>
    %cst_22 = arith.constant 1.280000e+02 : f32
    %55 = vector.broadcast %cst_22 : f32 to vector<8x1xf32>
    %56 = arith.divf %54, %55 : vector<8x1xf32>
    %57 = vector.broadcast %49 : vector<8x1xf32> to vector<8x128xf32>
    %58 = arith.subf %34, %57 : vector<8x128xf32>
    %cst_23 = arith.constant 9.99999974E-6 : f32
    %59 = vector.broadcast %cst_23 : f32 to vector<8x1xf32>
    %60 = arith.addf %56, %59 : vector<8x1xf32>
    %61 = math.rsqrt %60 : vector<8x1xf32>
    %62 = vector.broadcast %61 : vector<8x1xf32> to vector<8x128xf32>
    %63 = arith.mulf %58, %62 : vector<8x128xf32>
    %c0_24 = arith.constant 0 : index
    %c0_25 = arith.constant 0 : index
    %64 = vector.load %arg8[%c0_24, %c0_25] : memref<1x128xf32, #tpu.memory_space<vmem>>, vector<1x128xf32>
    %65 = vector.broadcast %64 : vector<1x128xf32> to vector<8x128xf32>
    %66 = arith.mulf %63, %65 : vector<8x128xf32>
    %c0_26 = arith.constant 0 : index
    %c0_27 = arith.constant 0 : index
    %67 = vector.load %arg9[%c0_26, %c0_27] : memref<1x128xf32, #tpu.memory_space<vmem>>, vector<1x128xf32>
    %68 = vector.broadcast %67 : vector<1x128xf32> to vector<8x128xf32>
    %69 = arith.addf %66, %68 : vector<8x128xf32>
    %70 = arith.mulf %38, %69 : vector<8x128xf32>
    %71 = arith.mulf %40, %0 : vector<8x128xf32>
    %72 = arith.addf %70, %71 : vector<8x128xf32>
    %73 = arith.mulf %42, %1 : vector<8x128xf32>
    %74 = arith.addf %72, %73 : vector<8x128xf32>
    %75 = arith.mulf %74, %45 : vector<8x128xf32>
    %c0_28 = arith.constant 0 : index
    %c0_29 = arith.constant 0 : index
    %76 = vector.load %arg10[%c0_28, %c0_29] : memref<8x128xf32, #tpu.memory_space<vmem>>, vector<8x128xf32>
    tpu.vector_store %arg10[%c0_28, %c0_29], %75 {strides = array<i32>} : memref<8x128xf32, #tpu.memory_space<vmem>>, vector<8x128xf32>,
    return
  }
  func.func @transform_0(%arg0: i32) -> (i32, i32) {
    %c0_i32 = arith.constant 0 : i32
    %c0_i32_0 = arith.constant 0 : i32
    return %arg0, %c0_i32 : i32, i32
  }
  func.func @transform_1(%arg0: i32) -> (i32, i32) {
    %c0_i32 = arith.constant 0 : i32
    %c0_i32_0 = arith.constant 0 : i32
    return %arg0, %c0_i32 : i32, i32
  }
  func.func @transform_2(%arg0: i32) -> (i32, i32) {
    %c0_i32 = arith.constant 0 : i32
    %c0_i32_0 = arith.constant 0 : i32
    %c0_i32_1 = arith.constant 0 : i32
    return %c0_i32, %c0_i32_0 : i32, i32
  }
  func.func @transform_3(%arg0: i32) -> (i32, i32) {
    %c0_i32 = arith.constant 0 : i32
    %c0_i32_0 = arith.constant 0 : i32
    %c0_i32_1 = arith.constant 0 : i32
    return %c0_i32, %c0_i32_0 : i32, i32
  }
  func.func @transform_4(%arg0: i32) -> (i32, i32) {
    %c0_i32 = arith.constant 0 : i32
    %c0_i32_0 = arith.constant 0 : i32
    %c0_i32_1 = arith.constant 0 : i32
    return %c0_i32, %c0_i32_0 : i32, i32
  }
  func.func @transform_5(%arg0: i32) -> (i32, i32) {
    %c0_i32 = arith.constant 0 : i32
    %c0_i32_0 = arith.constant 0 : i32
    %c0_i32_1 = arith.constant 0 : i32
    return %c0_i32, %c0_i32_0 : i32, i32
  }
  func.func @transform_6(%arg0: i32) -> (i32, i32) {
    %c0_i32 = arith.constant 0 : i32
    %c0_i32_0 = arith.constant 0 : i32
    %c0_i32_1 = arith.constant 0 : i32
    return %c0_i32, %c0_i32_0 : i32, i32
  }
  func.func @transform_7(%arg0: i32) -> (i32, i32) {
    %c0_i32 = arith.constant 0 : i32
    %c0_i32_0 = arith.constant 0 : i32
    %c0_i32_1 = arith.constant 0 : i32
    return %c0_i32, %c0_i32_0 : i32, i32
  }
  func.func @transform_8(%arg0: i32) -> (i32, i32) {
    %c0_i32 = arith.constant 0 : i32
    %c0_i32_0 = arith.constant 0 : i32
    %c0_i32_1 = arith.constant 0 : i32
    return %c0_i32, %c0_i32_0 : i32, i32
  }
  func.func @transform_9(%arg0: i32) -> (i32, i32) {
    %c0_i32 = arith.constant 0 : i32
    %c0_i32_0 = arith.constant 0 : i32
    return %arg0, %c0_i32 : i32, i32
  }
}

module attributes {stable_mosaic.version = 11 : i64} {
  func.func @_decision_kernel(%arg0: i32, %arg1: memref<24x128xf32, #tpu.memory_space<vmem>>, %arg2: memref<24x128xf32, #tpu.memory_space<vmem>>, %arg3: memref<128x128xbf16, #tpu.memory_space<vmem>>, %arg4: memref<128x128xbf16, #tpu.memory_space<vmem>>, %arg5: memref<1x128xf32, #tpu.memory_space<vmem>>, %arg6: memref<1x128xf32, #tpu.memory_space<vmem>>, %arg7: memref<1x1xf32, #tpu.memory_space<vmem>>, %arg8: memref<24x1xf32, #tpu.memory_space<vmem>>) attributes {dimension_semantics = [#tpu.dimension_semantics<parallel>], iteration_bounds = array<i64: 1>, scalar_prefetch = 0 : i64, scratch_operands = 0 : i64, tpu.core_type = #tpu.core_type<tc>, window_params = [{transform_indices = @transform_0, window_bounds = array<i64: 24, 128>}, {transform_indices = @transform_1, window_bounds = array<i64: 24, 128>}, {pipeline_mode = #tpu.pipeline_mode<synchronous>, transform_indices = @transform_2, window_bounds = array<i64: 128, 128>}, {pipeline_mode = #tpu.pipeline_mode<synchronous>, transform_indices = @transform_3, window_bounds = array<i64: 128, 128>}, {pipeline_mode = #tpu.pipeline_mode<synchronous>, transform_indices = @transform_4, window_bounds = array<i64: 1, 128>}, {pipeline_mode = #tpu.pipeline_mode<synchronous>, transform_indices = @transform_5, window_bounds = array<i64: 1, 128>}, {pipeline_mode = #tpu.pipeline_mode<synchronous>, transform_indices = @transform_6, window_bounds = array<i64: 1, 1>}, {transform_indices = @transform_7, window_bounds = array<i64: 24, 1>}]} {
    %c0 = arith.constant 0 : index
    %c0_0 = arith.constant 0 : index
    %0 = vector.load %arg1[%c0, %c0_0] : memref<24x128xf32, #tpu.memory_space<vmem>>, vector<24x128xf32>
    %1 = arith.truncf %0 : vector<24x128xf32> to vector<24x128xbf16>
    %c0_1 = arith.constant 0 : index
    %c0_2 = arith.constant 0 : index
    %2 = vector.load %arg2[%c0_1, %c0_2] : memref<24x128xf32, #tpu.memory_space<vmem>>, vector<24x128xf32>
    %3 = arith.truncf %2 : vector<24x128xf32> to vector<24x128xbf16>
    %c0_3 = arith.constant 0 : index
    %c0_4 = arith.constant 0 : index
    %4 = vector.load %arg3[%c0_3, %c0_4] : memref<128x128xbf16, #tpu.memory_space<vmem>>, vector<128x128xbf16>
    %cst = arith.constant dense<0.000000e+00> : vector<24x128xf32>
    %5 = tpu.matmul %1, %4, %cst {dimension_numbers = #tpu.dot_dimension_numbers<[1], [0], [0], [1], [0, 0, 1, 1], [], []>} : vector<24x128xbf16>, vector<128x128xbf16>, vector<24x128xf32> -> vector<24x128xf32>
    %c0_5 = arith.constant 0 : index
    %c0_6 = arith.constant 0 : index
    %6 = vector.load %arg4[%c0_5, %c0_6] : memref<128x128xbf16, #tpu.memory_space<vmem>>, vector<128x128xbf16>
    %cst_7 = arith.constant dense<0.000000e+00> : vector<24x128xf32>
    %7 = tpu.matmul %3, %6, %cst_7 {dimension_numbers = #tpu.dot_dimension_numbers<[1], [0], [0], [1], [0, 0, 1, 1], [], []>} : vector<24x128xbf16>, vector<128x128xbf16>, vector<24x128xf32> -> vector<24x128xf32>
    %8 = arith.addf %5, %7 : vector<24x128xf32>
    %c0_8 = arith.constant 0 : index
    %c0_9 = arith.constant 0 : index
    %9 = vector.load %arg5[%c0_8, %c0_9] : memref<1x128xf32, #tpu.memory_space<vmem>>, vector<1x128xf32>
    %10 = vector.broadcast %9 : vector<1x128xf32> to vector<24x128xf32>
    %11 = arith.addf %8, %10 : vector<24x128xf32>
    %12 = arith.mulf %11, %11 : vector<24x128xf32>
    %13 = arith.mulf %11, %12 : vector<24x128xf32>
    %cst_10 = arith.constant 4.471500e-02 : f32
    %14 = vector.broadcast %cst_10 : f32 to vector<24x128xf32>
    %15 = arith.mulf %14, %13 : vector<24x128xf32>
    %16 = arith.addf %11, %15 : vector<24x128xf32>
    %cst_11 = arith.constant 0.797884583 : f32
    %17 = vector.broadcast %cst_11 : f32 to vector<24x128xf32>
    %18 = arith.mulf %17, %16 : vector<24x128xf32>
    %19 = math.tanh %18 : vector<24x128xf32>
    %cst_12 = arith.constant 1.000000e+00 : f32
    %20 = vector.broadcast %cst_12 : f32 to vector<24x128xf32>
    %21 = arith.addf %20, %19 : vector<24x128xf32>
    %cst_13 = arith.constant 5.000000e-01 : f32
    %22 = vector.broadcast %cst_13 : f32 to vector<24x128xf32>
    %23 = arith.mulf %22, %21 : vector<24x128xf32>
    %24 = arith.mulf %11, %23 : vector<24x128xf32>
    %c0_14 = arith.constant 0 : index
    %c0_15 = arith.constant 0 : index
    %25 = vector.load %arg6[%c0_14, %c0_15] : memref<1x128xf32, #tpu.memory_space<vmem>>, vector<1x128xf32>
    %26 = vector.broadcast %25 : vector<1x128xf32> to vector<24x128xf32>
    %27 = arith.mulf %24, %26 : vector<24x128xf32>
    %cst_16 = arith.constant dense<0.000000e+00> : vector<24xf32>
    %28 = vector.multi_reduction <add>, %27, %cst_16 [1] : vector<24x128xf32> to vector<24xf32>
    %29 = vector.shape_cast %28 : vector<24xf32> to vector<24x1xf32>
    %c0_17 = arith.constant 0 : index
    %c0_18 = arith.constant 0 : index
    %30 = vector.load %arg7[%c0_17, %c0_18] : memref<1x1xf32, #tpu.memory_space<vmem>>, vector<1x1xf32>
    %31 = vector.broadcast %30 : vector<1x1xf32> to vector<24x1xf32>
    %32 = arith.addf %29, %31 : vector<24x1xf32>
    %c0_19 = arith.constant 0 : index
    %c0_20 = arith.constant 0 : index
    %33 = vector.load %arg8[%c0_19, %c0_20] : memref<24x1xf32, #tpu.memory_space<vmem>>, vector<24x1xf32>
    tpu.vector_store %arg8[%c0_19, %c0_20], %32 {strides = array<i32>} : memref<24x1xf32, #tpu.memory_space<vmem>>, vector<24x1xf32>,
    return
  }
  func.func @transform_0(%arg0: i32) -> (i32, i32) {
    %c0_i32 = arith.constant 0 : i32
    %c0_i32_0 = arith.constant 0 : i32
    return %arg0, %c0_i32 : i32, i32
  }
  func.func @transform_1(%arg0: i32) -> (i32, i32) {
    %c0_i32 = arith.constant 0 : i32
    %c0_i32_0 = arith.constant 0 : i32
    return %arg0, %c0_i32 : i32, i32
  }
  func.func @transform_2(%arg0: i32) -> (i32, i32) {
    %c0_i32 = arith.constant 0 : i32
    %c0_i32_0 = arith.constant 0 : i32
    %c0_i32_1 = arith.constant 0 : i32
    return %c0_i32, %c0_i32_0 : i32, i32
  }
  func.func @transform_3(%arg0: i32) -> (i32, i32) {
    %c0_i32 = arith.constant 0 : i32
    %c0_i32_0 = arith.constant 0 : i32
    %c0_i32_1 = arith.constant 0 : i32
    return %c0_i32, %c0_i32_0 : i32, i32
  }
  func.func @transform_4(%arg0: i32) -> (i32, i32) {
    %c0_i32 = arith.constant 0 : i32
    %c0_i32_0 = arith.constant 0 : i32
    %c0_i32_1 = arith.constant 0 : i32
    return %c0_i32, %c0_i32_0 : i32, i32
  }
  func.func @transform_5(%arg0: i32) -> (i32, i32) {
    %c0_i32 = arith.constant 0 : i32
    %c0_i32_0 = arith.constant 0 : i32
    %c0_i32_1 = arith.constant 0 : i32
    return %c0_i32, %c0_i32_0 : i32, i32
  }
  func.func @transform_6(%arg0: i32) -> (i32, i32) {
    %c0_i32 = arith.constant 0 : i32
    %c0_i32_0 = arith.constant 0 : i32
    %c0_i32_1 = arith.constant 0 : i32
    return %c0_i32, %c0_i32_0 : i32, i32
  }
  func.func @transform_7(%arg0: i32) -> (i32, i32) {
    %c0_i32 = arith.constant 0 : i32
    %c0_i32_0 = arith.constant 0 : i32
    return %arg0, %c0_i32 : i32, i32
  }
}

module attributes {stable_mosaic.version = 11 : i64} {
  func.func @_decision_kernel(%arg0: i32, %arg1: memref<16x128xf32, #tpu.memory_space<vmem>>, %arg2: memref<16x128xf32, #tpu.memory_space<vmem>>, %arg3: memref<128x128xbf16, #tpu.memory_space<vmem>>, %arg4: memref<128x128xbf16, #tpu.memory_space<vmem>>, %arg5: memref<1x128xf32, #tpu.memory_space<vmem>>, %arg6: memref<1x128xf32, #tpu.memory_space<vmem>>, %arg7: memref<1x1xf32, #tpu.memory_space<vmem>>, %arg8: memref<16x1xf32, #tpu.memory_space<vmem>>) attributes {dimension_semantics = [#tpu.dimension_semantics<parallel>], iteration_bounds = array<i64: 1>, scalar_prefetch = 0 : i64, scratch_operands = 0 : i64, tpu.core_type = #tpu.core_type<tc>, window_params = [{transform_indices = @transform_0, window_bounds = array<i64: 16, 128>}, {transform_indices = @transform_1, window_bounds = array<i64: 16, 128>}, {pipeline_mode = #tpu.pipeline_mode<synchronous>, transform_indices = @transform_2, window_bounds = array<i64: 128, 128>}, {pipeline_mode = #tpu.pipeline_mode<synchronous>, transform_indices = @transform_3, window_bounds = array<i64: 128, 128>}, {pipeline_mode = #tpu.pipeline_mode<synchronous>, transform_indices = @transform_4, window_bounds = array<i64: 1, 128>}, {pipeline_mode = #tpu.pipeline_mode<synchronous>, transform_indices = @transform_5, window_bounds = array<i64: 1, 128>}, {pipeline_mode = #tpu.pipeline_mode<synchronous>, transform_indices = @transform_6, window_bounds = array<i64: 1, 1>}, {transform_indices = @transform_7, window_bounds = array<i64: 16, 1>}]} {
    %c0 = arith.constant 0 : index
    %c0_0 = arith.constant 0 : index
    %0 = vector.load %arg1[%c0, %c0_0] : memref<16x128xf32, #tpu.memory_space<vmem>>, vector<16x128xf32>
    %1 = arith.truncf %0 : vector<16x128xf32> to vector<16x128xbf16>
    %c0_1 = arith.constant 0 : index
    %c0_2 = arith.constant 0 : index
    %2 = vector.load %arg2[%c0_1, %c0_2] : memref<16x128xf32, #tpu.memory_space<vmem>>, vector<16x128xf32>
    %3 = arith.truncf %2 : vector<16x128xf32> to vector<16x128xbf16>
    %c0_3 = arith.constant 0 : index
    %c0_4 = arith.constant 0 : index
    %4 = vector.load %arg3[%c0_3, %c0_4] : memref<128x128xbf16, #tpu.memory_space<vmem>>, vector<128x128xbf16>
    %cst = arith.constant dense<0.000000e+00> : vector<16x128xf32>
    %5 = tpu.matmul %1, %4, %cst {dimension_numbers = #tpu.dot_dimension_numbers<[1], [0], [0], [1], [0, 0, 1, 1], [], []>} : vector<16x128xbf16>, vector<128x128xbf16>, vector<16x128xf32> -> vector<16x128xf32>
    %c0_5 = arith.constant 0 : index
    %c0_6 = arith.constant 0 : index
    %6 = vector.load %arg4[%c0_5, %c0_6] : memref<128x128xbf16, #tpu.memory_space<vmem>>, vector<128x128xbf16>
    %cst_7 = arith.constant dense<0.000000e+00> : vector<16x128xf32>
    %7 = tpu.matmul %3, %6, %cst_7 {dimension_numbers = #tpu.dot_dimension_numbers<[1], [0], [0], [1], [0, 0, 1, 1], [], []>} : vector<16x128xbf16>, vector<128x128xbf16>, vector<16x128xf32> -> vector<16x128xf32>
    %8 = arith.addf %5, %7 : vector<16x128xf32>
    %c0_8 = arith.constant 0 : index
    %c0_9 = arith.constant 0 : index
    %9 = vector.load %arg5[%c0_8, %c0_9] : memref<1x128xf32, #tpu.memory_space<vmem>>, vector<1x128xf32>
    %10 = vector.broadcast %9 : vector<1x128xf32> to vector<16x128xf32>
    %11 = arith.addf %8, %10 : vector<16x128xf32>
    %12 = arith.mulf %11, %11 : vector<16x128xf32>
    %13 = arith.mulf %11, %12 : vector<16x128xf32>
    %cst_10 = arith.constant 4.471500e-02 : f32
    %14 = vector.broadcast %cst_10 : f32 to vector<16x128xf32>
    %15 = arith.mulf %14, %13 : vector<16x128xf32>
    %16 = arith.addf %11, %15 : vector<16x128xf32>
    %cst_11 = arith.constant 0.797884583 : f32
    %17 = vector.broadcast %cst_11 : f32 to vector<16x128xf32>
    %18 = arith.mulf %17, %16 : vector<16x128xf32>
    %19 = math.tanh %18 : vector<16x128xf32>
    %cst_12 = arith.constant 1.000000e+00 : f32
    %20 = vector.broadcast %cst_12 : f32 to vector<16x128xf32>
    %21 = arith.addf %20, %19 : vector<16x128xf32>
    %cst_13 = arith.constant 5.000000e-01 : f32
    %22 = vector.broadcast %cst_13 : f32 to vector<16x128xf32>
    %23 = arith.mulf %22, %21 : vector<16x128xf32>
    %24 = arith.mulf %11, %23 : vector<16x128xf32>
    %c0_14 = arith.constant 0 : index
    %c0_15 = arith.constant 0 : index
    %25 = vector.load %arg6[%c0_14, %c0_15] : memref<1x128xf32, #tpu.memory_space<vmem>>, vector<1x128xf32>
    %26 = vector.broadcast %25 : vector<1x128xf32> to vector<16x128xf32>
    %27 = arith.mulf %24, %26 : vector<16x128xf32>
    %cst_16 = arith.constant dense<0.000000e+00> : vector<16xf32>
    %28 = vector.multi_reduction <add>, %27, %cst_16 [1] : vector<16x128xf32> to vector<16xf32>
    %29 = vector.shape_cast %28 : vector<16xf32> to vector<16x1xf32>
    %c0_17 = arith.constant 0 : index
    %c0_18 = arith.constant 0 : index
    %30 = vector.load %arg7[%c0_17, %c0_18] : memref<1x1xf32, #tpu.memory_space<vmem>>, vector<1x1xf32>
    %31 = vector.broadcast %30 : vector<1x1xf32> to vector<16x1xf32>
    %32 = arith.addf %29, %31 : vector<16x1xf32>
    %c0_19 = arith.constant 0 : index
    %c0_20 = arith.constant 0 : index
    %33 = vector.load %arg8[%c0_19, %c0_20] : memref<16x1xf32, #tpu.memory_space<vmem>>, vector<16x1xf32>
    tpu.vector_store %arg8[%c0_19, %c0_20], %32 {strides = array<i32>} : memref<16x1xf32, #tpu.memory_space<vmem>>, vector<16x1xf32>,
    return
  }
  func.func @transform_0(%arg0: i32) -> (i32, i32) {
    %c0_i32 = arith.constant 0 : i32
    %c0_i32_0 = arith.constant 0 : i32
    return %arg0, %c0_i32 : i32, i32
  }
  func.func @transform_1(%arg0: i32) -> (i32, i32) {
    %c0_i32 = arith.constant 0 : i32
    %c0_i32_0 = arith.constant 0 : i32
    return %arg0, %c0_i32 : i32, i32
  }
  func.func @transform_2(%arg0: i32) -> (i32, i32) {
    %c0_i32 = arith.constant 0 : i32
    %c0_i32_0 = arith.constant 0 : i32
    %c0_i32_1 = arith.constant 0 : i32
    return %c0_i32, %c0_i32_0 : i32, i32
  }
  func.func @transform_3(%arg0: i32) -> (i32, i32) {
    %c0_i32 = arith.constant 0 : i32
    %c0_i32_0 = arith.constant 0 : i32
    %c0_i32_1 = arith.constant 0 : i32
    return %c0_i32, %c0_i32_0 : i32, i32
  }
  func.func @transform_4(%arg0: i32) -> (i32, i32) {
    %c0_i32 = arith.constant 0 : i32
    %c0_i32_0 = arith.constant 0 : i32
    %c0_i32_1 = arith.constant 0 : i32
    return %c0_i32, %c0_i32_0 : i32, i32
  }
  func.func @transform_5(%arg0: i32) -> (i32, i32) {
    %c0_i32 = arith.constant 0 : i32
    %c0_i32_0 = arith.constant 0 : i32
    %c0_i32_1 = arith.constant 0 : i32
    return %c0_i32, %c0_i32_0 : i32, i32
  }
  func.func @transform_6(%arg0: i32) -> (i32, i32) {
    %c0_i32 = arith.constant 0 : i32
    %c0_i32_0 = arith.constant 0 : i32
    %c0_i32_1 = arith.constant 0 : i32
    return %c0_i32, %c0_i32_0 : i32, i32
  }
  func.func @transform_7(%arg0: i32) -> (i32, i32) {
    %c0_i32 = arith.constant 0 : i32
    %c0_i32_0 = arith.constant 0 : i32
    return %arg0, %c0_i32 : i32, i32
  }
}

module attributes {stable_mosaic.version = 11 : i64} {
  func.func @_decision_kernel(%arg0: i32, %arg1: memref<8x128xf32, #tpu.memory_space<vmem>>, %arg2: memref<8x128xf32, #tpu.memory_space<vmem>>, %arg3: memref<128x128xbf16, #tpu.memory_space<vmem>>, %arg4: memref<128x128xbf16, #tpu.memory_space<vmem>>, %arg5: memref<1x128xf32, #tpu.memory_space<vmem>>, %arg6: memref<1x128xf32, #tpu.memory_space<vmem>>, %arg7: memref<1x1xf32, #tpu.memory_space<vmem>>, %arg8: memref<8x1xf32, #tpu.memory_space<vmem>>) attributes {dimension_semantics = [#tpu.dimension_semantics<parallel>], iteration_bounds = array<i64: 1>, scalar_prefetch = 0 : i64, scratch_operands = 0 : i64, tpu.core_type = #tpu.core_type<tc>, window_params = [{transform_indices = @transform_0, window_bounds = array<i64: 8, 128>}, {transform_indices = @transform_1, window_bounds = array<i64: 8, 128>}, {pipeline_mode = #tpu.pipeline_mode<synchronous>, transform_indices = @transform_2, window_bounds = array<i64: 128, 128>}, {pipeline_mode = #tpu.pipeline_mode<synchronous>, transform_indices = @transform_3, window_bounds = array<i64: 128, 128>}, {pipeline_mode = #tpu.pipeline_mode<synchronous>, transform_indices = @transform_4, window_bounds = array<i64: 1, 128>}, {pipeline_mode = #tpu.pipeline_mode<synchronous>, transform_indices = @transform_5, window_bounds = array<i64: 1, 128>}, {pipeline_mode = #tpu.pipeline_mode<synchronous>, transform_indices = @transform_6, window_bounds = array<i64: 1, 1>}, {transform_indices = @transform_7, window_bounds = array<i64: 8, 1>}]} {
    %c0 = arith.constant 0 : index
    %c0_0 = arith.constant 0 : index
    %0 = vector.load %arg1[%c0, %c0_0] : memref<8x128xf32, #tpu.memory_space<vmem>>, vector<8x128xf32>
    %1 = arith.truncf %0 : vector<8x128xf32> to vector<8x128xbf16>
    %c0_1 = arith.constant 0 : index
    %c0_2 = arith.constant 0 : index
    %2 = vector.load %arg2[%c0_1, %c0_2] : memref<8x128xf32, #tpu.memory_space<vmem>>, vector<8x128xf32>
    %3 = arith.truncf %2 : vector<8x128xf32> to vector<8x128xbf16>
    %c0_3 = arith.constant 0 : index
    %c0_4 = arith.constant 0 : index
    %4 = vector.load %arg3[%c0_3, %c0_4] : memref<128x128xbf16, #tpu.memory_space<vmem>>, vector<128x128xbf16>
    %cst = arith.constant dense<0.000000e+00> : vector<8x128xf32>
    %5 = tpu.matmul %1, %4, %cst {dimension_numbers = #tpu.dot_dimension_numbers<[1], [0], [0], [1], [0, 0, 1, 1], [], []>} : vector<8x128xbf16>, vector<128x128xbf16>, vector<8x128xf32> -> vector<8x128xf32>
    %c0_5 = arith.constant 0 : index
    %c0_6 = arith.constant 0 : index
    %6 = vector.load %arg4[%c0_5, %c0_6] : memref<128x128xbf16, #tpu.memory_space<vmem>>, vector<128x128xbf16>
    %cst_7 = arith.constant dense<0.000000e+00> : vector<8x128xf32>
    %7 = tpu.matmul %3, %6, %cst_7 {dimension_numbers = #tpu.dot_dimension_numbers<[1], [0], [0], [1], [0, 0, 1, 1], [], []>} : vector<8x128xbf16>, vector<128x128xbf16>, vector<8x128xf32> -> vector<8x128xf32>
    %8 = arith.addf %5, %7 : vector<8x128xf32>
    %c0_8 = arith.constant 0 : index
    %c0_9 = arith.constant 0 : index
    %9 = vector.load %arg5[%c0_8, %c0_9] : memref<1x128xf32, #tpu.memory_space<vmem>>, vector<1x128xf32>
    %10 = vector.broadcast %9 : vector<1x128xf32> to vector<8x128xf32>
    %11 = arith.addf %8, %10 : vector<8x128xf32>
    %12 = arith.mulf %11, %11 : vector<8x128xf32>
    %13 = arith.mulf %11, %12 : vector<8x128xf32>
    %cst_10 = arith.constant 4.471500e-02 : f32
    %14 = vector.broadcast %cst_10 : f32 to vector<8x128xf32>
    %15 = arith.mulf %14, %13 : vector<8x128xf32>
    %16 = arith.addf %11, %15 : vector<8x128xf32>
    %cst_11 = arith.constant 0.797884583 : f32
    %17 = vector.broadcast %cst_11 : f32 to vector<8x128xf32>
    %18 = arith.mulf %17, %16 : vector<8x128xf32>
    %19 = math.tanh %18 : vector<8x128xf32>
    %cst_12 = arith.constant 1.000000e+00 : f32
    %20 = vector.broadcast %cst_12 : f32 to vector<8x128xf32>
    %21 = arith.addf %20, %19 : vector<8x128xf32>
    %cst_13 = arith.constant 5.000000e-01 : f32
    %22 = vector.broadcast %cst_13 : f32 to vector<8x128xf32>
    %23 = arith.mulf %22, %21 : vector<8x128xf32>
    %24 = arith.mulf %11, %23 : vector<8x128xf32>
    %c0_14 = arith.constant 0 : index
    %c0_15 = arith.constant 0 : index
    %25 = vector.load %arg6[%c0_14, %c0_15] : memref<1x128xf32, #tpu.memory_space<vmem>>, vector<1x128xf32>
    %26 = vector.broadcast %25 : vector<1x128xf32> to vector<8x128xf32>
    %27 = arith.mulf %24, %26 : vector<8x128xf32>
    %cst_16 = arith.constant dense<0.000000e+00> : vector<8xf32>
    %28 = vector.multi_reduction <add>, %27, %cst_16 [1] : vector<8x128xf32> to vector<8xf32>
    %29 = vector.shape_cast %28 : vector<8xf32> to vector<8x1xf32>
    %c0_17 = arith.constant 0 : index
    %c0_18 = arith.constant 0 : index
    %30 = vector.load %arg7[%c0_17, %c0_18] : memref<1x1xf32, #tpu.memory_space<vmem>>, vector<1x1xf32>
    %31 = vector.broadcast %30 : vector<1x1xf32> to vector<8x1xf32>
    %32 = arith.addf %29, %31 : vector<8x1xf32>
    %c0_19 = arith.constant 0 : index
    %c0_20 = arith.constant 0 : index
    %33 = vector.load %arg8[%c0_19, %c0_20] : memref<8x1xf32, #tpu.memory_space<vmem>>, vector<8x1xf32>
    tpu.vector_store %arg8[%c0_19, %c0_20], %32 {strides = array<i32>} : memref<8x1xf32, #tpu.memory_space<vmem>>, vector<8x1xf32>,
    return
  }
  func.func @transform_0(%arg0: i32) -> (i32, i32) {
    %c0_i32 = arith.constant 0 : i32
    %c0_i32_0 = arith.constant 0 : i32
    return %arg0, %c0_i32 : i32, i32
  }
  func.func @transform_1(%arg0: i32) -> (i32, i32) {
    %c0_i32 = arith.constant 0 : i32
    %c0_i32_0 = arith.constant 0 : i32
    return %arg0, %c0_i32 : i32, i32
  }
  func.func @transform_2(%arg0: i32) -> (i32, i32) {
    %c0_i32 = arith.constant 0 : i32
    %c0_i32_0 = arith.constant 0 : i32
    %c0_i32_1 = arith.constant 0 : i32
    return %c0_i32, %c0_i32_0 : i32, i32
  }
  func.func @transform_3(%arg0: i32) -> (i32, i32) {
    %c0_i32 = arith.constant 0 : i32
    %c0_i32_0 = arith.constant 0 : i32
    %c0_i32_1 = arith.constant 0 : i32
    return %c0_i32, %c0_i32_0 : i32, i32
  }
  func.func @transform_4(%arg0: i32) -> (i32, i32) {
    %c0_i32 = arith.constant 0 : i32
    %c0_i32_0 = arith.constant 0 : i32
    %c0_i32_1 = arith.constant 0 : i32
    return %c0_i32, %c0_i32_0 : i32, i32
  }
  func.func @transform_5(%arg0: i32) -> (i32, i32) {
    %c0_i32 = arith.constant 0 : i32
    %c0_i32_0 = arith.constant 0 : i32
    %c0_i32_1 = arith.constant 0 : i32
    return %c0_i32, %c0_i32_0 : i32, i32
  }
  func.func @transform_6(%arg0: i32) -> (i32, i32) {
    %c0_i32 = arith.constant 0 : i32
    %c0_i32_0 = arith.constant 0 : i32
    %c0_i32_1 = arith.constant 0 : i32
    return %c0_i32, %c0_i32_0 : i32, i32
  }
  func.func @transform_7(%arg0: i32) -> (i32, i32) {
    %c0_i32 = arith.constant 0 : i32
    %c0_i32_0 = arith.constant 0 : i32
    return %arg0, %c0_i32 : i32, i32
  }
}

</mosaic_0001>

<llo_original>
// kernel: squeeze.19
$region0: #{squeeze.19}
  %s0 = inlined_call_operand.vmem [shape: f32[14], index: 0, kind: input, shape index: {}]
  %s1 = inlined_call_operand.vmem [shape: f32[2,7], index: 1, kind: output, shape index: {}]
  $region1: #{squeeze.19} parent=0
    #allocation0 [shape = 'u8[4096]{0}', space=vmem, size = 0x1000, scoped, tag = 'scoped mem for output reshape']
    #allocation1 [shape = 'u8[4096]{0}', space=vmem, size = 0x1000, scoped, tag = 'scoped mem for input reshape']
    %s3 = sshll.u32 1, 1
    %s4 = ssub.s32 %s3, 1
    %v5 = vld [vmem:[%s0] sm:%s4]
    %6 = vst [vmem:[#allocation1] sm:%s4] %v5
    %v7 = vld [vmem:[#allocation1] sm:$0x1]
    %vm8 = vcmask 56320
    %9 = vst.msk [vmem:[#allocation0] sm:$0x1] %vm8, %v7
    %v10 = vld [vmem:[#allocation1] sm:$0x1]
    %11 = vrot.lane.b32.xlu0 %v10, 121
    %v12 = vpop.permute.xlu0 %11
    %vm13 = vcmask 56320
    %s14 = scalar_lea.vmem [#allocation0], 1
    %15 = vst.msk [vmem:[%s14] sm:$0x1] %vm13, %v12
    %s17 = sshll.u32 1, 2
    %s18 = ssub.s32 %s17, 1
    %v20 = vld [vmem:[#allocation0] sm:%s18]
    %s21 = sshll.u32 1, 2
    %s22 = ssub.s32 %s21, 1
    %23 = vst [vmem:[%s1] sm:%s22] %v20

// kernel: fwd.14
$region0: #{fwd.14}
  #allocation0 [shape = 'u32[]', space=smem, size = 0x4, offset = 0x4, fixed_abs, tag = 'smem constant byte address 0x4 - core index']
  #allocation1 [shape = 'u32[144,128]{1,0:T(1,128)}', space=vmem, size = 0x12000, scoped, tag = 'internal scratch']
  %s0 = inlined_call_operand.hbm [shape: f32[16,128], index: 0, kind: input, shape index: {}]
  %s1 = inlined_call_operand.hbm [shape: bf16[128,128], index: 1, kind: input, shape index: {}]
  %s2 = inlined_call_operand.hbm [shape: f32[1,128], index: 2, kind: input, shape index: {}]
  %s3 = inlined_call_operand.hbm [shape: f32[1,128], index: 3, kind: input, shape index: {}]
  %s4 = inlined_call_operand.hbm [shape: f32[1,128], index: 4, kind: input, shape index: {}]
  %s5 = inlined_call_operand.vmem [shape: f32[16,128], index: 5, kind: output, shape index: {}]
  %s6 = sld [smem:[#allocation0]]
  $region50: #{fwd.14} parent=0
    _
  %s8 = ssub.s32 1, %s6
  %s9 = scalar_select 0, %s8, %s6
  $region1: #{fwd.14} parent=0
    #allocation2 [shape = 'u8[8192]{0}', space=vmem, size = 0x2000, scoped, tag = 'input window, operand 0, single buffered']
    #allocation3 [shape = 's32[1]{0}', space=sflag, size = 0x4, scoped, tag = 'scoped memory for fwd.14']
    #allocation4 [shape = 'u8[32768]{0}', space=vmem, size = 0x8000, scoped, tag = 'input window, operand 1, single buffered']
    #allocation5 [shape = 's32[1]{0}', space=sflag, size = 0x4, scoped, tag = 'scoped memory for fwd.14']
    #allocation6 [shape = 'u8[512]{0}', space=vmem, size = 0x400, scoped, tag = 'input window, operand 2, single buffered']
    #allocation7 [shape = 'u8[512]{0}', space=vmem, size = 0x400, scoped, tag = 'input window, operand 3, single buffered']
    #allocation8 [shape = 's32[1]{0}', space=sflag, size = 0x4, scoped, tag = 'scoped memory for fwd.14']
    #allocation9 [shape = 'u8[512]{0}', space=vmem, size = 0x400, scoped, tag = 'input window, operand 4, single buffered']
    %10 = vsyncpa [#allocation3], 0
    %11 = vsyncpa [#allocation5], 0
    %12 = vsyncpa [#allocation8], 0
    // Predicated region
    $region2: #{fwd.14} parent=1 // pred_check
      _
    $region3: #{fwd.14} parent=1 // pred_check_branch
      %14 = sbr.rel (0) target = $region5
    $region4: #{fwd.14} parent=1 // pred_region
      %s16 = ssub.s32 256, 256
      %17 = vsyncadd [#allocation3], %s16
      %s18 = sshll.u32 [#allocation2], 4
      %s19 = int_to_ptr.vmem [resolvable:$true] %s18
      %24 = dma.hbm_to_vmem [thread:$0]  %s0, 256, %s19, [#allocation3], 128, 128, 8
    $region5: #{fwd.14} parent=1 // pred_fallthru
      _
    // Predicated region
    $region6: #{fwd.14} parent=1 // pred_check
      _
    $region7: #{fwd.14} parent=1 // pred_check_branch
      %26 = sbr.rel (0) target = $region9
    $region8: #{fwd.14} parent=1 // pred_region
      %s28 = ssub.s32 1024, 1024
      %29 = vsyncadd [#allocation5], %s28
      %s30 = sshll.u32 [#allocation4], 4
      %s31 = int_to_ptr.vmem [resolvable:$true] %s30
      %36 = dma.hbm_to_vmem [thread:$0]  %s1, 1024, %s31, [#allocation5], 64, 64, 4
    $region9: #{fwd.14} parent=1 // pred_fallthru
      _
    // Predicated region
    $region10: #{fwd.14} parent=1 // pred_check
      _
    $region11: #{fwd.14} parent=1 // pred_check_branch
      %38 = sbr.rel (0) target = $region13
    $region12: #{fwd.14} parent=1 // pred_region
      %s40 = ssub.s32 16, 16
      %41 = vsyncadd [#allocation5], %s40
      %s43 = sshll.u32 [#allocation6], 4
      %s44 = int_to_ptr.vmem [resolvable:$true] %s43
      %46 = dma.hbm_to_vmem [thread:$0]  %s2, 16, %s44, [#allocation5]
    $region13: #{fwd.14} parent=1 // pred_fallthru
      _
    // Predicated region
    $region14: #{fwd.14} parent=1 // pred_check
      _
    $region15: #{fwd.14} parent=1 // pred_check_branch
      %48 = sbr.rel (0) target = $region17
    $region16: #{fwd.14} parent=1 // pred_region
      %s50 = ssub.s32 16, 16
      %51 = vsyncadd [#allocation8], %s50
      %s53 = sshll.u32 [#allocation7], 4
      %s54 = int_to_ptr.vmem [resolvable:$true] %s53
      %56 = dma.hbm_to_vmem [thread:$0]  %s3, 16, %s54, [#allocation8]
    $region17: #{fwd.14} parent=1 // pred_fallthru
      _
    // Predicated region
    $region18: #{fwd.14} parent=1 // pred_check
      _
    $region19: #{fwd.14} parent=1 // pred_check_branch
      %58 = sbr.rel (0) target = $region21
    $region20: #{fwd.14} parent=1 // pred_region
      %s60 = ssub.s32 16, 16
      %61 = vsyncadd [#allocation8], %s60
      %s63 = sshll.u32 [#allocation9], 4
      %s64 = int_to_ptr.vmem [resolvable:$true] %s63
      %66 = dma.hbm_to_vmem [thread:$0]  %s4, 16, %s64, [#allocation8]
    $region21: #{fwd.14} parent=1 // pred_fallthru
      _
    // Predicated region
    $region22: #{fwd.14} parent=1 // pred_check
      _
    $region23: #{fwd.14} parent=1 // pred_check_branch
      %68 = sbr.rel (0) target = $region25
    $region24: #{fwd.14} parent=1 // pred_region
      %69 = dma.done [#allocation3], 256
    $region25: #{fwd.14} parent=1 // pred_fallthru
      _
    // Predicated region
    $region26: #{fwd.14} parent=1 // pred_check
      _
    $region27: #{fwd.14} parent=1 // pred_check_branch
      %71 = sbr.rel (0) target = $region29
    $region28: #{fwd.14} parent=1 // pred_region
      %72 = dma.done [#allocation5], 1024
    $region29: #{fwd.14} parent=1 // pred_fallthru
      _
    // Predicated region
    $region30: #{fwd.14} parent=1 // pred_check
      _
    $region31: #{fwd.14} parent=1 // pred_check_branch
      %74 = sbr.rel (0) target = $region33
    $region32: #{fwd.14} parent=1 // pred_region
      %75 = dma.done [#allocation5], 16
    $region33: #{fwd.14} parent=1 // pred_fallthru
      _
    // Predicated region
    $region34: #{fwd.14} parent=1 // pred_check
      _
    $region35: #{fwd.14} parent=1 // pred_check_branch
      %77 = sbr.rel (0) target = $region37
    $region36: #{fwd.14} parent=1 // pred_region
      %78 = dma.done [#allocation8], 16
    $region37: #{fwd.14} parent=1 // pred_fallthru
      _
    // Predicated region
    $region38: #{fwd.14} parent=1 // pred_check
      _
    $region39: #{fwd.14} parent=1 // pred_check_branch
      %80 = sbr.rel (0) target = $region41
    $region40: #{fwd.14} parent=1 // pred_region
      %81 = dma.done [#allocation8], 16
    $region41: #{fwd.14} parent=1 // pred_fallthru
      _
    %v83 = vld [vmem:[#allocation2] sm:$0xff]
    %v84 = vld [vmem:[#allocation2 + $0x8] sm:$0xff]
    %v85 = vpack.c.bf16 %v84, %v83
    %v86 = vld [vmem:[#allocation4] sm:$0xf]
    %v87 = vld [vmem:[#allocation4 + $0x4] sm:$0xf]
    %v88 = vld [vmem:[#allocation4 + $0x8] sm:$0xf]
    %v89 = vld [vmem:[#allocation4 + $0xc] sm:$0xf]
    %v90 = vld [vmem:[#allocation4 + $0x10] sm:$0xf]
    %v91 = vld [vmem:[#allocation4 + $0x14] sm:$0xf]
    %v92 = vld [vmem:[#allocation4 + $0x18] sm:$0xf]
    %v93 = vld [vmem:[#allocation4 + $0x1c] sm:$0xf]
    %v94 = vld [vmem:[#allocation4 + $0x20] sm:$0xf]
    %v95 = vld [vmem:[#allocation4 + $0x24] sm:$0xf]
    %v96 = vld [vmem:[#allocation4 + $0x28] sm:$0xf]
    %v97 = vld [vmem:[#allocation4 + $0x2c] sm:$0xf]
    %v98 = vld [vmem:[#allocation4 + $0x30] sm:$0xf]
    %v99 = vld [vmem:[#allocation4 + $0x34] sm:$0xf]
    %v100 = vld [vmem:[#allocation4 + $0x38] sm:$0xf]
    %v101 = vld [vmem:[#allocation4 + $0x3c] sm:$0xf]
    %v102 = vld [vmem:[#allocation6] sm:$0x1]
    %v104 = vlaneseq
    %v105 = vshrl.u32 %v104, 7
    %v106 = vsub.s32 0, %v105
    %v107 = vrot.slane %v102, %v106
    %v125 = vunpack.c.l.b16 %v86
    %v126 = vunpack.c.l.b16 %v87
    %v127 = vunpack.c.l.b16 %v88
    %v128 = vunpack.c.l.b16 %v89
    %v129 = vunpack.c.l.b16 %v90
    %v130 = vunpack.c.l.b16 %v91
    %v131 = vunpack.c.l.b16 %v92
    %v132 = vunpack.c.l.b16 %v93
    %v133 = vunpack.c.l.b16 %v94
    %v134 = vunpack.c.l.b16 %v95
    %v135 = vunpack.c.l.b16 %v96
    %v136 = vunpack.c.l.b16 %v97
    %v137 = vunpack.c.l.b16 %v98
    %v138 = vunpack.c.l.b16 %v99
    %v139 = vunpack.c.l.b16 %v100
    %v140 = vunpack.c.l.b16 %v101
    %v141 = vpack.c.b16 %v126, %v125
    %v142 = vpack.c.b16 %v128, %v127
    %v143 = vpack.c.b16 %v130, %v129
    %v144 = vpack.c.b16 %v132, %v131
    %v145 = vpack.c.b16 %v134, %v133
    %v146 = vpack.c.b16 %v136, %v135
    %v147 = vpack.c.b16 %v138, %v137
    %v148 = vpack.c.b16 %v140, %v139
    %157 = vmatprep.subr.bf16.mxu0 0
    %158 = vmatpush1.bf16.msra.mxu0 %v148
    %159 = vmatprep.subr.bf16.mxu0 0
    %160 = vmatpush1.bf16.msra.mxu0 %v147
    %161 = vmatprep.subr.bf16.mxu0 0
    %162 = vmatpush1.bf16.msra.mxu0 %v146
    %163 = vmatprep.subr.bf16.mxu0 0
    %164 = vmatpush1.bf16.msra.mxu0 %v145
    %165 = vmatprep.subr.bf16.mxu0 0
    %166 = vmatpush1.bf16.msra.mxu0 %v144
    %167 = vmatprep.subr.bf16.mxu0 0
    %168 = vmatpush1.bf16.msra.mxu0 %v143
    %169 = vmatprep.subr.bf16.mxu0 0
    %170 = vmatpush1.bf16.msra.mxu0 %v142
    %171 = vmatprep.subr.bf16.mxu0 0
    %172 = vmatpush1.bf16.msra.mxu0 %v141
    %173 = vmatprep.subr.bf16.mxu0 0
    %174 = vmatpush2.bf16.msra.mxu0 0
    %175 = vmatprep.subr.bf16.mxu0 0
    %176 = vmatpush2.bf16.msra.mxu0 0
    %177 = vmatprep.subr.bf16.mxu0 0
    %178 = vmatpush2.bf16.msra.mxu0 0
    %179 = vmatprep.subr.bf16.mxu0 0
    %180 = vmatpush2.bf16.msra.mxu0 0
    %181 = vmatprep.subr.bf16.mxu0 0
    %182 = vmatpush2.bf16.msra.mxu0 0
    %183 = vmatprep.subr.bf16.mxu0 0
    %184 = vmatpush2.bf16.msra.mxu0 0
    %185 = vmatprep.subr.bf16.mxu0 0
    %186 = vmatpush2.bf16.msra.mxu0 0
    %187 = vmatprep.subr.bf16.mxu0 0
    %188 = vmatpush2.bf16.msra.mxu0 0
    %189 = vmatprep.mubr.bf16.mxu0 0
    %190 = vmatmul.mubr.bf16.gmra.mxu0 %v85
    %v191 = vpop.f32.mrf.mxu0
    %v192 = vadd.f32 %v107, %v191
    %v193 = vpop.f32.mrf.mxu0
    %v194 = vpop.f32.mrf.mxu0
    %v195 = vadd.f32 %v107, %v194
    %v196 = vpop.f32.mrf.mxu0
    %197 = vdwg.mxu0
    %198 = vadd.xlane.f32.xlu0 %v192
    %v199 = vpop.xlane.xlu0 %198
    %200 = vadd.xlane.f32.xlu0 %v195
    %v201 = vpop.xlane.xlu0 %200
    %v202 = vrcp.pop 128.0
    %v203 = vmul.f32 %v199, %v202
    %v204 = vmul.f32 %v201, %v202
    %v205 = vsub.f32 %v192, %v203
    %v206 = vsub.f32 %v195, %v204
    %v207 = vmul.f32 %v205, %v205
    %v208 = vmul.f32 %v206, %v206
    %209 = vadd.xlane.f32.xlu0 %v207
    %v210 = vpop.xlane.xlu0 %209
    %211 = vadd.xlane.f32.xlu0 %v208
    %v212 = vpop.xlane.xlu0 %211
    %v213 = vmul.f32 %v210, %v202
    %v214 = vmul.f32 %v212, %v202
    %v215 = vadd.f32 %v213, 1e-05
    %v216 = vadd.f32 %v214, 1e-05
    %v217 = vrsqrt.pop %v215
    %v218 = vrsqrt.pop %v216
    %v219 = vmul.f32 %v205, %v217
    %v220 = vmul.f32 %v206, %v218
    %v221 = vld [vmem:[#allocation7] sm:$0x1]
    %v223 = vlaneseq
    %v224 = vshrl.u32 %v223, 7
    %v225 = vsub.s32 0, %v224
    %v226 = vrot.slane %v221, %v225
    %v228 = vmul.f32 %v219, %v226
    %v229 = vmul.f32 %v220, %v226
    %v230 = vld [vmem:[#allocation9] sm:$0x1]
    %v232 = vlaneseq
    %v233 = vshrl.u32 %v232, 7
    %v234 = vsub.s32 0, %v233
    %v235 = vrot.slane %v230, %v234
    %v237 = vadd.f32 %v228, %v235
    %v238 = vadd.f32 %v229, %v235
    %239 = vst [vmem:[%s5] sm:$0xff] %v237
    %240 = vst [vmem:[%s5 + $0x8] sm:$0xff] %v238
    // Predicated region
    $region42: #{fwd.14} parent=1 // pred_check
      _
    $region43: #{fwd.14} parent=1 // pred_check_branch
      %242 = sbr.rel (0) target = $region45
    $region44: #{fwd.14} parent=1 // pred_region
      _
    $region45: #{fwd.14} parent=1 // pred_fallthru
      _
    // Predicated region
    $region46: #{fwd.14} parent=1 // pred_check
      _
    $region47: #{fwd.14} parent=1 // pred_check_branch
      %244 = sbr.rel (0) target = $region49
    $region48: #{fwd.14} parent=1 // pred_region
      _
    $region49: #{fwd.14} parent=1 // pred_fallthru
      _
    %245 = vsyncpa [#allocation3], 1
    %246 = vsyncpa [#allocation5], 1
    %247 = vsyncpa [#allocation8], 1

// kernel: fwd.15
$region0: #{fwd.15}
  #allocation0 [shape = 'u32[]', space=smem, size = 0x4, offset = 0x4, fixed_abs, tag = 'smem constant byte address 0x4 - core index']
  #allocation1 [shape = 'u32[144,128]{1,0:T(1,128)}', space=vmem, size = 0x12000, scoped, tag = 'internal scratch']
  #allocation2 [shape = 'f32[1,1]{1,0:T(1,128)S(1)}', space=vmem, size = 0x200, scoped, tag = 'scoped memory for fwd.15']
  %s0 = inlined_call_operand.vmem [shape: f32[16,128], index: 0, kind: input, shape index: {}]
  %s1 = inlined_call_operand.vmem [shape: f32[16,128], index: 1, kind: input, shape index: {}]
  %s2 = inlined_call_operand.hbm [shape: bf16[128,128], index: 2, kind: input, shape index: {}]
  %s3 = inlined_call_operand.hbm [shape: bf16[128,128], index: 3, kind: input, shape index: {}]
  %s4 = inlined_call_operand.hbm [shape: f32[1,128], index: 4, kind: input, shape index: {}]
  %s5 = inlined_call_operand.hbm [shape: f32[1,128], index: 5, kind: input, shape index: {}]
  %s6 = inlined_call_operand.<no memory space> [shape: f32[1,1], index: 6, kind: input, shape index: {}]
  %s7 = inlined_call_operand.vmem [shape: f32[16,1], index: 7, kind: output, shape index: {}]
  %s8 = sld [smem:[#allocation0]]
  $region54: #{fwd.15} parent=0
    _
  %s10 = ssub.s32 1, %s8
  %s11 = scalar_select 0, %s10, %s8
  %v12 = vstv %s6
  %13 = vst [vmem:[#allocation2] sm:$0x1] %v12
  $region1: #{fwd.15} parent=0
    #allocation3 [shape = 'u8[32768]{0}', space=vmem, size = 0x8000, scoped, tag = 'input window, operand 2, single buffered']
    #allocation4 [shape = 's32[1]{0}', space=sflag, size = 0x4, scoped, tag = 'scoped memory for fwd.15']
    #allocation5 [shape = 'u8[32768]{0}', space=vmem, size = 0x8000, scoped, tag = 'input window, operand 3, single buffered']
    #allocation6 [shape = 's32[1]{0}', space=sflag, size = 0x4, scoped, tag = 'scoped memory for fwd.15']
    #allocation7 [shape = 'u8[512]{0}', space=vmem, size = 0x400, scoped, tag = 'input window, operand 4, single buffered']
    #allocation8 [shape = 'u8[512]{0}', space=vmem, size = 0x400, scoped, tag = 'input window, operand 5, single buffered']
    #allocation9 [shape = 's32[1]{0}', space=sflag, size = 0x4, scoped, tag = 'scoped memory for fwd.15']
    %14 = vsyncpa [#allocation4], 0
    %15 = vsyncpa [#allocation6], 0
    %16 = vsyncpa [#allocation9], 0
    // Predicated region
    $region2: #{fwd.15} parent=1 // pred_check
      _
    $region3: #{fwd.15} parent=1 // pred_check_branch
      %18 = sbr.rel (0) target = $region5
    $region4: #{fwd.15} parent=1 // pred_region
      _
    $region5: #{fwd.15} parent=1 // pred_fallthru
      _
    // Predicated region
    $region6: #{fwd.15} parent=1 // pred_check
      _
    $region7: #{fwd.15} parent=1 // pred_check_branch
      %20 = sbr.rel (0) target = $region9
    $region8: #{fwd.15} parent=1 // pred_region
      _
    $region9: #{fwd.15} parent=1 // pred_fallthru
      _
    // Predicated region
    $region10: #{fwd.15} parent=1 // pred_check
      _
    $region11: #{fwd.15} parent=1 // pred_check_branch
      %22 = sbr.rel (0) target = $region13
    $region12: #{fwd.15} parent=1 // pred_region
      %s24 = ssub.s32 1024, 1024
      %25 = vsyncadd [#allocation4], %s24
      %s26 = sshll.u32 [#allocation3], 4
      %s27 = int_to_ptr.vmem [resolvable:$true] %s26
      %32 = dma.hbm_to_vmem [thread:$0]  %s2, 1024, %s27, [#allocation4], 64, 64, 4
    $region13: #{fwd.15} parent=1 // pred_fallthru
      _
    // Predicated region
    $region14: #{fwd.15} parent=1 // pred_check
      _
    $region15: #{fwd.15} parent=1 // pred_check_branch
      %34 = sbr.rel (0) target = $region17
    $region16: #{fwd.15} parent=1 // pred_region
      %s36 = ssub.s32 1024, 1024
      %37 = vsyncadd [#allocation6], %s36
      %s38 = sshll.u32 [#allocation5], 4
      %s39 = int_to_ptr.vmem [resolvable:$true] %s38
      %44 = dma.hbm_to_vmem [thread:$0]  %s3, 1024, %s39, [#allocation6], 64, 64, 4
    $region17: #{fwd.15} parent=1 // pred_fallthru
      _
    // Predicated region
    $region18: #{fwd.15} parent=1 // pred_check
      _
    $region19: #{fwd.15} parent=1 // pred_check_branch
      %46 = sbr.rel (0) target = $region21
    $region20: #{fwd.15} parent=1 // pred_region
      %s48 = ssub.s32 16, 16
      %49 = vsyncadd [#allocation6], %s48
      %s51 = sshll.u32 [#allocation7], 4
      %s52 = int_to_ptr.vmem [resolvable:$true] %s51
      %54 = dma.hbm_to_vmem [thread:$0]  %s4, 16, %s52, [#allocation6]
    $region21: #{fwd.15} parent=1 // pred_fallthru
      _
    // Predicated region
    $region22: #{fwd.15} parent=1 // pred_check
      _
    $region23: #{fwd.15} parent=1 // pred_check_branch
      %56 = sbr.rel (0) target = $region25
    $region24: #{fwd.15} parent=1 // pred_region
      %s58 = ssub.s32 16, 16
      %59 = vsyncadd [#allocation9], %s58
      %s61 = sshll.u32 [#allocation8], 4
      %s62 = int_to_ptr.vmem [resolvable:$true] %s61
      %64 = dma.hbm_to_vmem [thread:$0]  %s5, 16, %s62, [#allocation9]
    $region25: #{fwd.15} parent=1 // pred_fallthru
      _
    // Predicated region
    $region26: #{fwd.15} parent=1 // pred_check
      _
    $region27: #{fwd.15} parent=1 // pred_check_branch
      %66 = sbr.rel (0) target = $region29
    $region28: #{fwd.15} parent=1 // pred_region
      _
    $region29: #{fwd.15} parent=1 // pred_fallthru
      _
    // Predicated region
    $region30: #{fwd.15} parent=1 // pred_check
      _
    $region31: #{fwd.15} parent=1 // pred_check_branch
      %68 = sbr.rel (0) target = $region33
    $region32: #{fwd.15} parent=1 // pred_region
      %69 = dma.done [#allocation4], 1024
    $region33: #{fwd.15} parent=1 // pred_fallthru
      _
    // Predicated region
    $region34: #{fwd.15} parent=1 // pred_check
      _
    $region35: #{fwd.15} parent=1 // pred_check_branch
      %71 = sbr.rel (0) target = $region37
    $region36: #{fwd.15} parent=1 // pred_region
      %72 = dma.done [#allocation6], 1024
    $region37: #{fwd.15} parent=1 // pred_fallthru
      _
    // Predicated region
    $region38: #{fwd.15} parent=1 // pred_check
      _
    $region39: #{fwd.15} parent=1 // pred_check_branch
      %74 = sbr.rel (0) target = $region41
    $region40: #{fwd.15} parent=1 // pred_region
      %75 = dma.done [#allocation6], 16
    $region41: #{fwd.15} parent=1 // pred_fallthru
      _
    // Predicated region
    $region42: #{fwd.15} parent=1 // pred_check
      _
    $region43: #{fwd.15} parent=1 // pred_check_branch
      %77 = sbr.rel (0) target = $region45
    $region44: #{fwd.15} parent=1 // pred_region
      %78 = dma.done [#allocation9], 16
    $region45: #{fwd.15} parent=1 // pred_fallthru
      _
    %v80 = vld [vmem:[%s0] sm:$0xff]
    %v81 = vld [vmem:[%s0 + $0x8] sm:$0xff]
    %v82 = vpack.c.bf16 %v81, %v80
    %v83 = vld [vmem:[%s1] sm:$0xff]
    %v84 = vld [vmem:[%s1 + $0x8] sm:$0xff]
    %v85 = vpack.c.bf16 %v84, %v83
    %v86 = vld [vmem:[#allocation3] sm:$0xf]
    %v87 = vld [vmem:[#allocation3 + $0x4] sm:$0xf]
    %v88 = vld [vmem:[#allocation3 + $0x8] sm:$0xf]
    %v89 = vld [vmem:[#allocation3 + $0xc] sm:$0xf]
    %v90 = vld [vmem:[#allocation3 + $0x10] sm:$0xf]
    %v91 = vld [vmem:[#allocation3 + $0x14] sm:$0xf]
    %v92 = vld [vmem:[#allocation3 + $0x18] sm:$0xf]
    %v93 = vld [vmem:[#allocation3 + $0x1c] sm:$0xf]
    %v94 = vld [vmem:[#allocation3 + $0x20] sm:$0xf]
    %v95 = vld [vmem:[#allocation3 + $0x24] sm:$0xf]
    %v96 = vld [vmem:[#allocation3 + $0x28] sm:$0xf]
    %v97 = vld [vmem:[#allocation3 + $0x2c] sm:$0xf]
    %v98 = vld [vmem:[#allocation3 + $0x30] sm:$0xf]
    %v99 = vld [vmem:[#allocation3 + $0x34] sm:$0xf]
    %v100 = vld [vmem:[#allocation3 + $0x38] sm:$0xf]
    %v101 = vld [vmem:[#allocation3 + $0x3c] sm:$0xf]
    %v102 = vld [vmem:[#allocation5] sm:$0xf]
    %v103 = vld [vmem:[#allocation5 + $0x4] sm:$0xf]
    %v104 = vld [vmem:[#allocation5 + $0x8] sm:$0xf]
    %v105 = vld [vmem:[#allocation5 + $0xc] sm:$0xf]
    %v106 = vld [vmem:[#allocation5 + $0x10] sm:$0xf]
    %v107 = vld [vmem:[#allocation5 + $0x14] sm:$0xf]
    %v108 = vld [vmem:[#allocation5 + $0x18] sm:$0xf]
    %v109 = vld [vmem:[#allocation5 + $0x1c] sm:$0xf]
    %v110 = vld [vmem:[#allocation5 + $0x20] sm:$0xf]
    %v111 = vld [vmem:[#allocation5 + $0x24] sm:$0xf]
    %v112 = vld [vmem:[#allocation5 + $0x28] sm:$0xf]
    %v113 = vld [vmem:[#allocation5 + $0x2c] sm:$0xf]
    %v114 = vld [vmem:[#allocation5 + $0x30] sm:$0xf]
    %v115 = vld [vmem:[#allocation5 + $0x34] sm:$0xf]
    %v116 = vld [vmem:[#allocation5 + $0x38] sm:$0xf]
    %v117 = vld [vmem:[#allocation5 + $0x3c] sm:$0xf]
    %v134 = vunpack.c.l.b16 %v102
    %v135 = vunpack.c.l.b16 %v103
    %v136 = vunpack.c.l.b16 %v104
    %v137 = vunpack.c.l.b16 %v105
    %v138 = vunpack.c.l.b16 %v106
    %v139 = vunpack.c.l.b16 %v107
    %v140 = vunpack.c.l.b16 %v108
    %v141 = vunpack.c.l.b16 %v109
    %v142 = vunpack.c.l.b16 %v110
    %v143 = vunpack.c.l.b16 %v111
    %v144 = vunpack.c.l.b16 %v112
    %v145 = vunpack.c.l.b16 %v113
    %v146 = vunpack.c.l.b16 %v114
    %v147 = vunpack.c.l.b16 %v115
    %v148 = vunpack.c.l.b16 %v116
    %v149 = vunpack.c.l.b16 %v117
    %v150 = vpack.c.b16 %v135, %v134
    %v151 = vpack.c.b16 %v137, %v136
    %v152 = vpack.c.b16 %v139, %v138
    %v153 = vpack.c.b16 %v141, %v140
    %v154 = vpack.c.b16 %v143, %v142
    %v155 = vpack.c.b16 %v145, %v144
    %v156 = vpack.c.b16 %v147, %v146
    %v157 = vpack.c.b16 %v149, %v148
    %166 = vmatprep.subr.bf16.mxu0 0
    %167 = vmatpush1.bf16.msra.mxu0 %v157
    %168 = vmatprep.subr.bf16.mxu0 0
    %169 = vmatpush1.bf16.msra.mxu0 %v156
    %170 = vmatprep.subr.bf16.mxu0 0
    %171 = vmatpush1.bf16.msra.mxu0 %v155
    %172 = vmatprep.subr.bf16.mxu0 0
    %173 = vmatpush1.bf16.msra.mxu0 %v154
    %174 = vmatprep.subr.bf16.mxu0 0
    %175 = vmatpush1.bf16.msra.mxu0 %v153
    %176 = vmatprep.subr.bf16.mxu0 0
    %177 = vmatpush1.bf16.msra.mxu0 %v152
    %178 = vmatprep.subr.bf16.mxu0 0
    %179 = vmatpush1.bf16.msra.mxu0 %v151
    %180 = vmatprep.subr.bf16.mxu0 0
    %181 = vmatpush1.bf16.msra.mxu0 %v150
    %182 = vmatprep.subr.bf16.mxu0 0
    %183 = vmatpush2.bf16.msra.mxu0 0
    %184 = vmatprep.subr.bf16.mxu0 0
    %185 = vmatpush2.bf16.msra.mxu0 0
    %186 = vmatprep.subr.bf16.mxu0 0
    %187 = vmatpush2.bf16.msra.mxu0 0
    %188 = vmatprep.subr.bf16.mxu0 0
    %189 = vmatpush2.bf16.msra.mxu0 0
    %190 = vmatprep.subr.bf16.mxu0 0
    %191 = vmatpush2.bf16.msra.mxu0 0
    %192 = vmatprep.subr.bf16.mxu0 0
    %193 = vmatpush2.bf16.msra.mxu0 0
    %194 = vmatprep.subr.bf16.mxu0 0
    %195 = vmatpush2.bf16.msra.mxu0 0
    %196 = vmatprep.subr.bf16.mxu0 0
    %197 = vmatpush2.bf16.msra.mxu0 0
    %198 = vmatprep.mubr.bf16.mxu0 0
    %199 = vmatmul.mubr.bf16.gmra.mxu0 %v85
    %v200 = vpop.f32.mrf.mxu0
    %v201 = vadd.f32 0.0, %v200
    %v202 = vpop.f32.mrf.mxu0
    %v203 = vpop.f32.mrf.mxu0
    %v204 = vadd.f32 0.0, %v203
    %v205 = vpop.f32.mrf.mxu0
    %206 = vdwg.mxu0
    %v223 = vunpack.c.l.b16 %v86
    %v224 = vunpack.c.l.b16 %v87
    %v225 = vunpack.c.l.b16 %v88
    %v226 = vunpack.c.l.b16 %v89
    %v227 = vunpack.c.l.b16 %v90
    %v228 = vunpack.c.l.b16 %v91
    %v229 = vunpack.c.l.b16 %v92
    %v230 = vunpack.c.l.b16 %v93
    %v231 = vunpack.c.l.b16 %v94
    %v232 = vunpack.c.l.b16 %v95
    %v233 = vunpack.c.l.b16 %v96
    %v234 = vunpack.c.l.b16 %v97
    %v235 = vunpack.c.l.b16 %v98
    %v236 = vunpack.c.l.b16 %v99
    %v237 = vunpack.c.l.b16 %v100
    %v238 = vunpack.c.l.b16 %v101
    %v239 = vpack.c.b16 %v224, %v223
    %v240 = vpack.c.b16 %v226, %v225
    %v241 = vpack.c.b16 %v228, %v227
    %v242 = vpack.c.b16 %v230, %v229
    %v243 = vpack.c.b16 %v232, %v231
    %v244 = vpack.c.b16 %v234, %v233
    %v245 = vpack.c.b16 %v236, %v235
    %v246 = vpack.c.b16 %v238, %v237
    %255 = vmatprep.subr.bf16.mxu0 0
    %256 = vmatpush1.bf16.msra.mxu0 %v246
    %257 = vmatprep.subr.bf16.mxu0 0
    %258 = vmatpush1.bf16.msra.mxu0 %v245
    %259 = vmatprep.subr.bf16.mxu0 0
    %260 = vmatpush1.bf16.msra.mxu0 %v244
    %261 = vmatprep.subr.bf16.mxu0 0
    %262 = vmatpush1.bf16.msra.mxu0 %v243
    %263 = vmatprep.subr.bf16.mxu0 0
    %264 = vmatpush1.bf16.msra.mxu0 %v242
    %265 = vmatprep.subr.bf16.mxu0 0
    %266 = vmatpush1.bf16.msra.mxu0 %v241
    %267 = vmatprep.subr.bf16.mxu0 0
    %268 = vmatpush1.bf16.msra.mxu0 %v240
    %269 = vmatprep.subr.bf16.mxu0 0
    %270 = vmatpush1.bf16.msra.mxu0 %v239
    %271 = vmatprep.subr.bf16.mxu0 0
    %272 = vmatpush2.bf16.msra.mxu0 0
    %273 = vmatprep.subr.bf16.mxu0 0
    %274 = vmatpush2.bf16.msra.mxu0 0
    %275 = vmatprep.subr.bf16.mxu0 0
    %276 = vmatpush2.bf16.msra.mxu0 0
    %277 = vmatprep.subr.bf16.mxu0 0
    %278 = vmatpush2.bf16.msra.mxu0 0
    %279 = vmatprep.subr.bf16.mxu0 0
    %280 = vmatpush2.bf16.msra.mxu0 0
    %281 = vmatprep.subr.bf16.mxu0 0
    %282 = vmatpush2.bf16.msra.mxu0 0
    %283 = vmatprep.subr.bf16.mxu0 0
    %284 = vmatpush2.bf16.msra.mxu0 0
    %285 = vmatprep.subr.bf16.mxu0 0
    %286 = vmatpush2.bf16.msra.mxu0 0
    %287 = vmatprep.mubr.bf16.mxu0 0
    %288 = vmatmul.mubr.bf16.gmra.mxu0 %v82
    %v289 = vpop.f32.mrf.mxu0
    %v290 = vadd.f32 %v201, %v289
    %v291 = vpop.f32.mrf.mxu0
    %v292 = vpop.f32.mrf.mxu0
    %v293 = vadd.f32 %v204, %v292
    %v294 = vpop.f32.mrf.mxu0
    %295 = vdwg.mxu0
    %v296 = vld [vmem:[#allocation7] sm:$0x1]
    %v298 = vlaneseq
    %v299 = vshrl.u32 %v298, 7
    %v300 = vsub.s32 0, %v299
    %v301 = vrot.slane %v296, %v300
    %v303 = vadd.f32 %v290, %v301
    %v304 = vadd.f32 %v293, %v301
    %v305 = vmul.f32 %v303, %v303
    %v306 = vmul.f32 %v304, %v304
    %v307 = vmul.f32 %v303, %v305
    %v308 = vmul.f32 %v304, %v306
    %v309 = vmul.f32 %v307, 0.044715
    %v310 = vmul.f32 %v308, 0.044715
    %v311 = vadd.f32 %v303, %v309
    %v312 = vadd.f32 %v304, %v310
    %v313 = vmul.f32 %v311, 0.7978846
    %v314 = vmul.f32 %v312, 0.7978846
    %v315 = vtanh.pop %v313
    %v316 = vtanh.pop %v314
    %v317 = vadd.f32 %v315, 1.0
    %v318 = vadd.f32 %v316, 1.0
    %v319 = vmul.f32 %v317, 0.5
    %v320 = vmul.f32 %v318, 0.5
    %v321 = vmul.f32 %v303, %v319
    %v322 = vmul.f32 %v304, %v320
    %v323 = vld [vmem:[#allocation8] sm:$0x1]
    %v325 = vlaneseq
    %v326 = vshrl.u32 %v325, 7
    %v327 = vsub.s32 0, %v326
    %v328 = vrot.slane %v323, %v327
    %v330 = vmul.f32 %v321, %v328
    %v331 = vmul.f32 %v322, %v328
    %332 = vadd.xlane.f32.xlu0 %v330
    %v333 = vpop.xlane.xlu0 %332
    %334 = vadd.xlane.f32.xlu0 %v331
    %v335 = vpop.xlane.xlu0 %334
    %v336 = vld [vmem:[#allocation2] sm:$0x1]
    %v338 = vlaneseq
    %v339 = vshrl.u32 %v338, 7
    %v340 = vsub.s32 0, %v339
    %v341 = vrot.slane %v336, %v340
    %v343 = vadd.f32 %v333, %v341
    %v344 = vadd.f32 %v335, %v341
    %vm345 = vcmask 7168
    %346 = vst.msk [vmem:[%s7] sm:$0xff] %vm345, %v343
    %347 = vst.msk [vmem:[%s7 + $0x8] sm:$0xff] %vm345, %v344
    // Predicated region
    $region46: #{fwd.15} parent=1 // pred_check
      _
    $region47: #{fwd.15} parent=1 // pred_check_branch
      %349 = sbr.rel (0) target = $region49
    $region48: #{fwd.15} parent=1 // pred_region
      _
    $region49: #{fwd.15} parent=1 // pred_fallthru
      _
    // Predicated region
    $region50: #{fwd.15} parent=1 // pred_check
      _
    $region51: #{fwd.15} parent=1 // pred_check_branch
      %351 = sbr.rel (0) target = $region53
    $region52: #{fwd.15} parent=1 // pred_region
      _
    $region53: #{fwd.15} parent=1 // pred_fallthru
      _
    %352 = vsyncpa [#allocation4], 1
    %353 = vsyncpa [#allocation6], 1
    %354 = vsyncpa [#allocation9], 1

// kernel: squeeze.22
$region0: #{squeeze.22}
  %s0 = inlined_call_operand.vmem [shape: f32[24], index: 0, kind: input, shape index: {}]
  %s1 = inlined_call_operand.vmem [shape: f32[4,6], index: 1, kind: output, shape index: {}]
  $region1: #{squeeze.22} parent=0
    #allocation0 [shape = 'u8[4096]{0}', space=vmem, size = 0x1000, scoped, tag = 'scoped mem for output reshape']
    #allocation1 [shape = 'u8[4096]{0}', space=vmem, size = 0x1000, scoped, tag = 'scoped mem for input reshape']
    %s3 = sshll.u32 1, 1
    %s4 = ssub.s32 %s3, 1
    %v5 = vld [vmem:[%s0] sm:%s4]
    %6 = vst [vmem:[#allocation1] sm:%s4] %v5
    %v7 = vld [vmem:[#allocation1] sm:$0x1]
    %vm8 = vcmask 48128
    %9 = vst.msk [vmem:[#allocation0] sm:$0x1] %vm8, %v7
    %v10 = vld [vmem:[#allocation1] sm:$0x1]
    %11 = vrot.lane.b32.xlu0 %v10, 122
    %v12 = vpop.permute.xlu0 %11
    %vm13 = vcmask 48128
    %s14 = scalar_lea.vmem [#allocation0], 1
    %15 = vst.msk [vmem:[%s14] sm:$0x1] %vm13, %v12
    %v16 = vld [vmem:[#allocation1] sm:$0x1]
    %17 = vrot.lane.b32.xlu0 %v16, 116
    %v18 = vpop.permute.xlu0 %17
    %vm19 = vcmask 48128
    %s20 = scalar_lea.vmem [#allocation0], 2
    %21 = vst.msk [vmem:[%s20] sm:$0x1] %vm19, %v18
    %v22 = vld [vmem:[#allocation1] sm:$0x1]
    %23 = vrot.lane.b32.xlu0 %v22, 110
    %v24 = vpop.permute.xlu0 %23
    %vm25 = vcmask 48128
    %s26 = scalar_lea.vmem [#allocation0], 3
    %27 = vst.msk [vmem:[%s26] sm:$0x1] %vm25, %v24
    %s29 = sshll.u32 1, 4
    %s30 = ssub.s32 %s29, 1
    %v32 = vld [vmem:[#allocation0] sm:%s30]
    %s33 = sshll.u32 1, 4
    %s34 = ssub.s32 %s33, 1
    %35 = vst [vmem:[%s1] sm:%s34] %v32

// kernel: fwd.17
$region0: #{fwd.17}
  #allocation0 [shape = 'u32[]', space=smem, size = 0x4, offset = 0x4, fixed_abs, tag = 'smem constant byte address 0x4 - core index']
  #allocation1 [shape = 'u32[144,128]{1,0:T(1,128)}', space=vmem, size = 0x12000, scoped, tag = 'internal scratch']
  #allocation2 [shape = 'f32[1,1]{1,0:T(1,128)S(1)}', space=vmem, size = 0x200, scoped, tag = 'scoped memory for fwd.17']
  %s0 = inlined_call_operand.vmem [shape: f32[24,128], index: 0, kind: input, shape index: {}]
  %s1 = inlined_call_operand.vmem [shape: f32[24,128], index: 1, kind: input, shape index: {}]
  %s2 = inlined_call_operand.vmem [shape: bf16[128,128], index: 2, kind: input, shape index: {}]
  %s3 = inlined_call_operand.vmem [shape: bf16[128,128], index: 3, kind: input, shape index: {}]
  %s4 = inlined_call_operand.vmem [shape: f32[1,128], index: 4, kind: input, shape index: {}]
  %s5 = inlined_call_operand.vmem [shape: f32[1,128], index: 5, kind: input, shape index: {}]
  %s6 = inlined_call_operand.<no memory space> [shape: f32[1,1], index: 6, kind: input, shape index: {}]
  %s7 = inlined_call_operand.vmem [shape: f32[24,1], index: 7, kind: output, shape index: {}]
  %s8 = sld [smem:[#allocation0]]
  $region38: #{fwd.17} parent=0
    _
  %s10 = ssub.s32 1, %s8
  %s11 = scalar_select 0, %s10, %s8
  %v12 = vstv %s6
  %13 = vst [vmem:[#allocation2] sm:$0x1] %v12
  // Predicated region
  $region2: #{fwd.17} parent=0 // pred_check
    _
  $region3: #{fwd.17} parent=0 // pred_check_branch
    %15 = sbr.rel (0) target = $region5
  $region4: #{fwd.17} parent=0 // pred_region
    _
  $region5: #{fwd.17} parent=0 // pred_fallthru
    _
  // Predicated region
  $region6: #{fwd.17} parent=0 // pred_check
    _
  $region7: #{fwd.17} parent=0 // pred_check_branch
    %17 = sbr.rel (0) target = $region9
  $region8: #{fwd.17} parent=0 // pred_region
    _
  $region9: #{fwd.17} parent=0 // pred_fallthru
    _
  // Predicated region
  $region10: #{fwd.17} parent=0 // pred_check
    _
  $region11: #{fwd.17} parent=0 // pred_check_branch
    %19 = sbr.rel (0) target = $region13
  $region12: #{fwd.17} parent=0 // pred_region
    _
  $region13: #{fwd.17} parent=0 // pred_fallthru
    _
  // Predicated region
  $region14: #{fwd.17} parent=0 // pred_check
    _
  $region15: #{fwd.17} parent=0 // pred_check_branch
    %21 = sbr.rel (0) target = $region17
  $region16: #{fwd.17} parent=0 // pred_region
    _
  $region17: #{fwd.17} parent=0 // pred_fallthru
    _
  // Predicated region
  $region18: #{fwd.17} parent=0 // pred_check
    _
  $region19: #{fwd.17} parent=0 // pred_check_branch
    %23 = sbr.rel (0) target = $region21
  $region20: #{fwd.17} parent=0 // pred_region
    _
  $region21: #{fwd.17} parent=0 // pred_fallthru
    _
  // Predicated region
  $region22: #{fwd.17} parent=0 // pred_check
    _
  $region23: #{fwd.17} parent=0 // pred_check_branch
    %25 = sbr.rel (0) target = $region25
  $region24: #{fwd.17} parent=0 // pred_region
    _
  $region25: #{fwd.17} parent=0 // pred_fallthru
    _
  // Predicated region
  $region26: #{fwd.17} parent=0 // pred_check
    _
  $region27: #{fwd.17} parent=0 // pred_check_branch
    %27 = sbr.rel (0) target = $region29
  $region28: #{fwd.17} parent=0 // pred_region
    _
  $region29: #{fwd.17} parent=0 // pred_fallthru
    _
  %v29 = vld [vmem:[%s0] sm:$0xff]
  %v30 = vld [vmem:[%s0 + $0x8] sm:$0xff]
  %v31 = vld [vmem:[%s0 + $0x10] sm:$0xff]
  %v32 = vpack.c.bf16 %v30, %v29
  %v33 = vpack.c.bf16 %v31, %v31
  %v34 = vld [vmem:[%s1] sm:$0xff]
  %v35 = vld [vmem:[%s1 + $0x8] sm:$0xff]
  %v36 = vld [vmem:[%s1 + $0x10] sm:$0xff]
  %v37 = vpack.c.bf16 %v35, %v34
  %v38 = vpack.c.bf16 %v36, %v36
  %v39 = vld [vmem:[%s2] sm:$0xf]
  %v40 = vld [vmem:[%s2 + $0x4] sm:$0xf]
  %v41 = vld [vmem:[%s2 + $0x8] sm:$0xf]
  %v42 = vld [vmem:[%s2 + $0xc] sm:$0xf]
  %v43 = vld [vmem:[%s2 + $0x10] sm:$0xf]
  %v44 = vld [vmem:[%s2 + $0x14] sm:$0xf]
  %v45 = vld [vmem:[%s2 + $0x18] sm:$0xf]
  %v46 = vld [vmem:[%s2 + $0x1c] sm:$0xf]
  %v47 = vld [vmem:[%s2 + $0x20] sm:$0xf]
  %v48 = vld [vmem:[%s2 + $0x24] sm:$0xf]
  %v49 = vld [vmem:[%s2 + $0x28] sm:$0xf]
  %v50 = vld [vmem:[%s2 + $0x2c] sm:$0xf]
  %v51 = vld [vmem:[%s2 + $0x30] sm:$0xf]
  %v52 = vld [vmem:[%s2 + $0x34] sm:$0xf]
  %v53 = vld [vmem:[%s2 + $0x38] sm:$0xf]
  %v54 = vld [vmem:[%s2 + $0x3c] sm:$0xf]
  %v55 = vld [vmem:[%s3] sm:$0xf]
  %v56 = vld [vmem:[%s3 + $0x4] sm:$0xf]
  %v57 = vld [vmem:[%s3 + $0x8] sm:$0xf]
  %v58 = vld [vmem:[%s3 + $0xc] sm:$0xf]
  %v59 = vld [vmem:[%s3 + $0x10] sm:$0xf]
  %v60 = vld [vmem:[%s3 + $0x14] sm:$0xf]
  %v61 = vld [vmem:[%s3 + $0x18] sm:$0xf]
  %v62 = vld [vmem:[%s3 + $0x1c] sm:$0xf]
  %v63 = vld [vmem:[%s3 + $0x20] sm:$0xf]
  %v64 = vld [vmem:[%s3 + $0x24] sm:$0xf]
  %v65 = vld [vmem:[%s3 + $0x28] sm:$0xf]
  %v66 = vld [vmem:[%s3 + $0x2c] sm:$0xf]
  %v67 = vld [vmem:[%s3 + $0x30] sm:$0xf]
  %v68 = vld [vmem:[%s3 + $0x34] sm:$0xf]
  %v69 = vld [vmem:[%s3 + $0x38] sm:$0xf]
  %v70 = vld [vmem:[%s3 + $0x3c] sm:$0xf]
  %v87 = vunpack.c.l.b16 %v55
  %v88 = vunpack.c.l.b16 %v56
  %v89 = vunpack.c.l.b16 %v57
  %v90 = vunpack.c.l.b16 %v58
  %v91 = vunpack.c.l.b16 %v59
  %v92 = vunpack.c.l.b16 %v60
  %v93 = vunpack.c.l.b16 %v61
  %v94 = vunpack.c.l.b16 %v62
  %v95 = vunpack.c.l.b16 %v63
  %v96 = vunpack.c.l.b16 %v64
  %v97 = vunpack.c.l.b16 %v65
  %v98 = vunpack.c.l.b16 %v66
  %v99 = vunpack.c.l.b16 %v67
  %v100 = vunpack.c.l.b16 %v68
  %v101 = vunpack.c.l.b16 %v69
  %v102 = vunpack.c.l.b16 %v70
  %v103 = vpack.c.b16 %v88, %v87
  %v104 = vpack.c.b16 %v90, %v89
  %v105 = vpack.c.b16 %v92, %v91
  %v106 = vpack.c.b16 %v94, %v93
  %v107 = vpack.c.b16 %v96, %v95
  %v108 = vpack.c.b16 %v98, %v97
  %v109 = vpack.c.b16 %v100, %v99
  %v110 = vpack.c.b16 %v102, %v101
  %119 = vmatprep.subr.bf16.mxu0 0
  %120 = vmatpush1.bf16.msra.mxu0 %v110
  %121 = vmatprep.subr.bf16.mxu0 0
  %122 = vmatpush1.bf16.msra.mxu0 %v109
  %123 = vmatprep.subr.bf16.mxu0 0
  %124 = vmatpush1.bf16.msra.mxu0 %v108
  %125 = vmatprep.subr.bf16.mxu0 0
  %126 = vmatpush1.bf16.msra.mxu0 %v107
  %127 = vmatprep.subr.bf16.mxu0 0
  %128 = vmatpush1.bf16.msra.mxu0 %v106
  %129 = vmatprep.subr.bf16.mxu0 0
  %130 = vmatpush1.bf16.msra.mxu0 %v105
  %131 = vmatprep.subr.bf16.mxu0 0
  %132 = vmatpush1.bf16.msra.mxu0 %v104
  %133 = vmatprep.subr.bf16.mxu0 0
  %134 = vmatpush1.bf16.msra.mxu0 %v103
  %135 = vmatprep.subr.bf16.mxu0 0
  %136 = vmatpush2.bf16.msra.mxu0 0
  %137 = vmatprep.subr.bf16.mxu0 0
  %138 = vmatpush2.bf16.msra.mxu0 0
  %139 = vmatprep.subr.bf16.mxu0 0
  %140 = vmatpush2.bf16.msra.mxu0 0
  %141 = vmatprep.subr.bf16.mxu0 0
  %142 = vmatpush2.bf16.msra.mxu0 0
  %143 = vmatprep.subr.bf16.mxu0 0
  %144 = vmatpush2.bf16.msra.mxu0 0
  %145 = vmatprep.subr.bf16.mxu0 0
  %146 = vmatpush2.bf16.msra.mxu0 0
  %147 = vmatprep.subr.bf16.mxu0 0
  %148 = vmatpush2.bf16.msra.mxu0 0
  %149 = vmatprep.subr.bf16.mxu0 0
  %150 = vmatpush2.bf16.msra.mxu0 0
  %151 = vmatprep.mubr.bf16.mxu0 0
  %152 = vmatmul.mubr.bf16.gmra.mxu0 %v37
  %v153 = vpop.f32.mrf.mxu0
  %v154 = vadd.f32 0.0, %v153
  %v155 = vpop.f32.mrf.mxu0
  %v156 = vpop.f32.mrf.mxu0
  %v157 = vadd.f32 0.0, %v156
  %v158 = vpop.f32.mrf.mxu0
  %159 = vmatprep.mubr.bf16.mxu0 0
  %160 = vmatmul.mubr.bf16.gmra.mxu0 %v38
  %v161 = vpop.f32.mrf.mxu0
  %v162 = vadd.f32 0.0, %v161
  %v163 = vpop.f32.mrf.mxu0
  %v164 = vpop.f32.mrf.mxu0
  %v165 = vpop.f32.mrf.mxu0
  %166 = vdwg.mxu0
  %v183 = vunpack.c.l.b16 %v39
  %v184 = vunpack.c.l.b16 %v40
  %v185 = vunpack.c.l.b16 %v41
  %v186 = vunpack.c.l.b16 %v42
  %v187 = vunpack.c.l.b16 %v43
  %v188 = vunpack.c.l.b16 %v44
  %v189 = vunpack.c.l.b16 %v45
  %v190 = vunpack.c.l.b16 %v46
  %v191 = vunpack.c.l.b16 %v47
  %v192 = vunpack.c.l.b16 %v48
  %v193 = vunpack.c.l.b16 %v49
  %v194 = vunpack.c.l.b16 %v50
  %v195 = vunpack.c.l.b16 %v51
  %v196 = vunpack.c.l.b16 %v52
  %v197 = vunpack.c.l.b16 %v53
  %v198 = vunpack.c.l.b16 %v54
  %v199 = vpack.c.b16 %v184, %v183
  %v200 = vpack.c.b16 %v186, %v185
  %v201 = vpack.c.b16 %v188, %v187
  %v202 = vpack.c.b16 %v190, %v189
  %v203 = vpack.c.b16 %v192, %v191
  %v204 = vpack.c.b16 %v194, %v193
  %v205 = vpack.c.b16 %v196, %v195
  %v206 = vpack.c.b16 %v198, %v197
  %215 = vmatprep.subr.bf16.mxu0 0
  %216 = vmatpush1.bf16.msra.mxu0 %v206
  %217 = vmatprep.subr.bf16.mxu0 0
  %218 = vmatpush1.bf16.msra.mxu0 %v205
  %219 = vmatprep.subr.bf16.mxu0 0
  %220 = vmatpush1.bf16.msra.mxu0 %v204
  %221 = vmatprep.subr.bf16.mxu0 0
  %222 = vmatpush1.bf16.msra.mxu0 %v203
  %223 = vmatprep.subr.bf16.mxu0 0
  %224 = vmatpush1.bf16.msra.mxu0 %v202
  %225 = vmatprep.subr.bf16.mxu0 0
  %226 = vmatpush1.bf16.msra.mxu0 %v201
  %227 = vmatprep.subr.bf16.mxu0 0
  %228 = vmatpush1.bf16.msra.mxu0 %v200
  %229 = vmatprep.subr.bf16.mxu0 0
  %230 = vmatpush1.bf16.msra.mxu0 %v199
  %231 = vmatprep.subr.bf16.mxu0 0
  %232 = vmatpush2.bf16.msra.mxu0 0
  %233 = vmatprep.subr.bf16.mxu0 0
  %234 = vmatpush2.bf16.msra.mxu0 0
  %235 = vmatprep.subr.bf16.mxu0 0
  %236 = vmatpush2.bf16.msra.mxu0 0
  %237 = vmatprep.subr.bf16.mxu0 0
  %238 = vmatpush2.bf16.msra.mxu0 0
  %239 = vmatprep.subr.bf16.mxu0 0
  %240 = vmatpush2.bf16.msra.mxu0 0
  %241 = vmatprep.subr.bf16.mxu0 0
  %242 = vmatpush2.bf16.msra.mxu0 0
  %243 = vmatprep.subr.bf16.mxu0 0
  %244 = vmatpush2.bf16.msra.mxu0 0
  %245 = vmatprep.subr.bf16.mxu0 0
  %246 = vmatpush2.bf16.msra.mxu0 0
  %247 = vmatprep.mubr.bf16.mxu0 0
  %248 = vmatmul.mubr.bf16.gmra.mxu0 %v32
  %v249 = vpop.f32.mrf.mxu0
  %v250 = vadd.f32 %v154, %v249
  %v251 = vpop.f32.mrf.mxu0
  %v252 = vpop.f32.mrf.mxu0
  %v253 = vadd.f32 %v157, %v252
  %v254 = vpop.f32.mrf.mxu0
  %255 = vmatprep.mubr.bf16.mxu0 0
  %256 = vmatmul.mubr.bf16.gmra.mxu0 %v33
  %v257 = vpop.f32.mrf.mxu0
  %v258 = vadd.f32 %v162, %v257
  %v259 = vpop.f32.mrf.mxu0
  %v260 = vpop.f32.mrf.mxu0
  %v261 = vpop.f32.mrf.mxu0
  %262 = vdwg.mxu0
  %v263 = vld [vmem:[%s4] sm:$0x1]
  %v265 = vlaneseq
  %v266 = vshrl.u32 %v265, 7
  %v267 = vsub.s32 0, %v266
  %v268 = vrot.slane %v263, %v267
  %v270 = vadd.f32 %v250, %v268
  %v271 = vadd.f32 %v253, %v268
  %v272 = vadd.f32 %v258, %v268
  %v273 = vmul.f32 %v270, %v270
  %v274 = vmul.f32 %v271, %v271
  %v275 = vmul.f32 %v272, %v272
  %v276 = vmul.f32 %v270, %v273
  %v277 = vmul.f32 %v271, %v274
  %v278 = vmul.f32 %v272, %v275
  %v279 = vmul.f32 %v276, 0.044715
  %v280 = vmul.f32 %v277, 0.044715
  %v281 = vmul.f32 %v278, 0.044715
  %v282 = vadd.f32 %v270, %v279
  %v283 = vadd.f32 %v271, %v280
  %v284 = vadd.f32 %v272, %v281
  %v285 = vmul.f32 %v282, 0.7978846
  %v286 = vmul.f32 %v283, 0.7978846
  %v287 = vmul.f32 %v284, 0.7978846
  %v288 = vtanh.pop %v285
  %v289 = vtanh.pop %v286
  %v290 = vtanh.pop %v287
  %v291 = vadd.f32 %v288, 1.0
  %v292 = vadd.f32 %v289, 1.0
  %v293 = vadd.f32 %v290, 1.0
  %v294 = vmul.f32 %v291, 0.5
  %v295 = vmul.f32 %v292, 0.5
  %v296 = vmul.f32 %v293, 0.5
  %v297 = vmul.f32 %v270, %v294
  %v298 = vmul.f32 %v271, %v295
  %v299 = vmul.f32 %v272, %v296
  %v300 = vld [vmem:[%s5] sm:$0x1]
  %v302 = vlaneseq
  %v303 = vshrl.u32 %v302, 7
  %v304 = vsub.s32 0, %v303
  %v305 = vrot.slane %v300, %v304
  %v307 = vmul.f32 %v297, %v305
  %v308 = vmul.f32 %v298, %v305
  %v309 = vmul.f32 %v299, %v305
  %310 = vadd.xlane.f32.xlu0 %v307
  %v311 = vpop.xlane.xlu0 %310
  %312 = vadd.xlane.f32.xlu0 %v308
  %v313 = vpop.xlane.xlu0 %312
  %314 = vadd.xlane.f32.xlu0 %v309
  %v315 = vpop.xlane.xlu0 %314
  %v316 = vld [vmem:[#allocation2] sm:$0x1]
  %v318 = vlaneseq
  %v319 = vshrl.u32 %v318, 7
  %v320 = vsub.s32 0, %v319
  %v321 = vrot.slane %v316, %v320
  %v323 = vadd.f32 %v311, %v321
  %v324 = vadd.f32 %v313, %v321
  %v325 = vadd.f32 %v315, %v321
  %vm326 = vcmask 7168
  %327 = vst.msk [vmem:[%s7] sm:$0xff] %vm326, %v323
  %328 = vst.msk [vmem:[%s7 + $0x8] sm:$0xff] %vm326, %v324
  %329 = vst.msk [vmem:[%s7 + $0x10] sm:$0xff] %vm326, %v325
  // Predicated region
  $region30: #{fwd.17} parent=0 // pred_check
    _
  $region31: #{fwd.17} parent=0 // pred_check_branch
    %331 = sbr.rel (0) target = $region33
  $region32: #{fwd.17} parent=0 // pred_region
    _
  $region33: #{fwd.17} parent=0 // pred_fallthru
    _
  // Predicated region
  $region34: #{fwd.17} parent=0 // pred_check
    _
  $region35: #{fwd.17} parent=0 // pred_check_branch
    %333 = sbr.rel (0) target = $region37
  $region36: #{fwd.17} parent=0 // pred_region
    _
  $region37: #{fwd.17} parent=0 // pred_fallthru
    _

// kernel: fwd.16
$region0: #{fwd.16}
  #allocation0 [shape = 'u32[]', space=smem, size = 0x4, offset = 0x4, fixed_abs, tag = 'smem constant byte address 0x4 - core index']
  #allocation1 [shape = 'u32[144,128]{1,0:T(1,128)}', space=vmem, size = 0x12000, scoped, tag = 'internal scratch']
  %s0 = inlined_call_operand.vmem [shape: f32[8,128], index: 0, kind: input, shape index: {}]
  %s1 = inlined_call_operand.vmem [shape: f32[8,128], index: 1, kind: input, shape index: {}]
  %s2 = inlined_call_operand.vmem [shape: bf16[128,512], index: 2, kind: input, shape index: {}]
  %s3 = inlined_call_operand.vmem [shape: bf16[128,512], index: 3, kind: input, shape index: {}]
  %s4 = inlined_call_operand.vmem [shape: f32[1,512], index: 4, kind: input, shape index: {}]
  %s5 = inlined_call_operand.vmem [shape: bf16[512,512], index: 5, kind: input, shape index: {}]
  %s6 = inlined_call_operand.vmem [shape: f32[1,512], index: 6, kind: input, shape index: {}]
  %s7 = inlined_call_operand.vmem [shape: f32[1,128], index: 7, kind: input, shape index: {}]
  %s8 = inlined_call_operand.vmem [shape: f32[1,128], index: 8, kind: input, shape index: {}]
  %s9 = inlined_call_operand.vmem [shape: f32[8,128], index: 9, kind: output, shape index: {}]
  %s10 = sld [smem:[#allocation0]]
  $region46: #{fwd.16} parent=0
    _
  %s12 = ssub.s32 1, %s10
  %s13 = scalar_select 0, %s12, %s10
  // Predicated region
  $region2: #{fwd.16} parent=0 // pred_check
    _
  $region3: #{fwd.16} parent=0 // pred_check_branch
    %15 = sbr.rel (0) target = $region5
  $region4: #{fwd.16} parent=0 // pred_region
    _
  $region5: #{fwd.16} parent=0 // pred_fallthru
    _
  // Predicated region
  $region6: #{fwd.16} parent=0 // pred_check
    _
  $region7: #{fwd.16} parent=0 // pred_check_branch
    %17 = sbr.rel (0) target = $region9
  $region8: #{fwd.16} parent=0 // pred_region
    _
  $region9: #{fwd.16} parent=0 // pred_fallthru
    _
  // Predicated region
  $region10: #{fwd.16} parent=0 // pred_check
    _
  $region11: #{fwd.16} parent=0 // pred_check_branch
    %19 = sbr.rel (0) target = $region13
  $region12: #{fwd.16} parent=0 // pred_region
    _
  $region13: #{fwd.16} parent=0 // pred_fallthru
    _
  // Predicated region
  $region14: #{fwd.16} parent=0 // pred_check
    _
  $region15: #{fwd.16} parent=0 // pred_check_branch
    %21 = sbr.rel (0) target = $region17
  $region16: #{fwd.16} parent=0 // pred_region
    _
  $region17: #{fwd.16} parent=0 // pred_fallthru
    _
  // Predicated region
  $region18: #{fwd.16} parent=0 // pred_check
    _
  $region19: #{fwd.16} parent=0 // pred_check_branch
    %23 = sbr.rel (0) target = $region21
  $region20: #{fwd.16} parent=0 // pred_region
    _
  $region21: #{fwd.16} parent=0 // pred_fallthru
    _
  // Predicated region
  $region22: #{fwd.16} parent=0 // pred_check
    _
  $region23: #{fwd.16} parent=0 // pred_check_branch
    %25 = sbr.rel (0) target = $region25
  $region24: #{fwd.16} parent=0 // pred_region
    _
  $region25: #{fwd.16} parent=0 // pred_fallthru
    _
  // Predicated region
  $region26: #{fwd.16} parent=0 // pred_check
    _
  $region27: #{fwd.16} parent=0 // pred_check_branch
    %27 = sbr.rel (0) target = $region29
  $region28: #{fwd.16} parent=0 // pred_region
    _
  $region29: #{fwd.16} parent=0 // pred_fallthru
    _
  // Predicated region
  $region30: #{fwd.16} parent=0 // pred_check
    _
  $region31: #{fwd.16} parent=0 // pred_check_branch
    %29 = sbr.rel (0) target = $region33
  $region32: #{fwd.16} parent=0 // pred_region
    _
  $region33: #{fwd.16} parent=0 // pred_fallthru
    _
  // Predicated region
  $region34: #{fwd.16} parent=0 // pred_check
    _
  $region35: #{fwd.16} parent=0 // pred_check_branch
    %31 = sbr.rel (0) target = $region37
  $region36: #{fwd.16} parent=0 // pred_region
    _
  $region37: #{fwd.16} parent=0 // pred_fallthru
    _
  %v33 = vld [vmem:[%s0] sm:$0xff]
  %v34 = vld [vmem:[%s1] sm:$0xff]
  %v35 = vpack.c.bf16 %v33, %v33
  %v36 = vld [vmem:[%s2] sm:$0xff]
  %v37 = vld [vmem:[%s2 + $0x8] sm:$0xff]
  %v38 = vld [vmem:[%s2 + $0x10] sm:$0xff]
  %v39 = vld [vmem:[%s2 + $0x18] sm:$0xff]
  %v40 = vld [vmem:[%s2 + $0x20] sm:$0xff]
  %v41 = vld [vmem:[%s2 + $0x28] sm:$0xff]
  %v42 = vld [vmem:[%s2 + $0x30] sm:$0xff]
  %v43 = vld [vmem:[%s2 + $0x38] sm:$0xff]
  %v44 = vld [vmem:[%s2 + $0x40] sm:$0xff]
  %v45 = vld [vmem:[%s2 + $0x48] sm:$0xff]
  %v46 = vld [vmem:[%s2 + $0x50] sm:$0xff]
  %v47 = vld [vmem:[%s2 + $0x58] sm:$0xff]
  %v48 = vld [vmem:[%s2 + $0x60] sm:$0xff]
  %v49 = vld [vmem:[%s2 + $0x68] sm:$0xff]
  %v50 = vld [vmem:[%s2 + $0x70] sm:$0xff]
  %v51 = vld [vmem:[%s2 + $0x78] sm:$0xff]
  %v52 = vld [vmem:[%s2 + $0x80] sm:$0xff]
  %v53 = vld [vmem:[%s2 + $0x88] sm:$0xff]
  %v54 = vld [vmem:[%s2 + $0x90] sm:$0xff]
  %v55 = vld [vmem:[%s2 + $0x98] sm:$0xff]
  %v56 = vld [vmem:[%s2 + $0xa0] sm:$0xff]
  %v57 = vld [vmem:[%s2 + $0xa8] sm:$0xff]
  %v58 = vld [vmem:[%s2 + $0xb0] sm:$0xff]
  %v59 = vld [vmem:[%s2 + $0xb8] sm:$0xff]
  %v60 = vld [vmem:[%s2 + $0xc0] sm:$0xff]
  %v61 = vld [vmem:[%s2 + $0xc8] sm:$0xff]
  %v62 = vld [vmem:[%s2 + $0xd0] sm:$0xff]
  %v63 = vld [vmem:[%s2 + $0xd8] sm:$0xff]
  %v64 = vld [vmem:[%s2 + $0xe0] sm:$0xff]
  %v65 = vld [vmem:[%s2 + $0xe8] sm:$0xff]
  %v66 = vld [vmem:[%s2 + $0xf0] sm:$0xff]
  %v67 = vld [vmem:[%s2 + $0xf8] sm:$0xff]
  %v68 = vpack.c.bf16 %v34, %v34
  %v69 = vld [vmem:[%s3] sm:$0xff]
  %v70 = vld [vmem:[%s3 + $0x8] sm:$0xff]
  %v71 = vld [vmem:[%s3 + $0x10] sm:$0xff]
  %v72 = vld [vmem:[%s3 + $0x18] sm:$0xff]
  %v73 = vld [vmem:[%s3 + $0x20] sm:$0xff]
  %v74 = vld [vmem:[%s3 + $0x28] sm:$0xff]
  %v75 = vld [vmem:[%s3 + $0x30] sm:$0xff]
  %v76 = vld [vmem:[%s3 + $0x38] sm:$0xff]
  %v77 = vld [vmem:[%s3 + $0x40] sm:$0xff]
  %v78 = vld [vmem:[%s3 + $0x48] sm:$0xff]
  %v79 = vld [vmem:[%s3 + $0x50] sm:$0xff]
  %v80 = vld [vmem:[%s3 + $0x58] sm:$0xff]
  %v81 = vld [vmem:[%s3 + $0x60] sm:$0xff]
  %v82 = vld [vmem:[%s3 + $0x68] sm:$0xff]
  %v83 = vld [vmem:[%s3 + $0x70] sm:$0xff]
  %v84 = vld [vmem:[%s3 + $0x78] sm:$0xff]
  %v85 = vld [vmem:[%s3 + $0x80] sm:$0xff]
  %v86 = vld [vmem:[%s3 + $0x88] sm:$0xff]
  %v87 = vld [vmem:[%s3 + $0x90] sm:$0xff]
  %v88 = vld [vmem:[%s3 + $0x98] sm:$0xff]
  %v89 = vld [vmem:[%s3 + $0xa0] sm:$0xff]
  %v90 = vld [vmem:[%s3 + $0xa8] sm:$0xff]
  %v91 = vld [vmem:[%s3 + $0xb0] sm:$0xff]
  %v92 = vld [vmem:[%s3 + $0xb8] sm:$0xff]
  %v93 = vld [vmem:[%s3 + $0xc0] sm:$0xff]
  %v94 = vld [vmem:[%s3 + $0xc8] sm:$0xff]
  %v95 = vld [vmem:[%s3 + $0xd0] sm:$0xff]
  %v96 = vld [vmem:[%s3 + $0xd8] sm:$0xff]
  %v97 = vld [vmem:[%s3 + $0xe0] sm:$0xff]
  %v98 = vld [vmem:[%s3 + $0xe8] sm:$0xff]
  %v99 = vld [vmem:[%s3 + $0xf0] sm:$0xff]
  %v100 = vld [vmem:[%s3 + $0xf8] sm:$0xff]
  %v133 = vunpack.c.l.b16 %v69
  %v134 = vunpack.c.h.b16 %v69
  %v135 = vunpack.c.l.b16 %v70
  %v136 = vunpack.c.h.b16 %v70
  %v137 = vunpack.c.l.b16 %v71
  %v138 = vunpack.c.h.b16 %v71
  %v139 = vunpack.c.l.b16 %v72
  %v140 = vunpack.c.h.b16 %v72
  %v141 = vunpack.c.l.b16 %v73
  %v142 = vunpack.c.h.b16 %v73
  %v143 = vunpack.c.l.b16 %v74
  %v144 = vunpack.c.h.b16 %v74
  %v145 = vunpack.c.l.b16 %v75
  %v146 = vunpack.c.h.b16 %v75
  %v147 = vunpack.c.l.b16 %v76
  %v148 = vunpack.c.h.b16 %v76
  %v149 = vunpack.c.l.b16 %v77
  %v150 = vunpack.c.h.b16 %v77
  %v151 = vunpack.c.l.b16 %v78
  %v152 = vunpack.c.h.b16 %v78
  %v153 = vunpack.c.l.b16 %v79
  %v154 = vunpack.c.h.b16 %v79
  %v155 = vunpack.c.l.b16 %v80
  %v156 = vunpack.c.h.b16 %v80
  %v157 = vunpack.c.l.b16 %v81
  %v158 = vunpack.c.h.b16 %v81
  %v159 = vunpack.c.l.b16 %v82
  %v160 = vunpack.c.h.b16 %v82
  %v161 = vunpack.c.l.b16 %v83
  %v162 = vunpack.c.h.b16 %v83
  %v163 = vunpack.c.l.b16 %v84
  %v164 = vunpack.c.h.b16 %v84
  %v165 = vunpack.c.l.b16 %v85
  %v166 = vunpack.c.h.b16 %v85
  %v167 = vunpack.c.l.b16 %v86
  %v168 = vunpack.c.h.b16 %v86
  %v169 = vunpack.c.l.b16 %v87
  %v170 = vunpack.c.h.b16 %v87
  %v171 = vunpack.c.l.b16 %v88
  %v172 = vunpack.c.h.b16 %v88
  %v173 = vunpack.c.l.b16 %v89
  %v174 = vunpack.c.h.b16 %v89
  %v175 = vunpack.c.l.b16 %v90
  %v176 = vunpack.c.h.b16 %v90
  %v177 = vunpack.c.l.b16 %v91
  %v178 = vunpack.c.h.b16 %v91
  %v179 = vunpack.c.l.b16 %v92
  %v180 = vunpack.c.h.b16 %v92
  %v181 = vunpack.c.l.b16 %v93
  %v182 = vunpack.c.h.b16 %v93
  %v183 = vunpack.c.l.b16 %v94
  %v184 = vunpack.c.h.b16 %v94
  %v185 = vunpack.c.l.b16 %v95
  %v186 = vunpack.c.h.b16 %v95
  %v187 = vunpack.c.l.b16 %v96
  %v188 = vunpack.c.h.b16 %v96
  %v189 = vunpack.c.l.b16 %v97
  %v190 = vunpack.c.h.b16 %v97
  %v191 = vunpack.c.l.b16 %v98
  %v192 = vunpack.c.h.b16 %v98
  %v193 = vunpack.c.l.b16 %v99
  %v194 = vunpack.c.h.b16 %v99
  %v195 = vunpack.c.l.b16 %v100
  %v196 = vunpack.c.h.b16 %v100
  %v197 = vpack.c.b16 %v137, %v133
  %v198 = vpack.c.b16 %v138, %v134
  %v199 = vpack.c.b16 %v139, %v135
  %v200 = vpack.c.b16 %v140, %v136
  %v201 = vpack.c.b16 %v145, %v141
  %v202 = vpack.c.b16 %v146, %v142
  %v203 = vpack.c.b16 %v147, %v143
  %v204 = vpack.c.b16 %v148, %v144
  %v205 = vpack.c.b16 %v153, %v149
  %v206 = vpack.c.b16 %v154, %v150
  %v207 = vpack.c.b16 %v155, %v151
  %v208 = vpack.c.b16 %v156, %v152
  %v209 = vpack.c.b16 %v161, %v157
  %v210 = vpack.c.b16 %v162, %v158
  %v211 = vpack.c.b16 %v163, %v159
  %v212 = vpack.c.b16 %v164, %v160
  %v213 = vpack.c.b16 %v169, %v165
  %v214 = vpack.c.b16 %v170, %v166
  %v215 = vpack.c.b16 %v171, %v167
  %v216 = vpack.c.b16 %v172, %v168
  %v217 = vpack.c.b16 %v177, %v173
  %v218 = vpack.c.b16 %v178, %v174
  %v219 = vpack.c.b16 %v179, %v175
  %v220 = vpack.c.b16 %v180, %v176
  %v221 = vpack.c.b16 %v185, %v181
  %v222 = vpack.c.b16 %v186, %v182
  %v223 = vpack.c.b16 %v187, %v183
  %v224 = vpack.c.b16 %v188, %v184
  %v225 = vpack.c.b16 %v193, %v189
  %v226 = vpack.c.b16 %v194, %v190
  %v227 = vpack.c.b16 %v195, %v191
  %v228 = vpack.c.b16 %v196, %v192
  %261 = vmatprep.subr.bf16.mxu0 %v226
  %262 = vmatpush1.bf16.msra.mxu0 %v225
  %263 = vmatprep.subr.bf16.mxu0 %v222
  %264 = vmatpush1.bf16.msra.mxu0 %v221
  %265 = vmatprep.subr.bf16.mxu0 %v218
  %266 = vmatpush1.bf16.msra.mxu0 %v217
  %267 = vmatprep.subr.bf16.mxu0 %v214
  %268 = vmatpush1.bf16.msra.mxu0 %v213
  %269 = vmatprep.subr.bf16.mxu0 %v210
  %270 = vmatpush1.bf16.msra.mxu0 %v209
  %271 = vmatprep.subr.bf16.mxu0 %v206
  %272 = vmatpush1.bf16.msra.mxu0 %v205
  %273 = vmatprep.subr.bf16.mxu0 %v202
  %274 = vmatpush1.bf16.msra.mxu0 %v201
  %275 = vmatprep.subr.bf16.mxu0 %v198
  %276 = vmatpush1.bf16.msra.mxu0 %v197
  %277 = vmatprep.subr.bf16.mxu0 0
  %278 = vmatpush2.bf16.msra.mxu0 0
  %279 = vmatprep.subr.bf16.mxu0 0
  %280 = vmatpush2.bf16.msra.mxu0 0
  %281 = vmatprep.subr.bf16.mxu0 0
  %282 = vmatpush2.bf16.msra.mxu0 0
  %283 = vmatprep.subr.bf16.mxu0 0
  %284 = vmatpush2.bf16.msra.mxu0 0
  %285 = vmatprep.subr.bf16.mxu0 0
  %286 = vmatpush2.bf16.msra.mxu0 0
  %287 = vmatprep.subr.bf16.mxu0 0
  %288 = vmatpush2.bf16.msra.mxu0 0
  %289 = vmatprep.subr.bf16.mxu0 0
  %290 = vmatpush2.bf16.msra.mxu0 0
  %291 = vmatprep.subr.bf16.mxu0 0
  %292 = vmatpush2.bf16.msra.mxu0 0
  %293 = vmatprep.mubr.bf16.mxu0 0
  %294 = vmatmul.mubr.bf16.gmra.mxu0 %v68
  %v295 = vpop.f32.mrf.mxu0
  %v296 = vadd.f32 0.0, %v295
  %v297 = vpop.f32.mrf.mxu0
  %v298 = vadd.f32 0.0, %v297
  %v299 = vpop.f32.mrf.mxu0
  %v300 = vpop.f32.mrf.mxu0
  %301 = vdwg.mxu0
  %302 = vmatprep.subr.bf16.mxu0 %v228
  %303 = vmatpush1.bf16.msra.mxu0 %v227
  %304 = vmatprep.subr.bf16.mxu0 %v224
  %305 = vmatpush1.bf16.msra.mxu0 %v223
  %306 = vmatprep.subr.bf16.mxu0 %v220
  %307 = vmatpush1.bf16.msra.mxu0 %v219
  %308 = vmatprep.subr.bf16.mxu0 %v216
  %309 = vmatpush1.bf16.msra.mxu0 %v215
  %310 = vmatprep.subr.bf16.mxu0 %v212
  %311 = vmatpush1.bf16.msra.mxu0 %v211
  %312 = vmatprep.subr.bf16.mxu0 %v208
  %313 = vmatpush1.bf16.msra.mxu0 %v207
  %314 = vmatprep.subr.bf16.mxu0 %v204
  %315 = vmatpush1.bf16.msra.mxu0 %v203
  %316 = vmatprep.subr.bf16.mxu0 %v200
  %317 = vmatpush1.bf16.msra.mxu0 %v199
  %318 = vmatprep.subr.bf16.mxu0 0
  %319 = vmatpush2.bf16.msra.mxu0 0
  %320 = vmatprep.subr.bf16.mxu0 0
  %321 = vmatpush2.bf16.msra.mxu0 0
  %322 = vmatprep.subr.bf16.mxu0 0
  %323 = vmatpush2.bf16.msra.mxu0 0
  %324 = vmatprep.subr.bf16.mxu0 0
  %325 = vmatpush2.bf16.msra.mxu0 0
  %326 = vmatprep.subr.bf16.mxu0 0
  %327 = vmatpush2.bf16.msra.mxu0 0
  %328 = vmatprep.subr.bf16.mxu0 0
  %329 = vmatpush2.bf16.msra.mxu0 0
  %330 = vmatprep.subr.bf16.mxu0 0
  %331 = vmatpush2.bf16.msra.mxu0 0
  %332 = vmatprep.subr.bf16.mxu0 0
  %333 = vmatpush2.bf16.msra.mxu0 0
  %334 = vmatprep.mubr.bf16.mxu0 0
  %335 = vmatmul.mubr.bf16.gmra.mxu0 %v68
  %v336 = vpop.f32.mrf.mxu0
  %v337 = vadd.f32 0.0, %v336
  %v338 = vpop.f32.mrf.mxu0
  %v339 = vadd.f32 0.0, %v338
  %v340 = vpop.f32.mrf.mxu0
  %v341 = vpop.f32.mrf.mxu0
  %342 = vdwg.mxu0
  %v375 = vunpack.c.l.b16 %v36
  %v376 = vunpack.c.h.b16 %v36
  %v377 = vunpack.c.l.b16 %v37
  %v378 = vunpack.c.h.b16 %v37
  %v379 = vunpack.c.l.b16 %v38
  %v380 = vunpack.c.h.b16 %v38
  %v381 = vunpack.c.l.b16 %v39
  %v382 = vunpack.c.h.b16 %v39
  %v383 = vunpack.c.l.b16 %v40
  %v384 = vunpack.c.h.b16 %v40
  %v385 = vunpack.c.l.b16 %v41
  %v386 = vunpack.c.h.b16 %v41
  %v387 = vunpack.c.l.b16 %v42
  %v388 = vunpack.c.h.b16 %v42
  %v389 = vunpack.c.l.b16 %v43
  %v390 = vunpack.c.h.b16 %v43
  %v391 = vunpack.c.l.b16 %v44
  %v392 = vunpack.c.h.b16 %v44
  %v393 = vunpack.c.l.b16 %v45
  %v394 = vunpack.c.h.b16 %v45
  %v395 = vunpack.c.l.b16 %v46
  %v396 = vunpack.c.h.b16 %v46
  %v397 = vunpack.c.l.b16 %v47
  %v398 = vunpack.c.h.b16 %v47
  %v399 = vunpack.c.l.b16 %v48
  %v400 = vunpack.c.h.b16 %v48
  %v401 = vunpack.c.l.b16 %v49
  %v402 = vunpack.c.h.b16 %v49
  %v403 = vunpack.c.l.b16 %v50
  %v404 = vunpack.c.h.b16 %v50
  %v405 = vunpack.c.l.b16 %v51
  %v406 = vunpack.c.h.b16 %v51
  %v407 = vunpack.c.l.b16 %v52
  %v408 = vunpack.c.h.b16 %v52
  %v409 = vunpack.c.l.b16 %v53
  %v410 = vunpack.c.h.b16 %v53
  %v411 = vunpack.c.l.b16 %v54
  %v412 = vunpack.c.h.b16 %v54
  %v413 = vunpack.c.l.b16 %v55
  %v414 = vunpack.c.h.b16 %v55
  %v415 = vunpack.c.l.b16 %v56
  %v416 = vunpack.c.h.b16 %v56
  %v417 = vunpack.c.l.b16 %v57
  %v418 = vunpack.c.h.b16 %v57
  %v419 = vunpack.c.l.b16 %v58
  %v420 = vunpack.c.h.b16 %v58
  %v421 = vunpack.c.l.b16 %v59
  %v422 = vunpack.c.h.b16 %v59
  %v423 = vunpack.c.l.b16 %v60
  %v424 = vunpack.c.h.b16 %v60
  %v425 = vunpack.c.l.b16 %v61
  %v426 = vunpack.c.h.b16 %v61
  %v427 = vunpack.c.l.b16 %v62
  %v428 = vunpack.c.h.b16 %v62
  %v429 = vunpack.c.l.b16 %v63
  %v430 = vunpack.c.h.b16 %v63
  %v431 = vunpack.c.l.b16 %v64
  %v432 = vunpack.c.h.b16 %v64
  %v433 = vunpack.c.l.b16 %v65
  %v434 = vunpack.c.h.b16 %v65
  %v435 = vunpack.c.l.b16 %v66
  %v436 = vunpack.c.h.b16 %v66
  %v437 = vunpack.c.l.b16 %v67
  %v438 = vunpack.c.h.b16 %v67
  %v439 = vpack.c.b16 %v379, %v375
  %v440 = vpack.c.b16 %v380, %v376
  %v441 = vpack.c.b16 %v381, %v377
  %v442 = vpack.c.b16 %v382, %v378
  %v443 = vpack.c.b16 %v387, %v383
  %v444 = vpack.c.b16 %v388, %v384
  %v445 = vpack.c.b16 %v389, %v385
  %v446 = vpack.c.b16 %v390, %v386
  %v447 = vpack.c.b16 %v395, %v391
  %v448 = vpack.c.b16 %v396, %v392
  %v449 = vpack.c.b16 %v397, %v393
  %v450 = vpack.c.b16 %v398, %v394
  %v451 = vpack.c.b16 %v403, %v399
  %v452 = vpack.c.b16 %v404, %v400
  %v453 = vpack.c.b16 %v405, %v401
  %v454 = vpack.c.b16 %v406, %v402
  %v455 = vpack.c.b16 %v411, %v407
  %v456 = vpack.c.b16 %v412, %v408
  %v457 = vpack.c.b16 %v413, %v409
  %v458 = vpack.c.b16 %v414, %v410
  %v459 = vpack.c.b16 %v419, %v415
  %v460 = vpack.c.b16 %v420, %v416
  %v461 = vpack.c.b16 %v421, %v417
  %v462 = vpack.c.b16 %v422, %v418
  %v463 = vpack.c.b16 %v427, %v423
  %v464 = vpack.c.b16 %v428, %v424
  %v465 = vpack.c.b16 %v429, %v425
  %v466 = vpack.c.b16 %v430, %v426
  %v467 = vpack.c.b16 %v435, %v431
  %v468 = vpack.c.b16 %v436, %v432
  %v469 = vpack.c.b16 %v437, %v433
  %v470 = vpack.c.b16 %v438, %v434
  %503 = vmatprep.subr.bf16.mxu0 %v468
  %504 = vmatpush1.bf16.msra.mxu0 %v467
  %505 = vmatprep.subr.bf16.mxu0 %v464
  %506 = vmatpush1.bf16.msra.mxu0 %v463
  %507 = vmatprep.subr.bf16.mxu0 %v460
  %508 = vmatpush1.bf16.msra.mxu0 %v459
  %509 = vmatprep.subr.bf16.mxu0 %v456
  %510 = vmatpush1.bf16.msra.mxu0 %v455
  %511 = vmatprep.subr.bf16.mxu0 %v452
  %512 = vmatpush1.bf16.msra.mxu0 %v451
  %513 = vmatprep.subr.bf16.mxu0 %v448
  %514 = vmatpush1.bf16.msra.mxu0 %v447
  %515 = vmatprep.subr.bf16.mxu0 %v444
  %516 = vmatpush1.bf16.msra.mxu0 %v443
  %517 = vmatprep.subr.bf16.mxu0 %v440
  %518 = vmatpush1.bf16.msra.mxu0 %v439
  %519 = vmatprep.subr.bf16.mxu0 0
  %520 = vmatpush2.bf16.msra.mxu0 0
  %521 = vmatprep.subr.bf16.mxu0 0
  %522 = vmatpush2.bf16.msra.mxu0 0
  %523 = vmatprep.subr.bf16.mxu0 0
  %524 = vmatpush2.bf16.msra.mxu0 0
  %525 = vmatprep.subr.bf16.mxu0 0
  %526 = vmatpush2.bf16.msra.mxu0 0
  %527 = vmatprep.subr.bf16.mxu0 0
  %528 = vmatpush2.bf16.msra.mxu0 0
  %529 = vmatprep.subr.bf16.mxu0 0
  %530 = vmatpush2.bf16.msra.mxu0 0
  %531 = vmatprep.subr.bf16.mxu0 0
  %532 = vmatpush2.bf16.msra.mxu0 0
  %533 = vmatprep.subr.bf16.mxu0 0
  %534 = vmatpush2.bf16.msra.mxu0 0
  %535 = vmatprep.mubr.bf16.mxu0 0
  %536 = vmatmul.mubr.bf16.gmra.mxu0 %v35
  %v537 = vpop.f32.mrf.mxu0
  %v538 = vadd.f32 %v296, %v537
  %v539 = vpop.f32.mrf.mxu0
  %v540 = vadd.f32 %v298, %v539
  %v541 = vpop.f32.mrf.mxu0
  %v542 = vpop.f32.mrf.mxu0
  %543 = vdwg.mxu0
  %544 = vmatprep.subr.bf16.mxu0 %v470
  %545 = vmatpush1.bf16.msra.mxu0 %v469
  %546 = vmatprep.subr.bf16.mxu0 %v466
  %547 = vmatpush1.bf16.msra.mxu0 %v465
  %548 = vmatprep.subr.bf16.mxu0 %v462
  %549 = vmatpush1.bf16.msra.mxu0 %v461
  %550 = vmatprep.subr.bf16.mxu0 %v458
  %551 = vmatpush1.bf16.msra.mxu0 %v457
  %552 = vmatprep.subr.bf16.mxu0 %v454
  %553 = vmatpush1.bf16.msra.mxu0 %v453
  %554 = vmatprep.subr.bf16.mxu0 %v450
  %555 = vmatpush1.bf16.msra.mxu0 %v449
  %556 = vmatprep.subr.bf16.mxu0 %v446
  %557 = vmatpush1.bf16.msra.mxu0 %v445
  %558 = vmatprep.subr.bf16.mxu0 %v442
  %559 = vmatpush1.bf16.msra.mxu0 %v441
  %560 = vmatprep.subr.bf16.mxu0 0
  %561 = vmatpush2.bf16.msra.mxu0 0
  %562 = vmatprep.subr.bf16.mxu0 0
  %563 = vmatpush2.bf16.msra.mxu0 0
  %564 = vmatprep.subr.bf16.mxu0 0
  %565 = vmatpush2.bf16.msra.mxu0 0
  %566 = vmatprep.subr.bf16.mxu0 0
  %567 = vmatpush2.bf16.msra.mxu0 0
  %568 = vmatprep.subr.bf16.mxu0 0
  %569 = vmatpush2.bf16.msra.mxu0 0
  %570 = vmatprep.subr.bf16.mxu0 0
  %571 = vmatpush2.bf16.msra.mxu0 0
  %572 = vmatprep.subr.bf16.mxu0 0
  %573 = vmatpush2.bf16.msra.mxu0 0
  %574 = vmatprep.subr.bf16.mxu0 0
  %575 = vmatpush2.bf16.msra.mxu0 0
  %576 = vmatprep.mubr.bf16.mxu0 0
  %577 = vmatmul.mubr.bf16.gmra.mxu0 %v35
  %v578 = vpop.f32.mrf.mxu0
  %v579 = vadd.f32 %v337, %v578
  %v580 = vpop.f32.mrf.mxu0
  %v581 = vadd.f32 %v339, %v580
  %v582 = vpop.f32.mrf.mxu0
  %v583 = vpop.f32.mrf.mxu0
  %584 = vdwg.mxu0
  %v585 = vld [vmem:[%s4] sm:$0xf]
  %v587 = vlaneseq
  %v588 = vshrl.u32 %v587, 7
  %v589 = vsub.s32 0, %v588
  %v590 = vrot.slane %v585, %v589
  %v591 = vlaneseq
  %v592 = vshrl.u32 %v591, 7
  %v593 = vsub.s32 1, %v592
  %v594 = vrot.slane %v585, %v593
  %v595 = vlaneseq
  %v596 = vshrl.u32 %v595, 7
  %v597 = vsub.s32 2, %v596
  %v598 = vrot.slane %v585, %v597
  %v599 = vlaneseq
  %v600 = vshrl.u32 %v599, 7
  %v601 = vsub.s32 3, %v600
  %v602 = vrot.slane %v585, %v601
  %v607 = vadd.f32 %v538, %v590
  %v608 = vadd.f32 %v540, %v594
  %v609 = vadd.f32 %v579, %v598
  %v610 = vadd.f32 %v581, %v602
  %v611 = vmul.f32 %v607, %v607
  %v612 = vmul.f32 %v608, %v608
  %v613 = vmul.f32 %v609, %v609
  %v614 = vmul.f32 %v610, %v610
  %v615 = vmul.f32 %v607, %v611
  %v616 = vmul.f32 %v608, %v612
  %v617 = vmul.f32 %v609, %v613
  %v618 = vmul.f32 %v610, %v614
  %v619 = vmul.f32 %v615, 0.044715
  %v620 = vmul.f32 %v616, 0.044715
  %v621 = vmul.f32 %v617, 0.044715
  %v622 = vmul.f32 %v618, 0.044715
  %v623 = vadd.f32 %v607, %v619
  %v624 = vadd.f32 %v608, %v620
  %v625 = vadd.f32 %v609, %v621
  %v626 = vadd.f32 %v610, %v622
  %v627 = vmul.f32 %v623, 0.7978846
  %v628 = vmul.f32 %v624, 0.7978846
  %v629 = vmul.f32 %v625, 0.7978846
  %v630 = vmul.f32 %v626, 0.7978846
  %v631 = vtanh.pop %v627
  %v632 = vtanh.pop %v628
  %v633 = vtanh.pop %v629
  %v634 = vtanh.pop %v630
  %v635 = vadd.f32 %v631, 1.0
  %v636 = vadd.f32 %v632, 1.0
  %v637 = vadd.f32 %v633, 1.0
  %v638 = vadd.f32 %v634, 1.0
  %v639 = vmul.f32 %v635, 0.5
  %v640 = vmul.f32 %v636, 0.5
  %v641 = vmul.f32 %v637, 0.5
  %v642 = vmul.f32 %v638, 0.5
  %v643 = vmul.f32 %v607, %v639
  %v644 = vmul.f32 %v608, %v640
  %v645 = vmul.f32 %v609, %v641
  %v646 = vmul.f32 %v610, %v642
  %v647 = vpack.c.bf16 %v643, %v643
  %v648 = vpack.c.bf16 %v644, %v644
  %v649 = vpack.c.bf16 %v645, %v645
  %v650 = vpack.c.bf16 %v646, %v646
  %v651 = vld [vmem:[%s5] sm:$0xff]
  %v652 = vld [vmem:[%s5 + $0x8] sm:$0xff]
  %v653 = vld [vmem:[%s5 + $0x10] sm:$0xff]
  %v654 = vld [vmem:[%s5 + $0x18] sm:$0xff]
  %v655 = vld [vmem:[%s5 + $0x20] sm:$0xff]
  %v656 = vld [vmem:[%s5 + $0x28] sm:$0xff]
  %v657 = vld [vmem:[%s5 + $0x30] sm:$0xff]
  %v658 = vld [vmem:[%s5 + $0x38] sm:$0xff]
  %v659 = vld [vmem:[%s5 + $0x40] sm:$0xff]
  %v660 = vld [vmem:[%s5 + $0x48] sm:$0xff]
  %v661 = vld [vmem:[%s5 + $0x50] sm:$0xff]
  %v662 = vld [vmem:[%s5 + $0x58] sm:$0xff]
  %v663 = vld [vmem:[%s5 + $0x60] sm:$0xff]
  %v664 = vld [vmem:[%s5 + $0x68] sm:$0xff]
  %v665 = vld [vmem:[%s5 + $0x70] sm:$0xff]
  %v666 = vld [vmem:[%s5 + $0x78] sm:$0xff]
  %v667 = vld [vmem:[%s5 + $0x80] sm:$0xff]
  %v668 = vld [vmem:[%s5 + $0x88] sm:$0xff]
  %v669 = vld [vmem:[%s5 + $0x90] sm:$0xff]
  %v670 = vld [vmem:[%s5 + $0x98] sm:$0xff]
  %v671 = vld [vmem:[%s5 + $0xa0] sm:$0xff]
  %v672 = vld [vmem:[%s5 + $0xa8] sm:$0xff]
  %v673 = vld [vmem:[%s5 + $0xb0] sm:$0xff]
  %v674 = vld [vmem:[%s5 + $0xb8] sm:$0xff]
  %v675 = vld [vmem:[%s5 + $0xc0] sm:$0xff]
  %v676 = vld [vmem:[%s5 + $0xc8] sm:$0xff]
  %v677 = vld [vmem:[%s5 + $0xd0] sm:$0xff]
  %v678 = vld [vmem:[%s5 + $0xd8] sm:$0xff]
  %v679 = vld [vmem:[%s5 + $0xe0] sm:$0xff]
  %v680 = vld [vmem:[%s5 + $0xe8] sm:$0xff]
  %v681 = vld [vmem:[%s5 + $0xf0] sm:$0xff]
  %v682 = vld [vmem:[%s5 + $0xf8] sm:$0xff]
  %v683 = vld [vmem:[%s5 + $0x100] sm:$0xff]
  %v684 = vld [vmem:[%s5 + $0x108] sm:$0xff]
  %v685 = vld [vmem:[%s5 + $0x110] sm:$0xff]
  %v686 = vld [vmem:[%s5 + $0x118] sm:$0xff]
  %v687 = vld [vmem:[%s5 + $0x120] sm:$0xff]
  %v688 = vld [vmem:[%s5 + $0x128] sm:$0xff]
  %v689 = vld [vmem:[%s5 + $0x130] sm:$0xff]
  %v690 = vld [vmem:[%s5 + $0x138] sm:$0xff]
  %v691 = vld [vmem:[%s5 + $0x140] sm:$0xff]
  %v692 = vld [vmem:[%s5 + $0x148] sm:$0xff]
  %v693 = vld [vmem:[%s5 + $0x150] sm:$0xff]
  %v694 = vld [vmem:[%s5 + $0x158] sm:$0xff]
  %v695 = vld [vmem:[%s5 + $0x160] sm:$0xff]
  %v696 = vld [vmem:[%s5 + $0x168] sm:$0xff]
  %v697 = vld [vmem:[%s5 + $0x170] sm:$0xff]
  %v698 = vld [vmem:[%s5 + $0x178] sm:$0xff]
  %v699 = vld [vmem:[%s5 + $0x180] sm:$0xff]
  %v700 = vld [vmem:[%s5 + $0x188] sm:$0xff]
  %v701 = vld [vmem:[%s5 + $0x190] sm:$0xff]
  %v702 = vld [vmem:[%s5 + $0x198] sm:$0xff]
  %v703 = vld [vmem:[%s5 + $0x1a0] sm:$0xff]
  %v704 = vld [vmem:[%s5 + $0x1a8] sm:$0xff]
  %v705 = vld [vmem:[%s5 + $0x1b0] sm:$0xff]
  %v706 = vld [vmem:[%s5 + $0x1b8] sm:$0xff]
  %v707 = vld [vmem:[%s5 + $0x1c0] sm:$0xff]
  %v708 = vld [vmem:[%s5 + $0x1c8] sm:$0xff]
  %v709 = vld [vmem:[%s5 + $0x1d0] sm:$0xff]
  %v710 = vld [vmem:[%s5 + $0x1d8] sm:$0xff]
  %v711 = vld [vmem:[%s5 + $0x1e0] sm:$0xff]
  %v712 = vld [vmem:[%s5 + $0x1e8] sm:$0xff]
  %v713 = vld [vmem:[%s5 + $0x1f0] sm:$0xff]
  %v714 = vld [vmem:[%s5 + $0x1f8] sm:$0xff]
  %v715 = vld [vmem:[%s5 + $0x200] sm:$0xff]
  %v716 = vld [vmem:[%s5 + $0x208] sm:$0xff]
  %v717 = vld [vmem:[%s5 + $0x210] sm:$0xff]
  %v718 = vld [vmem:[%s5 + $0x218] sm:$0xff]
  %v719 = vld [vmem:[%s5 + $0x220] sm:$0xff]
  %v720 = vld [vmem:[%s5 + $0x228] sm:$0xff]
  %v721 = vld [vmem:[%s5 + $0x230] sm:$0xff]
  %v722 = vld [vmem:[%s5 + $0x238] sm:$0xff]
  %v723 = vld [vmem:[%s5 + $0x240] sm:$0xff]
  %v724 = vld [vmem:[%s5 + $0x248] sm:$0xff]
  %v725 = vld [vmem:[%s5 + $0x250] sm:$0xff]
  %v726 = vld [vmem:[%s5 + $0x258] sm:$0xff]
  %v727 = vld [vmem:[%s5 + $0x260] sm:$0xff]
  %v728 = vld [vmem:[%s5 + $0x268] sm:$0xff]
  %v729 = vld [vmem:[%s5 + $0x270] sm:$0xff]
  %v730 = vld [vmem:[%s5 + $0x278] sm:$0xff]
  %v731 = vld [vmem:[%s5 + $0x280] sm:$0xff]
  %v732 = vld [vmem:[%s5 + $0x288] sm:$0xff]
  %v733 = vld [vmem:[%s5 + $0x290] sm:$0xff]
  %v734 = vld [vmem:[%s5 + $0x298] sm:$0xff]
  %v735 = vld [vmem:[%s5 + $0x2a0] sm:$0xff]
  %v736 = vld [vmem:[%s5 + $0x2a8] sm:$0xff]
  %v737 = vld [vmem:[%s5 + $0x2b0] sm:$0xff]
  %v738 = vld [vmem:[%s5 + $0x2b8] sm:$0xff]
  %v739 = vld [vmem:[%s5 + $0x2c0] sm:$0xff]
  %v740 = vld [vmem:[%s5 + $0x2c8] sm:$0xff]
  %v741 = vld [vmem:[%s5 + $0x2d0] sm:$0xff]
  %v742 = vld [vmem:[%s5 + $0x2d8] sm:$0xff]
  %v743 = vld [vmem:[%s5 + $0x2e0] sm:$0xff]
  %v744 = vld [vmem:[%s5 + $0x2e8] sm:$0xff]
  %v745 = vld [vmem:[%s5 + $0x2f0] sm:$0xff]
  %v746 = vld [vmem:[%s5 + $0x2f8] sm:$0xff]
  %v747 = vld [vmem:[%s5 + $0x300] sm:$0xff]
  %v748 = vld [vmem:[%s5 + $0x308] sm:$0xff]
  %v749 = vld [vmem:[%s5 + $0x310] sm:$0xff]
  %v750 = vld [vmem:[%s5 + $0x318] sm:$0xff]
  %v751 = vld [vmem:[%s5 + $0x320] sm:$0xff]
  %v752 = vld [vmem:[%s5 + $0x328] sm:$0xff]
  %v753 = vld [vmem:[%s5 + $0x330] sm:$0xff]
  %v754 = vld [vmem:[%s5 + $0x338] sm:$0xff]
  %v755 = vld [vmem:[%s5 + $0x340] sm:$0xff]
  %v756 = vld [vmem:[%s5 + $0x348] sm:$0xff]
  %v757 = vld [vmem:[%s5 + $0x350] sm:$0xff]
  %v758 = vld [vmem:[%s5 + $0x358] sm:$0xff]
  %v759 = vld [vmem:[%s5 + $0x360] sm:$0xff]
  %v760 = vld [vmem:[%s5 + $0x368] sm:$0xff]
  %v761 = vld [vmem:[%s5 + $0x370] sm:$0xff]
  %v762 = vld [vmem:[%s5 + $0x378] sm:$0xff]
  %v763 = vld [vmem:[%s5 + $0x380] sm:$0xff]
  %v764 = vld [vmem:[%s5 + $0x388] sm:$0xff]
  %v765 = vld [vmem:[%s5 + $0x390] sm:$0xff]
  %v766 = vld [vmem:[%s5 + $0x398] sm:$0xff]
  %v767 = vld [vmem:[%s5 + $0x3a0] sm:$0xff]
  %v768 = vld [vmem:[%s5 + $0x3a8] sm:$0xff]
  %v769 = vld [vmem:[%s5 + $0x3b0] sm:$0xff]
  %v770 = vld [vmem:[%s5 + $0x3b8] sm:$0xff]
  %v771 = vld [vmem:[%s5 + $0x3c0] sm:$0xff]
  %v772 = vld [vmem:[%s5 + $0x3c8] sm:$0xff]
  %v773 = vld [vmem:[%s5 + $0x3d0] sm:$0xff]
  %v774 = vld [vmem:[%s5 + $0x3d8] sm:$0xff]
  %v775 = vld [vmem:[%s5 + $0x3e0] sm:$0xff]
  %v776 = vld [vmem:[%s5 + $0x3e8] sm:$0xff]
  %v777 = vld [vmem:[%s5 + $0x3f0] sm:$0xff]
  %v778 = vld [vmem:[%s5 + $0x3f8] sm:$0xff]
  %v779 = vld [vmem:[%s6] sm:$0xf]
  %v781 = vlaneseq
  %v782 = vshrl.u32 %v781, 7
  %v783 = vsub.s32 0, %v782
  %v784 = vrot.slane %v779, %v783
  %v785 = vlaneseq
  %v786 = vshrl.u32 %v785, 7
  %v787 = vsub.s32 1, %v786
  %v788 = vrot.slane %v779, %v787
  %v789 = vlaneseq
  %v790 = vshrl.u32 %v789, 7
  %v791 = vsub.s32 2, %v790
  %v792 = vrot.slane %v779, %v791
  %v793 = vlaneseq
  %v794 = vshrl.u32 %v793, 7
  %v795 = vsub.s32 3, %v794
  %v796 = vrot.slane %v779, %v795
  %v929 = vunpack.c.l.b16 %v651
  %v930 = vunpack.c.h.b16 %v651
  %v931 = vunpack.c.l.b16 %v652
  %v932 = vunpack.c.h.b16 %v652
  %v933 = vunpack.c.l.b16 %v653
  %v934 = vunpack.c.h.b16 %v653
  %v935 = vunpack.c.l.b16 %v654
  %v936 = vunpack.c.h.b16 %v654
  %v937 = vunpack.c.l.b16 %v655
  %v938 = vunpack.c.h.b16 %v655
  %v939 = vunpack.c.l.b16 %v656
  %v940 = vunpack.c.h.b16 %v656
  %v941 = vunpack.c.l.b16 %v657
  %v942 = vunpack.c.h.b16 %v657
  %v943 = vunpack.c.l.b16 %v658
  %v944 = vunpack.c.h.b16 %v658
  %v945 = vunpack.c.l.b16 %v659
  %v946 = vunpack.c.h.b16 %v659
  %v947 = vunpack.c.l.b16 %v660
  %v948 = vunpack.c.h.b16 %v660
  %v949 = vunpack.c.l.b16 %v661
  %v950 = vunpack.c.h.b16 %v661
  %v951 = vunpack.c.l.b16 %v662
  %v952 = vunpack.c.h.b16 %v662
  %v953 = vunpack.c.l.b16 %v663
  %v954 = vunpack.c.h.b16 %v663
  %v955 = vunpack.c.l.b16 %v664
  %v956 = vunpack.c.h.b16 %v664
  %v957 = vunpack.c.l.b16 %v665
  %v958 = vunpack.c.h.b16 %v665
  %v959 = vunpack.c.l.b16 %v666
  %v960 = vunpack.c.h.b16 %v666
  %v961 = vunpack.c.l.b16 %v667
  %v962 = vunpack.c.h.b16 %v667
  %v963 = vunpack.c.l.b16 %v668
  %v964 = vunpack.c.h.b16 %v668
  %v965 = vunpack.c.l.b16 %v669
  %v966 = vunpack.c.h.b16 %v669
  %v967 = vunpack.c.l.b16 %v670
  %v968 = vunpack.c.h.b16 %v670
  %v969 = vunpack.c.l.b16 %v671
  %v970 = vunpack.c.h.b16 %v671
  %v971 = vunpack.c.l.b16 %v672
  %v972 = vunpack.c.h.b16 %v672
  %v973 = vunpack.c.l.b16 %v673
  %v974 = vunpack.c.h.b16 %v673
  %v975 = vunpack.c.l.b16 %v674
  %v976 = vunpack.c.h.b16 %v674
  %v977 = vunpack.c.l.b16 %v675
  %v978 = vunpack.c.h.b16 %v675
  %v979 = vunpack.c.l.b16 %v676
  %v980 = vunpack.c.h.b16 %v676
  %v981 = vunpack.c.l.b16 %v677
  %v982 = vunpack.c.h.b16 %v677
  %v983 = vunpack.c.l.b16 %v678
  %v984 = vunpack.c.h.b16 %v678
  %v985 = vunpack.c.l.b16 %v679
  %v986 = vunpack.c.h.b16 %v679
  %v987 = vunpack.c.l.b16 %v680
  %v988 = vunpack.c.h.b16 %v680
  %v989 = vunpack.c.l.b16 %v681
  %v990 = vunpack.c.h.b16 %v681
  %v991 = vunpack.c.l.b16 %v682
  %v992 = vunpack.c.h.b16 %v682
  %v993 = vunpack.c.l.b16 %v683
  %v994 = vunpack.c.h.b16 %v683
  %v995 = vunpack.c.l.b16 %v684
  %v996 = vunpack.c.h.b16 %v684
  %v997 = vunpack.c.l.b16 %v685
  %v998 = vunpack.c.h.b16 %v685
  %v999 = vunpack.c.l.b16 %v686
  %v1000 = vunpack.c.h.b16 %v686
  %v1001 = vunpack.c.l.b16 %v687
  %v1002 = vunpack.c.h.b16 %v687
  %v1003 = vunpack.c.l.b16 %v688
  %v1004 = vunpack.c.h.b16 %v688
  %v1005 = vunpack.c.l.b16 %v689
  %v1006 = vunpack.c.h.b16 %v689
  %v1007 = vunpack.c.l.b16 %v690
  %v1008 = vunpack.c.h.b16 %v690
  %v1009 = vunpack.c.l.b16 %v691
  %v1010 = vunpack.c.h.b16 %v691
  %v1011 = vunpack.c.l.b16 %v692
  %v1012 = vunpack.c.h.b16 %v692
  %v1013 = vunpack.c.l.b16 %v693
  %v1014 = vunpack.c.h.b16 %v693
  %v1015 = vunpack.c.l.b16 %v694
  %v1016 = vunpack.c.h.b16 %v694
  %v1017 = vunpack.c.l.b16 %v695
  %v1018 = vunpack.c.h.b16 %v695
  %v1019 = vunpack.c.l.b16 %v696
  %v1020 = vunpack.c.h.b16 %v696
  %v1021 = vunpack.c.l.b16 %v697
  %v1022 = vunpack.c.h.b16 %v697
  %v1023 = vunpack.c.l.b16 %v698
  %v1024 = vunpack.c.h.b16 %v698
  %v1025 = vunpack.c.l.b16 %v699
  %v1026 = vunpack.c.h.b16 %v699
  %v1027 = vunpack.c.l.b16 %v700
  %v1028 = vunpack.c.h.b16 %v700
  %v1029 = vunpack.c.l.b16 %v701
  %v1030 = vunpack.c.h.b16 %v701
  %v1031 = vunpack.c.l.b16 %v702
  %v1032 = vunpack.c.h.b16 %v702
  %v1033 = vunpack.c.l.b16 %v703
  %v1034 = vunpack.c.h.b16 %v703
  %v1035 = vunpack.c.l.b16 %v704
  %v1036 = vunpack.c.h.b16 %v704
  %v1037 = vunpack.c.l.b16 %v705
  %v1038 = vunpack.c.h.b16 %v705
  %v1039 = vunpack.c.l.b16 %v706
  %v1040 = vunpack.c.h.b16 %v706
  %v1041 = vunpack.c.l.b16 %v707
  %v1042 = vunpack.c.h.b16 %v707
  %v1043 = vunpack.c.l.b16 %v708
  %v1044 = vunpack.c.h.b16 %v708
  %v1045 = vunpack.c.l.b16 %v709
  %v1046 = vunpack.c.h.b16 %v709
  %v1047 = vunpack.c.l.b16 %v710
  %v1048 = vunpack.c.h.b16 %v710
  %v1049 = vunpack.c.l.b16 %v711
  %v1050 = vunpack.c.h.b16 %v711
  %v1051 = vunpack.c.l.b16 %v712
  %v1052 = vunpack.c.h.b16 %v712
  %v1053 = vunpack.c.l.b16 %v713
  %v1054 = vunpack.c.h.b16 %v713
  %v1055 = vunpack.c.l.b16 %v714
  %v1056 = vunpack.c.h.b16 %v714
  %v1057 = vunpack.c.l.b16 %v715
  %v1058 = vunpack.c.h.b16 %v715
  %v1059 = vunpack.c.l.b16 %v716
  %v1060 = vunpack.c.h.b16 %v716
  %v1061 = vunpack.c.l.b16 %v717
  %v1062 = vunpack.c.h.b16 %v717
  %v1063 = vunpack.c.l.b16 %v718
  %v1064 = vunpack.c.h.b16 %v718
  %v1065 = vunpack.c.l.b16 %v719
  %v1066 = vunpack.c.h.b16 %v719
  %v1067 = vunpack.c.l.b16 %v720
  %v1068 = vunpack.c.h.b16 %v720
  %v1069 = vunpack.c.l.b16 %v721
  %v1070 = vunpack.c.h.b16 %v721
  %v1071 = vunpack.c.l.b16 %v722
  %v1072 = vunpack.c.h.b16 %v722
  %v1073 = vunpack.c.l.b16 %v723
  %v1074 = vunpack.c.h.b16 %v723
  %v1075 = vunpack.c.l.b16 %v724
  %v1076 = vunpack.c.h.b16 %v724
  %v1077 = vunpack.c.l.b16 %v725
  %v1078 = vunpack.c.h.b16 %v725
  %v1079 = vunpack.c.l.b16 %v726
  %v1080 = vunpack.c.h.b16 %v726
  %v1081 = vunpack.c.l.b16 %v727
  %v1082 = vunpack.c.h.b16 %v727
  %v1083 = vunpack.c.l.b16 %v728
  %v1084 = vunpack.c.h.b16 %v728
  %v1085 = vunpack.c.l.b16 %v729
  %v1086 = vunpack.c.h.b16 %v729
  %v1087 = vunpack.c.l.b16 %v730
  %v1088 = vunpack.c.h.b16 %v730
  %v1089 = vunpack.c.l.b16 %v731
  %v1090 = vunpack.c.h.b16 %v731
  %v1091 = vunpack.c.l.b16 %v732
  %v1092 = vunpack.c.h.b16 %v732
  %v1093 = vunpack.c.l.b16 %v733
  %v1094 = vunpack.c.h.b16 %v733
  %v1095 = vunpack.c.l.b16 %v734
  %v1096 = vunpack.c.h.b16 %v734
  %v1097 = vunpack.c.l.b16 %v735
  %v1098 = vunpack.c.h.b16 %v735
  %v1099 = vunpack.c.l.b16 %v736
  %v1100 = vunpack.c.h.b16 %v736
  %v1101 = vunpack.c.l.b16 %v737
  %v1102 = vunpack.c.h.b16 %v737
  %v1103 = vunpack.c.l.b16 %v738
  %v1104 = vunpack.c.h.b16 %v738
  %v1105 = vunpack.c.l.b16 %v739
  %v1106 = vunpack.c.h.b16 %v739
  %v1107 = vunpack.c.l.b16 %v740
  %v1108 = vunpack.c.h.b16 %v740
  %v1109 = vunpack.c.l.b16 %v741
  %v1110 = vunpack.c.h.b16 %v741
  %v1111 = vunpack.c.l.b16 %v742
  %v1112 = vunpack.c.h.b16 %v742
  %v1113 = vunpack.c.l.b16 %v743
  %v1114 = vunpack.c.h.b16 %v743
  %v1115 = vunpack.c.l.b16 %v744
  %v1116 = vunpack.c.h.b16 %v744
  %v1117 = vunpack.c.l.b16 %v745
  %v1118 = vunpack.c.h.b16 %v745
  %v1119 = vunpack.c.l.b16 %v746
  %v1120 = vunpack.c.h.b16 %v746
  %v1121 = vunpack.c.l.b16 %v747
  %v1122 = vunpack.c.h.b16 %v747
  %v1123 = vunpack.c.l.b16 %v748
  %v1124 = vunpack.c.h.b16 %v748
  %v1125 = vunpack.c.l.b16 %v749
  %v1126 = vunpack.c.h.b16 %v749
  %v1127 = vunpack.c.l.b16 %v750
  %v1128 = vunpack.c.h.b16 %v750
  %v1129 = vunpack.c.l.b16 %v751
  %v1130 = vunpack.c.h.b16 %v751
  %v1131 = vunpack.c.l.b16 %v752
  %v1132 = vunpack.c.h.b16 %v752
  %v1133 = vunpack.c.l.b16 %v753
  %v1134 = vunpack.c.h.b16 %v753
  %v1135 = vunpack.c.l.b16 %v754
  %v1136 = vunpack.c.h.b16 %v754
  %v1137 = vunpack.c.l.b16 %v755
  %v1138 = vunpack.c.h.b16 %v755
  %v1139 = vunpack.c.l.b16 %v756
  %v1140 = vunpack.c.h.b16 %v756
  %v1141 = vunpack.c.l.b16 %v757
  %v1142 = vunpack.c.h.b16 %v757
  %v1143 = vunpack.c.l.b16 %v758
  %v1144 = vunpack.c.h.b16 %v758
  %v1145 = vunpack.c.l.b16 %v759
  %v1146 = vunpack.c.h.b16 %v759
  %v1147 = vunpack.c.l.b16 %v760
  %v1148 = vunpack.c.h.b16 %v760
  %v1149 = vunpack.c.l.b16 %v761
  %v1150 = vunpack.c.h.b16 %v761
  %v1151 = vunpack.c.l.b16 %v762
  %v1152 = vunpack.c.h.b16 %v762
  %v1153 = vunpack.c.l.b16 %v763
  %v1154 = vunpack.c.h.b16 %v763
  %v1155 = vunpack.c.l.b16 %v764
  %v1156 = vunpack.c.h.b16 %v764
  %v1157 = vunpack.c.l.b16 %v765
  %v1158 = vunpack.c.h.b16 %v765
  %v1159 = vunpack.c.l.b16 %v766
  %v1160 = vunpack.c.h.b16 %v766
  %v1161 = vunpack.c.l.b16 %v767
  %v1162 = vunpack.c.h.b16 %v767
  %v1163 = vunpack.c.l.b16 %v768
  %v1164 = vunpack.c.h.b16 %v768
  %v1165 = vunpack.c.l.b16 %v769
  %v1166 = vunpack.c.h.b16 %v769
  %v1167 = vunpack.c.l.b16 %v770
  %v1168 = vunpack.c.h.b16 %v770
  %v1169 = vunpack.c.l.b16 %v771
  %v1170 = vunpack.c.h.b16 %v771
  %v1171 = vunpack.c.l.b16 %v772
  %v1172 = vunpack.c.h.b16 %v772
  %v1173 = vunpack.c.l.b16 %v773
  %v1174 = vunpack.c.h.b16 %v773
  %v1175 = vunpack.c.l.b16 %v774
  %v1176 = vunpack.c.h.b16 %v774
  %v1177 = vunpack.c.l.b16 %v775
  %v1178 = vunpack.c.h.b16 %v775
  %v1179 = vunpack.c.l.b16 %v776
  %v1180 = vunpack.c.h.b16 %v776
  %v1181 = vunpack.c.l.b16 %v777
  %v1182 = vunpack.c.h.b16 %v777
  %v1183 = vunpack.c.l.b16 %v778
  %v1184 = vunpack.c.h.b16 %v778
  %v1185 = vpack.c.b16 %v933, %v929
  %v1186 = vpack.c.b16 %v934, %v930
  %v1187 = vpack.c.b16 %v935, %v931
  %v1188 = vpack.c.b16 %v936, %v932
  %v1189 = vpack.c.b16 %v941, %v937
  %v1190 = vpack.c.b16 %v942, %v938
  %v1191 = vpack.c.b16 %v943, %v939
  %v1192 = vpack.c.b16 %v944, %v940
  %v1193 = vpack.c.b16 %v949, %v945
  %v1194 = vpack.c.b16 %v950, %v946
  %v1195 = vpack.c.b16 %v951, %v947
  %v1196 = vpack.c.b16 %v952, %v948
  %v1197 = vpack.c.b16 %v957, %v953
  %v1198 = vpack.c.b16 %v958, %v954
  %v1199 = vpack.c.b16 %v959, %v955
  %v1200 = vpack.c.b16 %v960, %v956
  %v1201 = vpack.c.b16 %v965, %v961
  %v1202 = vpack.c.b16 %v966, %v962
  %v1203 = vpack.c.b16 %v967, %v963
  %v1204 = vpack.c.b16 %v968, %v964
  %v1205 = vpack.c.b16 %v973, %v969
  %v1206 = vpack.c.b16 %v974, %v970
  %v1207 = vpack.c.b16 %v975, %v971
  %v1208 = vpack.c.b16 %v976, %v972
  %v1209 = vpack.c.b16 %v981, %v977
  %v1210 = vpack.c.b16 %v982, %v978
  %v1211 = vpack.c.b16 %v983, %v979
  %v1212 = vpack.c.b16 %v984, %v980
  %v1213 = vpack.c.b16 %v989, %v985
  %v1214 = vpack.c.b16 %v990, %v986
  %v1215 = vpack.c.b16 %v991, %v987
  %v1216 = vpack.c.b16 %v992, %v988
  %v1217 = vpack.c.b16 %v997, %v993
  %v1218 = vpack.c.b16 %v998, %v994
  %v1219 = vpack.c.b16 %v999, %v995
  %v1220 = vpack.c.b16 %v1000, %v996
  %v1221 = vpack.c.b16 %v1005, %v1001
  %v1222 = vpack.c.b16 %v1006, %v1002
  %v1223 = vpack.c.b16 %v1007, %v1003
  %v1224 = vpack.c.b16 %v1008, %v1004
  %v1225 = vpack.c.b16 %v1013, %v1009
  %v1226 = vpack.c.b16 %v1014, %v1010
  %v1227 = vpack.c.b16 %v1015, %v1011
  %v1228 = vpack.c.b16 %v1016, %v1012
  %v1229 = vpack.c.b16 %v1021, %v1017
  %v1230 = vpack.c.b16 %v1022, %v1018
  %v1231 = vpack.c.b16 %v1023, %v1019
  %v1232 = vpack.c.b16 %v1024, %v1020
  %v1233 = vpack.c.b16 %v1029, %v1025
  %v1234 = vpack.c.b16 %v1030, %v1026
  %v1235 = vpack.c.b16 %v1031, %v1027
  %v1236 = vpack.c.b16 %v1032, %v1028
  %v1237 = vpack.c.b16 %v1037, %v1033
  %v1238 = vpack.c.b16 %v1038, %v1034
  %v1239 = vpack.c.b16 %v1039, %v1035
  %v1240 = vpack.c.b16 %v1040, %v1036
  %v1241 = vpack.c.b16 %v1045, %v1041
  %v1242 = vpack.c.b16 %v1046, %v1042
  %v1243 = vpack.c.b16 %v1047, %v1043
  %v1244 = vpack.c.b16 %v1048, %v1044
  %v1245 = vpack.c.b16 %v1053, %v1049
  %v1246 = vpack.c.b16 %v1054, %v1050
  %v1247 = vpack.c.b16 %v1055, %v1051
  %v1248 = vpack.c.b16 %v1056, %v1052
  %v1249 = vpack.c.b16 %v1061, %v1057
  %v1250 = vpack.c.b16 %v1062, %v1058
  %v1251 = vpack.c.b16 %v1063, %v1059
  %v1252 = vpack.c.b16 %v1064, %v1060
  %v1253 = vpack.c.b16 %v1069, %v1065
  %v1254 = vpack.c.b16 %v1070, %v1066
  %v1255 = vpack.c.b16 %v1071, %v1067
  %v1256 = vpack.c.b16 %v1072, %v1068
  %v1257 = vpack.c.b16 %v1077, %v1073
  %v1258 = vpack.c.b16 %v1078, %v1074
  %v1259 = vpack.c.b16 %v1079, %v1075
  %v1260 = vpack.c.b16 %v1080, %v1076
  %v1261 = vpack.c.b16 %v1085, %v1081
  %v1262 = vpack.c.b16 %v1086, %v1082
  %v1263 = vpack.c.b16 %v1087, %v1083
  %v1264 = vpack.c.b16 %v1088, %v1084
  %v1265 = vpack.c.b16 %v1093, %v1089
  %v1266 = vpack.c.b16 %v1094, %v1090
  %v1267 = vpack.c.b16 %v1095, %v1091
  %v1268 = vpack.c.b16 %v1096, %v1092
  %v1269 = vpack.c.b16 %v1101, %v1097
  %v1270 = vpack.c.b16 %v1102, %v1098
  %v1271 = vpack.c.b16 %v1103, %v1099
  %v1272 = vpack.c.b16 %v1104, %v1100
  %v1273 = vpack.c.b16 %v1109, %v1105
  %v1274 = vpack.c.b16 %v1110, %v1106
  %v1275 = vpack.c.b16 %v1111, %v1107
  %v1276 = vpack.c.b16 %v1112, %v1108
  %v1277 = vpack.c.b16 %v1117, %v1113
  %v1278 = vpack.c.b16 %v1118, %v1114
  %v1279 = vpack.c.b16 %v1119, %v1115
  %v1280 = vpack.c.b16 %v1120, %v1116
  %v1281 = vpack.c.b16 %v1125, %v1121
  %v1282 = vpack.c.b16 %v1126, %v1122
  %v1283 = vpack.c.b16 %v1127, %v1123
  %v1284 = vpack.c.b16 %v1128, %v1124
  %v1285 = vpack.c.b16 %v1133, %v1129
  %v1286 = vpack.c.b16 %v1134, %v1130
  %v1287 = vpack.c.b16 %v1135, %v1131
  %v1288 = vpack.c.b16 %v1136, %v1132
  %v1289 = vpack.c.b16 %v1141, %v1137
  %v1290 = vpack.c.b16 %v1142, %v1138
  %v1291 = vpack.c.b16 %v1143, %v1139
  %v1292 = vpack.c.b16 %v1144, %v1140
  %v1293 = vpack.c.b16 %v1149, %v1145
  %v1294 = vpack.c.b16 %v1150, %v1146
  %v1295 = vpack.c.b16 %v1151, %v1147
  %v1296 = vpack.c.b16 %v1152, %v1148
  %v1297 = vpack.c.b16 %v1157, %v1153
  %v1298 = vpack.c.b16 %v1158, %v1154
  %v1299 = vpack.c.b16 %v1159, %v1155
  %v1300 = vpack.c.b16 %v1160, %v1156
  %v1301 = vpack.c.b16 %v1165, %v1161
  %v1302 = vpack.c.b16 %v1166, %v1162
  %v1303 = vpack.c.b16 %v1167, %v1163
  %v1304 = vpack.c.b16 %v1168, %v1164
  %v1305 = vpack.c.b16 %v1173, %v1169
  %v1306 = vpack.c.b16 %v1174, %v1170
  %v1307 = vpack.c.b16 %v1175, %v1171
  %v1308 = vpack.c.b16 %v1176, %v1172
  %v1309 = vpack.c.b16 %v1181, %v1177
  %v1310 = vpack.c.b16 %v1182, %v1178
  %v1311 = vpack.c.b16 %v1183, %v1179
  %v1312 = vpack.c.b16 %v1184, %v1180
  %1441 = vmatprep.subr.bf16.mxu0 %v1214
  %1442 = vmatpush1.bf16.msra.mxu0 %v1213
  %1443 = vmatprep.subr.bf16.mxu0 %v1210
  %1444 = vmatpush1.bf16.msra.mxu0 %v1209
  %1445 = vmatprep.subr.bf16.mxu0 %v1206
  %1446 = vmatpush1.bf16.msra.mxu0 %v1205
  %1447 = vmatprep.subr.bf16.mxu0 %v1202
  %1448 = vmatpush1.bf16.msra.mxu0 %v1201
  %1449 = vmatprep.subr.bf16.mxu0 %v1198
  %1450 = vmatpush1.bf16.msra.mxu0 %v1197
  %1451 = vmatprep.subr.bf16.mxu0 %v1194
  %1452 = vmatpush1.bf16.msra.mxu0 %v1193
  %1453 = vmatprep.subr.bf16.mxu0 %v1190
  %1454 = vmatpush1.bf16.msra.mxu0 %v1189
  %1455 = vmatprep.subr.bf16.mxu0 %v1186
  %1456 = vmatpush1.bf16.msra.mxu0 %v1185
  %1457 = vmatprep.subr.bf16.mxu0 %v1246
  %1458 = vmatpush2.bf16.msra.mxu0 %v1245
  %1459 = vmatprep.subr.bf16.mxu0 %v1242
  %1460 = vmatpush2.bf16.msra.mxu0 %v1241
  %1461 = vmatprep.subr.bf16.mxu0 %v1238
  %1462 = vmatpush2.bf16.msra.mxu0 %v1237
  %1463 = vmatprep.subr.bf16.mxu0 %v1234
  %1464 = vmatpush2.bf16.msra.mxu0 %v1233
  %1465 = vmatprep.subr.bf16.mxu0 %v1230
  %1466 = vmatpush2.bf16.msra.mxu0 %v1229
  %1467 = vmatprep.subr.bf16.mxu0 %v1226
  %1468 = vmatpush2.bf16.msra.mxu0 %v1225
  %1469 = vmatprep.subr.bf16.mxu0 %v1222
  %1470 = vmatpush2.bf16.msra.mxu0 %v1221
  %1471 = vmatprep.subr.bf16.mxu0 %v1218
  %1472 = vmatpush2.bf16.msra.mxu0 %v1217
  %1473 = vmatprep.mubr.bf16.mxu0 %v648
  %1474 = vmatmul.mubr.bf16.gmra.mxu0 %v647
  %v1475 = vpop.f32.mrf.mxu0
  %v1476 = vadd.f32 %v784, %v1475
  %v1477 = vpop.f32.mrf.mxu0
  %v1478 = vadd.f32 %v788, %v1477
  %v1479 = vpop.f32.mrf.mxu0
  %v1480 = vpop.f32.mrf.mxu0
  %1481 = vdwg.mxu0
  %1482 = vmatprep.subr.bf16.mxu0 %v1278
  %1483 = vmatpush1.bf16.msra.mxu0 %v1277
  %1484 = vmatprep.subr.bf16.mxu0 %v1274
  %1485 = vmatpush1.bf16.msra.mxu0 %v1273
  %1486 = vmatprep.subr.bf16.mxu0 %v1270
  %1487 = vmatpush1.bf16.msra.mxu0 %v1269
  %1488 = vmatprep.subr.bf16.mxu0 %v1266
  %1489 = vmatpush1.bf16.msra.mxu0 %v1265
  %1490 = vmatprep.subr.bf16.mxu0 %v1262
  %1491 = vmatpush1.bf16.msra.mxu0 %v1261
  %1492 = vmatprep.subr.bf16.mxu0 %v1258
  %1493 = vmatpush1.bf16.msra.mxu0 %v1257
  %1494 = vmatprep.subr.bf16.mxu0 %v1254
  %1495 = vmatpush1.bf16.msra.mxu0 %v1253
  %1496 = vmatprep.subr.bf16.mxu0 %v1250
  %1497 = vmatpush1.bf16.msra.mxu0 %v1249
  %1498 = vmatprep.subr.bf16.mxu0 %v1310
  %1499 = vmatpush2.bf16.msra.mxu0 %v1309
  %1500 = vmatprep.subr.bf16.mxu0 %v1306
  %1501 = vmatpush2.bf16.msra.mxu0 %v1305
  %1502 = vmatprep.subr.bf16.mxu0 %v1302
  %1503 = vmatpush2.bf16.msra.mxu0 %v1301
  %1504 = vmatprep.subr.bf16.mxu0 %v1298
  %1505 = vmatpush2.bf16.msra.mxu0 %v1297
  %1506 = vmatprep.subr.bf16.mxu0 %v1294
  %1507 = vmatpush2.bf16.msra.mxu0 %v1293
  %1508 = vmatprep.subr.bf16.mxu0 %v1290
  %1509 = vmatpush2.bf16.msra.mxu0 %v1289
  %1510 = vmatprep.subr.bf16.mxu0 %v1286
  %1511 = vmatpush2.bf16.msra.mxu0 %v1285
  %1512 = vmatprep.subr.bf16.mxu0 %v1282
  %1513 = vmatpush2.bf16.msra.mxu0 %v1281
  %1514 = vmatprep.mubr.bf16.mxu0 %v650
  %1515 = vmatmul.mubr.bf16.gmra.mxu0 %v649
  %v1516 = vpop.f32.mrf.mxu0
  %v1517 = vadd.f32 %v1476, %v1516
  %v1518 = vpop.f32.mrf.mxu0
  %v1519 = vadd.f32 %v1478, %v1518
  %v1520 = vpop.f32.mrf.mxu0
  %v1521 = vpop.f32.mrf.mxu0
  %1522 = vdwg.mxu0
  %1523 = vmatprep.subr.bf16.mxu0 %v1216
  %1524 = vmatpush1.bf16.msra.mxu0 %v1215
  %1525 = vmatprep.subr.bf16.mxu0 %v1212
  %1526 = vmatpush1.bf16.msra.mxu0 %v1211
  %1527 = vmatprep.subr.bf16.mxu0 %v1208
  %1528 = vmatpush1.bf16.msra.mxu0 %v1207
  %1529 = vmatprep.subr.bf16.mxu0 %v1204
  %1530 = vmatpush1.bf16.msra.mxu0 %v1203
  %1531 = vmatprep.subr.bf16.mxu0 %v1200
  %1532 = vmatpush1.bf16.msra.mxu0 %v1199
  %1533 = vmatprep.subr.bf16.mxu0 %v1196
  %1534 = vmatpush1.bf16.msra.mxu0 %v1195
  %1535 = vmatprep.subr.bf16.mxu0 %v1192
  %1536 = vmatpush1.bf16.msra.mxu0 %v1191
  %1537 = vmatprep.subr.bf16.mxu0 %v1188
  %1538 = vmatpush1.bf16.msra.mxu0 %v1187
  %1539 = vmatprep.subr.bf16.mxu0 %v1248
  %1540 = vmatpush2.bf16.msra.mxu0 %v1247
  %1541 = vmatprep.subr.bf16.mxu0 %v1244
  %1542 = vmatpush2.bf16.msra.mxu0 %v1243
  %1543 = vmatprep.subr.bf16.mxu0 %v1240
  %1544 = vmatpush2.bf16.msra.mxu0 %v1239
  %1545 = vmatprep.subr.bf16.mxu0 %v1236
  %1546 = vmatpush2.bf16.msra.mxu0 %v1235
  %1547 = vmatprep.subr.bf16.mxu0 %v1232
  %1548 = vmatpush2.bf16.msra.mxu0 %v1231
  %1549 = vmatprep.subr.bf16.mxu0 %v1228
  %1550 = vmatpush2.bf16.msra.mxu0 %v1227
  %1551 = vmatprep.subr.bf16.mxu0 %v1224
  %1552 = vmatpush2.bf16.msra.mxu0 %v1223
  %1553 = vmatprep.subr.bf16.mxu0 %v1220
  %1554 = vmatpush2.bf16.msra.mxu0 %v1219
  %1555 = vmatprep.mubr.bf16.mxu0 %v648
  %1556 = vmatmul.mubr.bf16.gmra.mxu0 %v647
  %v1557 = vpop.f32.mrf.mxu0
  %v1558 = vadd.f32 %v792, %v1557
  %v1559 = vpop.f32.mrf.mxu0
  %v1560 = vadd.f32 %v796, %v1559
  %v1561 = vpop.f32.mrf.mxu0
  %v1562 = vpop.f32.mrf.mxu0
  %1563 = vdwg.mxu0
  %1564 = vmatprep.subr.bf16.mxu0 %v1280
  %1565 = vmatpush1.bf16.msra.mxu0 %v1279
  %1566 = vmatprep.subr.bf16.mxu0 %v1276
  %1567 = vmatpush1.bf16.msra.mxu0 %v1275
  %1568 = vmatprep.subr.bf16.mxu0 %v1272
  %1569 = vmatpush1.bf16.msra.mxu0 %v1271
  %1570 = vmatprep.subr.bf16.mxu0 %v1268
  %1571 = vmatpush1.bf16.msra.mxu0 %v1267
  %1572 = vmatprep.subr.bf16.mxu0 %v1264
  %1573 = vmatpush1.bf16.msra.mxu0 %v1263
  %1574 = vmatprep.subr.bf16.mxu0 %v1260
  %1575 = vmatpush1.bf16.msra.mxu0 %v1259
  %1576 = vmatprep.subr.bf16.mxu0 %v1256
  %1577 = vmatpush1.bf16.msra.mxu0 %v1255
  %1578 = vmatprep.subr.bf16.mxu0 %v1252
  %1579 = vmatpush1.bf16.msra.mxu0 %v1251
  %1580 = vmatprep.subr.bf16.mxu0 %v1312
  %1581 = vmatpush2.bf16.msra.mxu0 %v1311
  %1582 = vmatprep.subr.bf16.mxu0 %v1308
  %1583 = vmatpush2.bf16.msra.mxu0 %v1307
  %1584 = vmatprep.subr.bf16.mxu0 %v1304
  %1585 = vmatpush2.bf16.msra.mxu0 %v1303
  %1586 = vmatprep.subr.bf16.mxu0 %v1300
  %1587 = vmatpush2.bf16.msra.mxu0 %v1299
  %1588 = vmatprep.subr.bf16.mxu0 %v1296
  %1589 = vmatpush2.bf16.msra.mxu0 %v1295
  %1590 = vmatprep.subr.bf16.mxu0 %v1292
  %1591 = vmatpush2.bf16.msra.mxu0 %v1291
  %1592 = vmatprep.subr.bf16.mxu0 %v1288
  %1593 = vmatpush2.bf16.msra.mxu0 %v1287
  %1594 = vmatprep.subr.bf16.mxu0 %v1284
  %1595 = vmatpush2.bf16.msra.mxu0 %v1283
  %1596 = vmatprep.mubr.bf16.mxu0 %v650
  %1597 = vmatmul.mubr.bf16.gmra.mxu0 %v649
  %v1598 = vpop.f32.mrf.mxu0
  %v1599 = vadd.f32 %v1558, %v1598
  %v1600 = vpop.f32.mrf.mxu0
  %v1601 = vadd.f32 %v1560, %v1600
  %v1602 = vpop.f32.mrf.mxu0
  %v1603 = vpop.f32.mrf.mxu0
  %1604 = vdwg.mxu0
  %v1605 = vmax.f32 %v1517, %v1519
  %v1606 = vmax.f32 %v1605, %v1599
  %v1607 = vsub.f32 %v1517, %v1606
  %v1608 = vmul.f32 %v1607, 1.442695
  %v1609 = vpow.pop %v1608
  %v1610 = vsub.f32 %v1519, %v1606
  %v1611 = vmul.f32 %v1610, 1.442695
  %v1612 = vpow.pop %v1611
  %v1613 = vsub.f32 %v1599, %v1606
  %v1614 = vmul.f32 %v1613, 1.442695
  %v1615 = vpow.pop %v1614
  %v1616 = vadd.f32 %v1609, %v1612
  %v1617 = vadd.f32 %v1616, %v1615
  %v1618 = vrcp.pop %v1617
  %1619 = vadd.xlane.f32.xlu0 %v1601
  %v1620 = vpop.xlane.xlu0 %1619
  %v1621 = vrcp.pop 128.0
  %v1622 = vmul.f32 %v1620, %v1621
  %v1623 = vsub.f32 %v1601, %v1622
  %v1624 = vmul.f32 %v1623, %v1623
  %1625 = vadd.xlane.f32.xlu0 %v1624
  %v1626 = vpop.xlane.xlu0 %1625
  %v1627 = vmul.f32 %v1626, %v1621
  %v1628 = vadd.f32 %v1627, 1e-05
  %v1629 = vrsqrt.pop %v1628
  %v1630 = vmul.f32 %v1623, %v1629
  %v1631 = vld [vmem:[%s7] sm:$0x1]
  %v1633 = vlaneseq
  %v1634 = vshrl.u32 %v1633, 7
  %v1635 = vsub.s32 0, %v1634
  %v1636 = vrot.slane %v1631, %v1635
  %v1638 = vmul.f32 %v1630, %v1636
  %v1639 = vld [vmem:[%s8] sm:$0x1]
  %v1641 = vlaneseq
  %v1642 = vshrl.u32 %v1641, 7
  %v1643 = vsub.s32 0, %v1642
  %v1644 = vrot.slane %v1639, %v1643
  %v1646 = vadd.f32 %v1638, %v1644
  %v1647 = vmul.f32 %v1609, %v1646
  %v1648 = vmul.f32 %v1612, %v33
  %v1649 = vadd.f32 %v1647, %v1648
  %v1650 = vmul.f32 %v1615, %v34
  %v1651 = vadd.f32 %v1649, %v1650
  %v1652 = vmul.f32 %v1651, %v1618
  %1653 = vst [vmem:[%s9] sm:$0xff] %v1652
  // Predicated region
  $region38: #{fwd.16} parent=0 // pred_check
    _
  $region39: #{fwd.16} parent=0 // pred_check_branch
    %1655 = sbr.rel (0) target = $region41
  $region40: #{fwd.16} parent=0 // pred_region
    _
  $region41: #{fwd.16} parent=0 // pred_fallthru
    _
  // Predicated region
  $region42: #{fwd.16} parent=0 // pred_check
    _
  $region43: #{fwd.16} parent=0 // pred_check_branch
    %1657 = sbr.rel (0) target = $region45
  $region44: #{fwd.16} parent=0 // pred_region
    _
  $region45: #{fwd.16} parent=0 // pred_fallthru
    _

// kernel: squeeze.25
$region0: #{squeeze.25}
  %s0 = inlined_call_operand.vmem [shape: f32[20], index: 0, kind: input, shape index: {}]
  %s1 = inlined_call_operand.vmem [shape: f32[4,5], index: 1, kind: output, shape index: {}]
  $region1: #{squeeze.25} parent=0
    #allocation0 [shape = 'u8[4096]{0}', space=vmem, size = 0x1000, scoped, tag = 'scoped mem for output reshape']
    #allocation1 [shape = 'u8[4096]{0}', space=vmem, size = 0x1000, scoped, tag = 'scoped mem for input reshape']
    %s3 = sshll.u32 1, 1
    %s4 = ssub.s32 %s3, 1
    %v5 = vld [vmem:[%s0] sm:%s4]
    %6 = vst [vmem:[#allocation1] sm:%s4] %v5
    %v7 = vld [vmem:[#allocation1] sm:$0x1]
    %vm8 = vcmask 39936
    %9 = vst.msk [vmem:[#allocation0] sm:$0x1] %vm8, %v7
    %v10 = vld [vmem:[#allocation1] sm:$0x1]
    %11 = vrot.lane.b32.xlu0 %v10, 123
    %v12 = vpop.permute.xlu0 %11
    %vm13 = vcmask 39936
    %s14 = scalar_lea.vmem [#allocation0], 1
    %15 = vst.msk [vmem:[%s14] sm:$0x1] %vm13, %v12
    %v16 = vld [vmem:[#allocation1] sm:$0x1]
    %17 = vrot.lane.b32.xlu0 %v16, 118
    %v18 = vpop.permute.xlu0 %17
    %vm19 = vcmask 39936
    %s20 = scalar_lea.vmem [#allocation0], 2
    %21 = vst.msk [vmem:[%s20] sm:$0x1] %vm19, %v18
    %v22 = vld [vmem:[#allocation1] sm:$0x1]
    %23 = vrot.lane.b32.xlu0 %v22, 113
    %v24 = vpop.permute.xlu0 %23
    %vm25 = vcmask 39936
    %s26 = scalar_lea.vmem [#allocation0], 3
    %27 = vst.msk [vmem:[%s26] sm:$0x1] %vm25, %v24
    %s29 = sshll.u32 1, 4
    %s30 = ssub.s32 %s29, 1
    %v32 = vld [vmem:[#allocation0] sm:%s30]
    %s33 = sshll.u32 1, 4
    %s34 = ssub.s32 %s33, 1
    %35 = vst [vmem:[%s1] sm:%s34] %v32

// kernel: squeeze.28
$region0: #{squeeze.28}
  %s0 = inlined_call_operand.vmem [shape: f32[16], index: 0, kind: input, shape index: {}]
  %s1 = inlined_call_operand.vmem [shape: f32[4,4], index: 1, kind: output, shape index: {}]
  $region1: #{squeeze.28} parent=0
    #allocation0 [shape = 'u8[4096]{0}', space=vmem, size = 0x1000, scoped, tag = 'scoped mem for output reshape']
    #allocation1 [shape = 'u8[4096]{0}', space=vmem, size = 0x1000, scoped, tag = 'scoped mem for input reshape']
    %s3 = sshll.u32 1, 1
    %s4 = ssub.s32 %s3, 1
    %v5 = vld [vmem:[%s0] sm:%s4]
    %6 = vst [vmem:[#allocation1] sm:%s4] %v5
    %v7 = vld [vmem:[#allocation1] sm:$0x1]
    %vm8 = vcmask 31744
    %9 = vst.msk [vmem:[#allocation0] sm:$0x1] %vm8, %v7
    %v10 = vld [vmem:[#allocation1] sm:$0x1]
    %11 = vrot.lane.b32.xlu0 %v10, 124
    %v12 = vpop.permute.xlu0 %11
    %vm13 = vcmask 31744
    %s14 = scalar_lea.vmem [#allocation0], 1
    %15 = vst.msk [vmem:[%s14] sm:$0x1] %vm13, %v12
    %v16 = vld [vmem:[#allocation1] sm:$0x1]
    %17 = vrot.lane.b32.xlu0 %v16, 120
    %v18 = vpop.permute.xlu0 %17
    %vm19 = vcmask 31744
    %s20 = scalar_lea.vmem [#allocation0], 2
    %21 = vst.msk [vmem:[%s20] sm:$0x1] %vm19, %v18
    %v22 = vld [vmem:[#allocation1] sm:$0x1]
    %23 = vrot.lane.b32.xlu0 %v22, 116
    %v24 = vpop.permute.xlu0 %23
    %vm25 = vcmask 31744
    %s26 = scalar_lea.vmem [#allocation0], 3
    %27 = vst.msk [vmem:[%s26] sm:$0x1] %vm25, %v24
    %s29 = sshll.u32 1, 4
    %s30 = ssub.s32 %s29, 1
    %v32 = vld [vmem:[#allocation0] sm:%s30]
    %s33 = sshll.u32 1, 4
    %s34 = ssub.s32 %s33, 1
    %35 = vst [vmem:[%s1] sm:%s34] %v32

// kernel: fwd.21
$region0: #{fwd.21}
  #allocation0 [shape = 'u32[]', space=smem, size = 0x4, offset = 0x4, fixed_abs, tag = 'smem constant byte address 0x4 - core index']
  #allocation1 [shape = 'u32[144,128]{1,0:T(1,128)}', space=vmem, size = 0x12000, scoped, tag = 'internal scratch']
  #allocation2 [shape = 'f32[1,1]{1,0:T(1,128)S(1)}', space=vmem, size = 0x200, scoped, tag = 'scoped memory for fwd.21']
  %s0 = inlined_call_operand.vmem [shape: f32[16,128], index: 0, kind: input, shape index: {}]
  %s1 = inlined_call_operand.vmem [shape: f32[16,128], index: 1, kind: input, shape index: {}]
  %s2 = inlined_call_operand.vmem [shape: bf16[128,128], index: 2, kind: input, shape index: {}]
  %s3 = inlined_call_operand.vmem [shape: bf16[128,128], index: 3, kind: input, shape index: {}]
  %s4 = inlined_call_operand.vmem [shape: f32[1,128], index: 4, kind: input, shape index: {}]
  %s5 = inlined_call_operand.vmem [shape: f32[1,128], index: 5, kind: input, shape index: {}]
  %s6 = inlined_call_operand.<no memory space> [shape: f32[1,1], index: 6, kind: input, shape index: {}]
  %s7 = inlined_call_operand.vmem [shape: f32[16,1], index: 7, kind: output, shape index: {}]
  %s8 = sld [smem:[#allocation0]]
  $region38: #{fwd.21} parent=0
    _
  %s10 = ssub.s32 1, %s8
  %s11 = scalar_select 0, %s10, %s8
  %v12 = vstv %s6
  %13 = vst [vmem:[#allocation2] sm:$0x1] %v12
  // Predicated region
  $region2: #{fwd.21} parent=0 // pred_check
    _
  $region3: #{fwd.21} parent=0 // pred_check_branch
    %15 = sbr.rel (0) target = $region5
  $region4: #{fwd.21} parent=0 // pred_region
    _
  $region5: #{fwd.21} parent=0 // pred_fallthru
    _
  // Predicated region
  $region6: #{fwd.21} parent=0 // pred_check
    _
  $region7: #{fwd.21} parent=0 // pred_check_branch
    %17 = sbr.rel (0) target = $region9
  $region8: #{fwd.21} parent=0 // pred_region
    _
  $region9: #{fwd.21} parent=0 // pred_fallthru
    _
  // Predicated region
  $region10: #{fwd.21} parent=0 // pred_check
    _
  $region11: #{fwd.21} parent=0 // pred_check_branch
    %19 = sbr.rel (0) target = $region13
  $region12: #{fwd.21} parent=0 // pred_region
    _
  $region13: #{fwd.21} parent=0 // pred_fallthru
    _
  // Predicated region
  $region14: #{fwd.21} parent=0 // pred_check
    _
  $region15: #{fwd.21} parent=0 // pred_check_branch
    %21 = sbr.rel (0) target = $region17
  $region16: #{fwd.21} parent=0 // pred_region
    _
  $region17: #{fwd.21} parent=0 // pred_fallthru
    _
  // Predicated region
  $region18: #{fwd.21} parent=0 // pred_check
    _
  $region19: #{fwd.21} parent=0 // pred_check_branch
    %23 = sbr.rel (0) target = $region21
  $region20: #{fwd.21} parent=0 // pred_region
    _
  $region21: #{fwd.21} parent=0 // pred_fallthru
    _
  // Predicated region
  $region22: #{fwd.21} parent=0 // pred_check
    _
  $region23: #{fwd.21} parent=0 // pred_check_branch
    %25 = sbr.rel (0) target = $region25
  $region24: #{fwd.21} parent=0 // pred_region
    _
  $region25: #{fwd.21} parent=0 // pred_fallthru
    _
  // Predicated region
  $region26: #{fwd.21} parent=0 // pred_check
    _
  $region27: #{fwd.21} parent=0 // pred_check_branch
    %27 = sbr.rel (0) target = $region29
  $region28: #{fwd.21} parent=0 // pred_region
    _
  $region29: #{fwd.21} parent=0 // pred_fallthru
    _
  %v29 = vld [vmem:[%s0] sm:$0xff]
  %v30 = vld [vmem:[%s0 + $0x8] sm:$0xff]
  %v31 = vpack.c.bf16 %v30, %v29
  %v32 = vld [vmem:[%s1] sm:$0xff]
  %v33 = vld [vmem:[%s1 + $0x8] sm:$0xff]
  %v34 = vpack.c.bf16 %v33, %v32
  %v35 = vld [vmem:[%s2] sm:$0xf]
  %v36 = vld [vmem:[%s2 + $0x4] sm:$0xf]
  %v37 = vld [vmem:[%s2 + $0x8] sm:$0xf]
  %v38 = vld [vmem:[%s2 + $0xc] sm:$0xf]
  %v39 = vld [vmem:[%s2 + $0x10] sm:$0xf]
  %v40 = vld [vmem:[%s2 + $0x14] sm:$0xf]
  %v41 = vld [vmem:[%s2 + $0x18] sm:$0xf]
  %v42 = vld [vmem:[%s2 + $0x1c] sm:$0xf]
  %v43 = vld [vmem:[%s2 + $0x20] sm:$0xf]
  %v44 = vld [vmem:[%s2 + $0x24] sm:$0xf]
  %v45 = vld [vmem:[%s2 + $0x28] sm:$0xf]
  %v46 = vld [vmem:[%s2 + $0x2c] sm:$0xf]
  %v47 = vld [vmem:[%s2 + $0x30] sm:$0xf]
  %v48 = vld [vmem:[%s2 + $0x34] sm:$0xf]
  %v49 = vld [vmem:[%s2 + $0x38] sm:$0xf]
  %v50 = vld [vmem:[%s2 + $0x3c] sm:$0xf]
  %v51 = vld [vmem:[%s3] sm:$0xf]
  %v52 = vld [vmem:[%s3 + $0x4] sm:$0xf]
  %v53 = vld [vmem:[%s3 + $0x8] sm:$0xf]
  %v54 = vld [vmem:[%s3 + $0xc] sm:$0xf]
  %v55 = vld [vmem:[%s3 + $0x10] sm:$0xf]
  %v56 = vld [vmem:[%s3 + $0x14] sm:$0xf]
  %v57 = vld [vmem:[%s3 + $0x18] sm:$0xf]
  %v58 = vld [vmem:[%s3 + $0x1c] sm:$0xf]
  %v59 = vld [vmem:[%s3 + $0x20] sm:$0xf]
  %v60 = vld [vmem:[%s3 + $0x24] sm:$0xf]
  %v61 = vld [vmem:[%s3 + $0x28] sm:$0xf]
  %v62 = vld [vmem:[%s3 + $0x2c] sm:$0xf]
  %v63 = vld [vmem:[%s3 + $0x30] sm:$0xf]
  %v64 = vld [vmem:[%s3 + $0x34] sm:$0xf]
  %v65 = vld [vmem:[%s3 + $0x38] sm:$0xf]
  %v66 = vld [vmem:[%s3 + $0x3c] sm:$0xf]
  %v83 = vunpack.c.l.b16 %v51
  %v84 = vunpack.c.l.b16 %v52
  %v85 = vunpack.c.l.b16 %v53
  %v86 = vunpack.c.l.b16 %v54
  %v87 = vunpack.c.l.b16 %v55
  %v88 = vunpack.c.l.b16 %v56
  %v89 = vunpack.c.l.b16 %v57
  %v90 = vunpack.c.l.b16 %v58
  %v91 = vunpack.c.l.b16 %v59
  %v92 = vunpack.c.l.b16 %v60
  %v93 = vunpack.c.l.b16 %v61
  %v94 = vunpack.c.l.b16 %v62
  %v95 = vunpack.c.l.b16 %v63
  %v96 = vunpack.c.l.b16 %v64
  %v97 = vunpack.c.l.b16 %v65
  %v98 = vunpack.c.l.b16 %v66
  %v99 = vpack.c.b16 %v84, %v83
  %v100 = vpack.c.b16 %v86, %v85
  %v101 = vpack.c.b16 %v88, %v87
  %v102 = vpack.c.b16 %v90, %v89
  %v103 = vpack.c.b16 %v92, %v91
  %v104 = vpack.c.b16 %v94, %v93
  %v105 = vpack.c.b16 %v96, %v95
  %v106 = vpack.c.b16 %v98, %v97
  %115 = vmatprep.subr.bf16.mxu0 0
  %116 = vmatpush1.bf16.msra.mxu0 %v106
  %117 = vmatprep.subr.bf16.mxu0 0
  %118 = vmatpush1.bf16.msra.mxu0 %v105
  %119 = vmatprep.subr.bf16.mxu0 0
  %120 = vmatpush1.bf16.msra.mxu0 %v104
  %121 = vmatprep.subr.bf16.mxu0 0
  %122 = vmatpush1.bf16.msra.mxu0 %v103
  %123 = vmatprep.subr.bf16.mxu0 0
  %124 = vmatpush1.bf16.msra.mxu0 %v102
  %125 = vmatprep.subr.bf16.mxu0 0
  %126 = vmatpush1.bf16.msra.mxu0 %v101
  %127 = vmatprep.subr.bf16.mxu0 0
  %128 = vmatpush1.bf16.msra.mxu0 %v100
  %129 = vmatprep.subr.bf16.mxu0 0
  %130 = vmatpush1.bf16.msra.mxu0 %v99
  %131 = vmatprep.subr.bf16.mxu0 0
  %132 = vmatpush2.bf16.msra.mxu0 0
  %133 = vmatprep.subr.bf16.mxu0 0
  %134 = vmatpush2.bf16.msra.mxu0 0
  %135 = vmatprep.subr.bf16.mxu0 0
  %136 = vmatpush2.bf16.msra.mxu0 0
  %137 = vmatprep.subr.bf16.mxu0 0
  %138 = vmatpush2.bf16.msra.mxu0 0
  %139 = vmatprep.subr.bf16.mxu0 0
  %140 = vmatpush2.bf16.msra.mxu0 0
  %141 = vmatprep.subr.bf16.mxu0 0
  %142 = vmatpush2.bf16.msra.mxu0 0
  %143 = vmatprep.subr.bf16.mxu0 0
  %144 = vmatpush2.bf16.msra.mxu0 0
  %145 = vmatprep.subr.bf16.mxu0 0
  %146 = vmatpush2.bf16.msra.mxu0 0
  %147 = vmatprep.mubr.bf16.mxu0 0
  %148 = vmatmul.mubr.bf16.gmra.mxu0 %v34
  %v149 = vpop.f32.mrf.mxu0
  %v150 = vadd.f32 0.0, %v149
  %v151 = vpop.f32.mrf.mxu0
  %v152 = vpop.f32.mrf.mxu0
  %v153 = vadd.f32 0.0, %v152
  %v154 = vpop.f32.mrf.mxu0
  %155 = vdwg.mxu0
  %v172 = vunpack.c.l.b16 %v35
  %v173 = vunpack.c.l.b16 %v36
  %v174 = vunpack.c.l.b16 %v37
  %v175 = vunpack.c.l.b16 %v38
  %v176 = vunpack.c.l.b16 %v39
  %v177 = vunpack.c.l.b16 %v40
  %v178 = vunpack.c.l.b16 %v41
  %v179 = vunpack.c.l.b16 %v42
  %v180 = vunpack.c.l.b16 %v43
  %v181 = vunpack.c.l.b16 %v44
  %v182 = vunpack.c.l.b16 %v45
  %v183 = vunpack.c.l.b16 %v46
  %v184 = vunpack.c.l.b16 %v47
  %v185 = vunpack.c.l.b16 %v48
  %v186 = vunpack.c.l.b16 %v49
  %v187 = vunpack.c.l.b16 %v50
  %v188 = vpack.c.b16 %v173, %v172
  %v189 = vpack.c.b16 %v175, %v174
  %v190 = vpack.c.b16 %v177, %v176
  %v191 = vpack.c.b16 %v179, %v178
  %v192 = vpack.c.b16 %v181, %v180
  %v193 = vpack.c.b16 %v183, %v182
  %v194 = vpack.c.b16 %v185, %v184
  %v195 = vpack.c.b16 %v187, %v186
  %204 = vmatprep.subr.bf16.mxu0 0
  %205 = vmatpush1.bf16.msra.mxu0 %v195
  %206 = vmatprep.subr.bf16.mxu0 0
  %207 = vmatpush1.bf16.msra.mxu0 %v194
  %208 = vmatprep.subr.bf16.mxu0 0
  %209 = vmatpush1.bf16.msra.mxu0 %v193
  %210 = vmatprep.subr.bf16.mxu0 0
  %211 = vmatpush1.bf16.msra.mxu0 %v192
  %212 = vmatprep.subr.bf16.mxu0 0
  %213 = vmatpush1.bf16.msra.mxu0 %v191
  %214 = vmatprep.subr.bf16.mxu0 0
  %215 = vmatpush1.bf16.msra.mxu0 %v190
  %216 = vmatprep.subr.bf16.mxu0 0
  %217 = vmatpush1.bf16.msra.mxu0 %v189
  %218 = vmatprep.subr.bf16.mxu0 0
  %219 = vmatpush1.bf16.msra.mxu0 %v188
  %220 = vmatprep.subr.bf16.mxu0 0
  %221 = vmatpush2.bf16.msra.mxu0 0
  %222 = vmatprep.subr.bf16.mxu0 0
  %223 = vmatpush2.bf16.msra.mxu0 0
  %224 = vmatprep.subr.bf16.mxu0 0
  %225 = vmatpush2.bf16.msra.mxu0 0
  %226 = vmatprep.subr.bf16.mxu0 0
  %227 = vmatpush2.bf16.msra.mxu0 0
  %228 = vmatprep.subr.bf16.mxu0 0
  %229 = vmatpush2.bf16.msra.mxu0 0
  %230 = vmatprep.subr.bf16.mxu0 0
  %231 = vmatpush2.bf16.msra.mxu0 0
  %232 = vmatprep.subr.bf16.mxu0 0
  %233 = vmatpush2.bf16.msra.mxu0 0
  %234 = vmatprep.subr.bf16.mxu0 0
  %235 = vmatpush2.bf16.msra.mxu0 0
  %236 = vmatprep.mubr.bf16.mxu0 0
  %237 = vmatmul.mubr.bf16.gmra.mxu0 %v31
  %v238 = vpop.f32.mrf.mxu0
  %v239 = vadd.f32 %v150, %v238
  %v240 = vpop.f32.mrf.mxu0
  %v241 = vpop.f32.mrf.mxu0
  %v242 = vadd.f32 %v153, %v241
  %v243 = vpop.f32.mrf.mxu0
  %244 = vdwg.mxu0
  %v245 = vld [vmem:[%s4] sm:$0x1]
  %v247 = vlaneseq
  %v248 = vshrl.u32 %v247, 7
  %v249 = vsub.s32 0, %v248
  %v250 = vrot.slane %v245, %v249
  %v252 = vadd.f32 %v239, %v250
  %v253 = vadd.f32 %v242, %v250
  %v254 = vmul.f32 %v252, %v252
  %v255 = vmul.f32 %v253, %v253
  %v256 = vmul.f32 %v252, %v254
  %v257 = vmul.f32 %v253, %v255
  %v258 = vmul.f32 %v256, 0.044715
  %v259 = vmul.f32 %v257, 0.044715
  %v260 = vadd.f32 %v252, %v258
  %v261 = vadd.f32 %v253, %v259
  %v262 = vmul.f32 %v260, 0.7978846
  %v263 = vmul.f32 %v261, 0.7978846
  %v264 = vtanh.pop %v262
  %v265 = vtanh.pop %v263
  %v266 = vadd.f32 %v264, 1.0
  %v267 = vadd.f32 %v265, 1.0
  %v268 = vmul.f32 %v266, 0.5
  %v269 = vmul.f32 %v267, 0.5
  %v270 = vmul.f32 %v252, %v268
  %v271 = vmul.f32 %v253, %v269
  %v272 = vld [vmem:[%s5] sm:$0x1]
  %v274 = vlaneseq
  %v275 = vshrl.u32 %v274, 7
  %v276 = vsub.s32 0, %v275
  %v277 = vrot.slane %v272, %v276
  %v279 = vmul.f32 %v270, %v277
  %v280 = vmul.f32 %v271, %v277
  %281 = vadd.xlane.f32.xlu0 %v279
  %v282 = vpop.xlane.xlu0 %281
  %283 = vadd.xlane.f32.xlu0 %v280
  %v284 = vpop.xlane.xlu0 %283
  %v285 = vld [vmem:[#allocation2] sm:$0x1]
  %v287 = vlaneseq
  %v288 = vshrl.u32 %v287, 7
  %v289 = vsub.s32 0, %v288
  %v290 = vrot.slane %v285, %v289
  %v292 = vadd.f32 %v282, %v290
  %v293 = vadd.f32 %v284, %v290
  %vm294 = vcmask 7168
  %295 = vst.msk [vmem:[%s7] sm:$0xff] %vm294, %v292
  %296 = vst.msk [vmem:[%s7 + $0x8] sm:$0xff] %vm294, %v293
  // Predicated region
  $region30: #{fwd.21} parent=0 // pred_check
    _
  $region31: #{fwd.21} parent=0 // pred_check_branch
    %298 = sbr.rel (0) target = $region33
  $region32: #{fwd.21} parent=0 // pred_region
    _
  $region33: #{fwd.21} parent=0 // pred_fallthru
    _
  // Predicated region
  $region34: #{fwd.21} parent=0 // pred_check
    _
  $region35: #{fwd.21} parent=0 // pred_check_branch
    %300 = sbr.rel (0) target = $region37
  $region36: #{fwd.21} parent=0 // pred_region
    _
  $region37: #{fwd.21} parent=0 // pred_fallthru
    _

// kernel: squeeze.31
$region0: #{squeeze.31}
  %s0 = inlined_call_operand.vmem [shape: f32[12], index: 0, kind: input, shape index: {}]
  %s1 = inlined_call_operand.vmem [shape: f32[4,3], index: 1, kind: output, shape index: {}]
  $region1: #{squeeze.31} parent=0
    #allocation0 [shape = 'u8[4096]{0}', space=vmem, size = 0x1000, scoped, tag = 'scoped mem for output reshape']
    #allocation1 [shape = 'u8[4096]{0}', space=vmem, size = 0x1000, scoped, tag = 'scoped mem for input reshape']
    %s3 = sshll.u32 1, 1
    %s4 = ssub.s32 %s3, 1
    %v5 = vld [vmem:[%s0] sm:%s4]
    %6 = vst [vmem:[#allocation1] sm:%s4] %v5
    %v7 = vld [vmem:[#allocation1] sm:$0x1]
    %vm8 = vcmask 23552
    %9 = vst.msk [vmem:[#allocation0] sm:$0x1] %vm8, %v7
    %v10 = vld [vmem:[#allocation1] sm:$0x1]
    %11 = vrot.lane.b32.xlu0 %v10, 125
    %v12 = vpop.permute.xlu0 %11
    %vm13 = vcmask 23552
    %s14 = scalar_lea.vmem [#allocation0], 1
    %15 = vst.msk [vmem:[%s14] sm:$0x1] %vm13, %v12
    %v16 = vld [vmem:[#allocation1] sm:$0x1]
    %17 = vrot.lane.b32.xlu0 %v16, 122
    %v18 = vpop.permute.xlu0 %17
    %vm19 = vcmask 23552
    %s20 = scalar_lea.vmem [#allocation0], 2
    %21 = vst.msk [vmem:[%s20] sm:$0x1] %vm19, %v18
    %v22 = vld [vmem:[#allocation1] sm:$0x1]
    %23 = vrot.lane.b32.xlu0 %v22, 119
    %v24 = vpop.permute.xlu0 %23
    %vm25 = vcmask 23552
    %s26 = scalar_lea.vmem [#allocation0], 3
    %27 = vst.msk [vmem:[%s26] sm:$0x1] %vm25, %v24
    %s29 = sshll.u32 1, 4
    %s30 = ssub.s32 %s29, 1
    %v32 = vld [vmem:[#allocation0] sm:%s30]
    %s33 = sshll.u32 1, 4
    %s34 = ssub.s32 %s33, 1
    %35 = vst [vmem:[%s1] sm:%s34] %v32

// kernel: fwd.25
$region0: #{fwd.25}
  #allocation0 [shape = 'u32[]', space=smem, size = 0x4, offset = 0x4, fixed_abs, tag = 'smem constant byte address 0x4 - core index']
  #allocation1 [shape = 'u32[144,128]{1,0:T(1,128)}', space=vmem, size = 0x12000, scoped, tag = 'internal scratch']
  #allocation2 [shape = 'f32[1,1]{1,0:T(1,128)S(1)}', space=vmem, size = 0x200, scoped, tag = 'scoped memory for fwd.25']
  %s0 = inlined_call_operand.vmem [shape: f32[8,128], index: 0, kind: input, shape index: {}]
  %s1 = inlined_call_operand.vmem [shape: f32[8,128], index: 1, kind: input, shape index: {}]
  %s2 = inlined_call_operand.vmem [shape: bf16[128,128], index: 2, kind: input, shape index: {}]
  %s3 = inlined_call_operand.vmem [shape: bf16[128,128], index: 3, kind: input, shape index: {}]
  %s4 = inlined_call_operand.vmem [shape: f32[1,128], index: 4, kind: input, shape index: {}]
  %s5 = inlined_call_operand.vmem [shape: f32[1,128], index: 5, kind: input, shape index: {}]
  %s6 = inlined_call_operand.<no memory space> [shape: f32[1,1], index: 6, kind: input, shape index: {}]
  %s7 = inlined_call_operand.vmem [shape: f32[8,1], index: 7, kind: output, shape index: {}]
  %s8 = sld [smem:[#allocation0]]
  $region38: #{fwd.25} parent=0
    _
  %s10 = ssub.s32 1, %s8
  %s11 = scalar_select 0, %s10, %s8
  %v12 = vstv %s6
  %13 = vst [vmem:[#allocation2] sm:$0x1] %v12
  // Predicated region
  $region2: #{fwd.25} parent=0 // pred_check
    _
  $region3: #{fwd.25} parent=0 // pred_check_branch
    %15 = sbr.rel (0) target = $region5
  $region4: #{fwd.25} parent=0 // pred_region
    _
  $region5: #{fwd.25} parent=0 // pred_fallthru
    _
  // Predicated region
  $region6: #{fwd.25} parent=0 // pred_check
    _
  $region7: #{fwd.25} parent=0 // pred_check_branch
    %17 = sbr.rel (0) target = $region9
  $region8: #{fwd.25} parent=0 // pred_region
    _
  $region9: #{fwd.25} parent=0 // pred_fallthru
    _
  // Predicated region
  $region10: #{fwd.25} parent=0 // pred_check
    _
  $region11: #{fwd.25} parent=0 // pred_check_branch
    %19 = sbr.rel (0) target = $region13
  $region12: #{fwd.25} parent=0 // pred_region
    _
  $region13: #{fwd.25} parent=0 // pred_fallthru
    _
  // Predicated region
  $region14: #{fwd.25} parent=0 // pred_check
    _
  $region15: #{fwd.25} parent=0 // pred_check_branch
    %21 = sbr.rel (0) target = $region17
  $region16: #{fwd.25} parent=0 // pred_region
    _
  $region17: #{fwd.25} parent=0 // pred_fallthru
    _
  // Predicated region
  $region18: #{fwd.25} parent=0 // pred_check
    _
  $region19: #{fwd.25} parent=0 // pred_check_branch
    %23 = sbr.rel (0) target = $region21
  $region20: #{fwd.25} parent=0 // pred_region
    _
  $region21: #{fwd.25} parent=0 // pred_fallthru
    _
  // Predicated region
  $region22: #{fwd.25} parent=0 // pred_check
    _
  $region23: #{fwd.25} parent=0 // pred_check_branch
    %25 = sbr.rel (0) target = $region25
  $region24: #{fwd.25} parent=0 // pred_region
    _
  $region25: #{fwd.25} parent=0 // pred_fallthru
    _
  // Predicated region
  $region26: #{fwd.25} parent=0 // pred_check
    _
  $region27: #{fwd.25} parent=0 // pred_check_branch
    %27 = sbr.rel (0) target = $region29
  $region28: #{fwd.25} parent=0 // pred_region
    _
  $region29: #{fwd.25} parent=0 // pred_fallthru
    _
  %v29 = vld [vmem:[%s0] sm:$0xff]
  %v30 = vpack.c.bf16 %v29, %v29
  %v31 = vld [vmem:[%s1] sm:$0xff]
  %v32 = vpack.c.bf16 %v31, %v31
  %v33 = vld [vmem:[%s2] sm:$0xf]
  %v34 = vld [vmem:[%s2 + $0x4] sm:$0xf]
  %v35 = vld [vmem:[%s2 + $0x8] sm:$0xf]
  %v36 = vld [vmem:[%s2 + $0xc] sm:$0xf]
  %v37 = vld [vmem:[%s2 + $0x10] sm:$0xf]
  %v38 = vld [vmem:[%s2 + $0x14] sm:$0xf]
  %v39 = vld [vmem:[%s2 + $0x18] sm:$0xf]
  %v40 = vld [vmem:[%s2 + $0x1c] sm:$0xf]
  %v41 = vld [vmem:[%s2 + $0x20] sm:$0xf]
  %v42 = vld [vmem:[%s2 + $0x24] sm:$0xf]
  %v43 = vld [vmem:[%s2 + $0x28] sm:$0xf]
  %v44 = vld [vmem:[%s2 + $0x2c] sm:$0xf]
  %v45 = vld [vmem:[%s2 + $0x30] sm:$0xf]
  %v46 = vld [vmem:[%s2 + $0x34] sm:$0xf]
  %v47 = vld [vmem:[%s2 + $0x38] sm:$0xf]
  %v48 = vld [vmem:[%s2 + $0x3c] sm:$0xf]
  %v49 = vld [vmem:[%s3] sm:$0xf]
  %v50 = vld [vmem:[%s3 + $0x4] sm:$0xf]
  %v51 = vld [vmem:[%s3 + $0x8] sm:$0xf]
  %v52 = vld [vmem:[%s3 + $0xc] sm:$0xf]
  %v53 = vld [vmem:[%s3 + $0x10] sm:$0xf]
  %v54 = vld [vmem:[%s3 + $0x14] sm:$0xf]
  %v55 = vld [vmem:[%s3 + $0x18] sm:$0xf]
  %v56 = vld [vmem:[%s3 + $0x1c] sm:$0xf]
  %v57 = vld [vmem:[%s3 + $0x20] sm:$0xf]
  %v58 = vld [vmem:[%s3 + $0x24] sm:$0xf]
  %v59 = vld [vmem:[%s3 + $0x28] sm:$0xf]
  %v60 = vld [vmem:[%s3 + $0x2c] sm:$0xf]
  %v61 = vld [vmem:[%s3 + $0x30] sm:$0xf]
  %v62 = vld [vmem:[%s3 + $0x34] sm:$0xf]
  %v63 = vld [vmem:[%s3 + $0x38] sm:$0xf]
  %v64 = vld [vmem:[%s3 + $0x3c] sm:$0xf]
  %v81 = vunpack.c.l.b16 %v49
  %v82 = vunpack.c.l.b16 %v50
  %v83 = vunpack.c.l.b16 %v51
  %v84 = vunpack.c.l.b16 %v52
  %v85 = vunpack.c.l.b16 %v53
  %v86 = vunpack.c.l.b16 %v54
  %v87 = vunpack.c.l.b16 %v55
  %v88 = vunpack.c.l.b16 %v56
  %v89 = vunpack.c.l.b16 %v57
  %v90 = vunpack.c.l.b16 %v58
  %v91 = vunpack.c.l.b16 %v59
  %v92 = vunpack.c.l.b16 %v60
  %v93 = vunpack.c.l.b16 %v61
  %v94 = vunpack.c.l.b16 %v62
  %v95 = vunpack.c.l.b16 %v63
  %v96 = vunpack.c.l.b16 %v64
  %v97 = vpack.c.b16 %v82, %v81
  %v98 = vpack.c.b16 %v84, %v83
  %v99 = vpack.c.b16 %v86, %v85
  %v100 = vpack.c.b16 %v88, %v87
  %v101 = vpack.c.b16 %v90, %v89
  %v102 = vpack.c.b16 %v92, %v91
  %v103 = vpack.c.b16 %v94, %v93
  %v104 = vpack.c.b16 %v96, %v95
  %113 = vmatprep.subr.bf16.mxu0 0
  %114 = vmatpush1.bf16.msra.mxu0 %v104
  %115 = vmatprep.subr.bf16.mxu0 0
  %116 = vmatpush1.bf16.msra.mxu0 %v103
  %117 = vmatprep.subr.bf16.mxu0 0
  %118 = vmatpush1.bf16.msra.mxu0 %v102
  %119 = vmatprep.subr.bf16.mxu0 0
  %120 = vmatpush1.bf16.msra.mxu0 %v101
  %121 = vmatprep.subr.bf16.mxu0 0
  %122 = vmatpush1.bf16.msra.mxu0 %v100
  %123 = vmatprep.subr.bf16.mxu0 0
  %124 = vmatpush1.bf16.msra.mxu0 %v99
  %125 = vmatprep.subr.bf16.mxu0 0
  %126 = vmatpush1.bf16.msra.mxu0 %v98
  %127 = vmatprep.subr.bf16.mxu0 0
  %128 = vmatpush1.bf16.msra.mxu0 %v97
  %129 = vmatprep.subr.bf16.mxu0 0
  %130 = vmatpush2.bf16.msra.mxu0 0
  %131 = vmatprep.subr.bf16.mxu0 0
  %132 = vmatpush2.bf16.msra.mxu0 0
  %133 = vmatprep.subr.bf16.mxu0 0
  %134 = vmatpush2.bf16.msra.mxu0 0
  %135 = vmatprep.subr.bf16.mxu0 0
  %136 = vmatpush2.bf16.msra.mxu0 0
  %137 = vmatprep.subr.bf16.mxu0 0
  %138 = vmatpush2.bf16.msra.mxu0 0
  %139 = vmatprep.subr.bf16.mxu0 0
  %140 = vmatpush2.bf16.msra.mxu0 0
  %141 = vmatprep.subr.bf16.mxu0 0
  %142 = vmatpush2.bf16.msra.mxu0 0
  %143 = vmatprep.subr.bf16.mxu0 0
  %144 = vmatpush2.bf16.msra.mxu0 0
  %145 = vmatprep.mubr.bf16.mxu0 0
  %146 = vmatmul.mubr.bf16.gmra.mxu0 %v32
  %v147 = vpop.f32.mrf.mxu0
  %v148 = vadd.f32 0.0, %v147
  %v149 = vpop.f32.mrf.mxu0
  %v150 = vpop.f32.mrf.mxu0
  %v151 = vpop.f32.mrf.mxu0
  %152 = vdwg.mxu0
  %v169 = vunpack.c.l.b16 %v33
  %v170 = vunpack.c.l.b16 %v34
  %v171 = vunpack.c.l.b16 %v35
  %v172 = vunpack.c.l.b16 %v36
  %v173 = vunpack.c.l.b16 %v37
  %v174 = vunpack.c.l.b16 %v38
  %v175 = vunpack.c.l.b16 %v39
  %v176 = vunpack.c.l.b16 %v40
  %v177 = vunpack.c.l.b16 %v41
  %v178 = vunpack.c.l.b16 %v42
  %v179 = vunpack.c.l.b16 %v43
  %v180 = vunpack.c.l.b16 %v44
  %v181 = vunpack.c.l.b16 %v45
  %v182 = vunpack.c.l.b16 %v46
  %v183 = vunpack.c.l.b16 %v47
  %v184 = vunpack.c.l.b16 %v48
  %v185 = vpack.c.b16 %v170, %v169
  %v186 = vpack.c.b16 %v172, %v171
  %v187 = vpack.c.b16 %v174, %v173
  %v188 = vpack.c.b16 %v176, %v175
  %v189 = vpack.c.b16 %v178, %v177
  %v190 = vpack.c.b16 %v180, %v179
  %v191 = vpack.c.b16 %v182, %v181
  %v192 = vpack.c.b16 %v184, %v183
  %201 = vmatprep.subr.bf16.mxu0 0
  %202 = vmatpush1.bf16.msra.mxu0 %v192
  %203 = vmatprep.subr.bf16.mxu0 0
  %204 = vmatpush1.bf16.msra.mxu0 %v191
  %205 = vmatprep.subr.bf16.mxu0 0
  %206 = vmatpush1.bf16.msra.mxu0 %v190
  %207 = vmatprep.subr.bf16.mxu0 0
  %208 = vmatpush1.bf16.msra.mxu0 %v189
  %209 = vmatprep.subr.bf16.mxu0 0
  %210 = vmatpush1.bf16.msra.mxu0 %v188
  %211 = vmatprep.subr.bf16.mxu0 0
  %212 = vmatpush1.bf16.msra.mxu0 %v187
  %213 = vmatprep.subr.bf16.mxu0 0
  %214 = vmatpush1.bf16.msra.mxu0 %v186
  %215 = vmatprep.subr.bf16.mxu0 0
  %216 = vmatpush1.bf16.msra.mxu0 %v185
  %217 = vmatprep.subr.bf16.mxu0 0
  %218 = vmatpush2.bf16.msra.mxu0 0
  %219 = vmatprep.subr.bf16.mxu0 0
  %220 = vmatpush2.bf16.msra.mxu0 0
  %221 = vmatprep.subr.bf16.mxu0 0
  %222 = vmatpush2.bf16.msra.mxu0 0
  %223 = vmatprep.subr.bf16.mxu0 0
  %224 = vmatpush2.bf16.msra.mxu0 0
  %225 = vmatprep.subr.bf16.mxu0 0
  %226 = vmatpush2.bf16.msra.mxu0 0
  %227 = vmatprep.subr.bf16.mxu0 0
  %228 = vmatpush2.bf16.msra.mxu0 0
  %229 = vmatprep.subr.bf16.mxu0 0
  %230 = vmatpush2.bf16.msra.mxu0 0
  %231 = vmatprep.subr.bf16.mxu0 0
  %232 = vmatpush2.bf16.msra.mxu0 0
  %233 = vmatprep.mubr.bf16.mxu0 0
  %234 = vmatmul.mubr.bf16.gmra.mxu0 %v30
  %v235 = vpop.f32.mrf.mxu0
  %v236 = vadd.f32 %v148, %v235
  %v237 = vpop.f32.mrf.mxu0
  %v238 = vpop.f32.mrf.mxu0
  %v239 = vpop.f32.mrf.mxu0
  %240 = vdwg.mxu0
  %v241 = vld [vmem:[%s4] sm:$0x1]
  %v243 = vlaneseq
  %v244 = vshrl.u32 %v243, 7
  %v245 = vsub.s32 0, %v244
  %v246 = vrot.slane %v241, %v245
  %v248 = vadd.f32 %v236, %v246
  %v249 = vmul.f32 %v248, %v248
  %v250 = vmul.f32 %v248, %v249
  %v251 = vmul.f32 %v250, 0.044715
  %v252 = vadd.f32 %v248, %v251
  %v253 = vmul.f32 %v252, 0.7978846
  %v254 = vtanh.pop %v253
  %v255 = vadd.f32 %v254, 1.0
  %v256 = vmul.f32 %v255, 0.5
  %v257 = vmul.f32 %v248, %v256
  %v258 = vld [vmem:[%s5] sm:$0x1]
  %v260 = vlaneseq
  %v261 = vshrl.u32 %v260, 7
  %v262 = vsub.s32 0, %v261
  %v263 = vrot.slane %v258, %v262
  %v265 = vmul.f32 %v257, %v263
  %266 = vadd.xlane.f32.xlu0 %v265
  %v267 = vpop.xlane.xlu0 %266
  %v268 = vld [vmem:[#allocation2] sm:$0x1]
  %v270 = vlaneseq
  %v271 = vshrl.u32 %v270, 7
  %v272 = vsub.s32 0, %v271
  %v273 = vrot.slane %v268, %v272
  %v275 = vadd.f32 %v267, %v273
  %vm276 = vcmask 7168
  %277 = vst.msk [vmem:[%s7] sm:$0xff] %vm276, %v275
  // Predicated region
  $region30: #{fwd.25} parent=0 // pred_check
    _
  $region31: #{fwd.25} parent=0 // pred_check_branch
    %279 = sbr.rel (0) target = $region33
  $region32: #{fwd.25} parent=0 // pred_region
    _
  $region33: #{fwd.25} parent=0 // pred_fallthru
    _
  // Predicated region
  $region34: #{fwd.25} parent=0 // pred_check
    _
  $region35: #{fwd.25} parent=0 // pred_check_branch
    %281 = sbr.rel (0) target = $region37
  $region36: #{fwd.25} parent=0 // pred_region
    _
  $region37: #{fwd.25} parent=0 // pred_fallthru
    _

</llo_original>
